<compile_context>
chip_gen: v7x
topology: tpu7x:2x2x1
jax: 0.10.0
libtpu: 0.0.40
codegen_flags: <defaults>
</compile_context>

<pallas_src>
import jax
import jax.numpy as jnp
from jax.experimental import pallas as pl
from jax.experimental.pallas import tpu as pltpu

IN_DIM = 2048
HID_DIM = 512
OUT_DIM = 1


def _round_up(x, m):
    return ((x + m - 1) // m) * m


def _mlp_kernel(x_ref, w1_ref, b1_ref, w2_ref, b2_ref, o_ref):
    # fc1 on the MXU: bf16 operands, f32 accumulation.
    h = jnp.dot(x_ref[...], w1_ref[...], preferred_element_type=jnp.float32)
    # Bias + ReLU in f32 on the VPU.
    h = jnp.maximum(h + b1_ref[...], 0.0)                     # [block_b, 512]
    # fc2 as VPU multiply + XLU lane reduction (avoids an N=1 MXU matmul and
    # pairs with the lane-dense output store below).
    y = jnp.sum(h * w2_ref[...], axis=-1)                     # [block_b] f32
    # Lane-dense store: one [1, block_b] slab per grid step.
    o_ref[...] = (y[None, :] + b2_ref[...]).astype(o_ref.dtype)


def hair_density_forward(x, w1, b1, w2, b2, *, block_b=256):
    """x: [B, 2048] f32, w1: [2048, 512], b1: [1, 512], w2: [1, 512], b2: [1, 1].

    Returns [B, 1] f32 = fc2(relu(fc1(x))).
    """
    B = x.shape[0]
    # Batch tile: multiple of 128 (lane-dense output), no larger than needed.
    bb = max(128, (block_b // 128) * 128)
    bb = min(bb, _round_up(B, 128))
    B_pad = _round_up(B, bb)
    if B_pad != B:
        x = jnp.pad(x, ((0, B_pad - B), (0, 0)))

    # bf16 inputs for the MXU matmul; biases / w2 stay f32.
    x_bf = x.astype(jnp.bfloat16)
    w1_bf = w1.astype(jnp.bfloat16)
    b1_f = b1.astype(jnp.float32)
    w2_f = w2.astype(jnp.float32)
    b2_f = b2.astype(jnp.float32)

    grid = (B_pad // bb,)

    cost = pl.CostEstimate(
        flops=2 * B_pad * IN_DIM * HID_DIM + 3 * B_pad * HID_DIM,
        transcendentals=0,
        bytes_accessed=(x_bf.size * 2 + w1_bf.size * 2 + b1_f.size * 4
                        + w2_f.size * 4 + b2_f.size * 4 + B_pad * 4),
    )

    out = pl.pallas_call(
        _mlp_kernel,
        out_shape=jax.ShapeDtypeStruct((1, B_pad), jnp.float32),
        grid_spec=pltpu.PrefetchScalarGridSpec(
            num_scalar_prefetch=0,
            grid=grid,
            in_specs=[
                pl.BlockSpec((bb, IN_DIM), lambda i: (i, 0)),        # x tile (bf16)
                pl.BlockSpec((IN_DIM, HID_DIM), lambda i: (0, 0)),   # w1 (bf16, whole)
                pl.BlockSpec((1, HID_DIM), lambda i: (0, 0)),        # b1 (f32)
                pl.BlockSpec((1, HID_DIM), lambda i: (0, 0)),        # w2 row (f32)
                pl.BlockSpec((1, OUT_DIM), lambda i: (0, 0)),        # b2 (f32)
            ],
            # Lane-dense output: grid axis walks the lane dimension.
            out_specs=pl.BlockSpec((1, bb), lambda i: (0, i)),
        ),
        compiler_params=pltpu.CompilerParams(
            dimension_semantics=("parallel",),
            vmem_limit_bytes=64 * 1024 * 1024,
        ),
        cost_estimate=cost,
    )(x_bf, w1_bf, b1_f, w2_f, b2_f)

    # [1, B_pad] -> [B, 1]
    return out.reshape(B_pad)[:B].reshape(B, OUT_DIM)


def init_params(key):
    """Deterministic synthetic init matching nn.Linear shapes.

    fc1.weight [512, 2048] is stored transposed as w1 [2048, 512];
    fc2.weight [1, 512] is stored as-is (row vector) as w2 [1, 512].
    """
    k1, k2, k3, k4 = jax.random.split(key, 4)
    w1 = jax.random.normal(k1, (IN_DIM, HID_DIM), jnp.float32) * (1.0 / jnp.sqrt(IN_DIM))
    b1 = jax.random.normal(k2, (1, HID_DIM), jnp.float32) * 0.01
    w2 = jax.random.normal(k3, (1, HID_DIM), jnp.float32) * (1.0 / jnp.sqrt(HID_DIM))
    b2 = jax.random.normal(k4, (1, OUT_DIM), jnp.float32) * 0.01
    return w1, b1, w2, b2


def reference_forward(x, w1, b1, w2, b2):
    # Reference with the same bf16 rounding of x and w1 that the kernel applies
    # (accumulation in f32), so the tolerance stays tight.
    xb = x.astype(jnp.bfloat16).astype(jnp.float32)
    w1b = w1.astype(jnp.bfloat16).astype(jnp.float32)
    h = jnp.maximum(xb @ w1b + b1, 0.0)
    return jnp.sum(h * w2, axis=-1, keepdims=True) + b2


if __name__ == "__main__":
    key = jax.random.PRNGKey(0)
    kx, kp = jax.random.split(key)

    B = 8  # small batch for the demo (padded to one 128-row tile internally)
    x = jax.random.normal(kx, (B, IN_DIM), jnp.float32)
    w1, b1, w2, b2 = init_params(kp)

    y = hair_density_forward(x, w1, b1, w2, b2)
    y = jax.block_until_ready(y)

    y_ref = reference_forward(x, w1, b1, w2, b2)
    assert y.shape == (B, OUT_DIM)
    assert jnp.allclose(y, y_ref, atol=2e-3, rtol=2e-3), "mismatch vs reference"

    print("KERNEL_OK")
</pallas_src>

<mosaic_0001>
module attributes {stable_mosaic.version = 11 : i64} {
  func.func @_mlp_kernel(%arg0: i32, %arg1: memref<128x2048xbf16, #tpu.memory_space<vmem>>, %arg2: memref<2048x512xbf16, #tpu.memory_space<vmem>>, %arg3: memref<1x512xf32, #tpu.memory_space<vmem>>, %arg4: memref<1x512xf32, #tpu.memory_space<vmem>>, %arg5: memref<1x1xf32, #tpu.memory_space<vmem>>, %arg6: memref<1x128xf32, #tpu.memory_space<vmem>>) attributes {dimension_semantics = [#tpu.dimension_semantics<parallel>], iteration_bounds = array<i64: 1>, scalar_prefetch = 0 : i64, scratch_operands = 0 : i64, tpu.core_type = #tpu.core_type<tc>, window_params = [{transform_indices = @transform_0, window_bounds = array<i64: 128, 2048>}, {pipeline_mode = #tpu.pipeline_mode<synchronous>, transform_indices = @transform_1, window_bounds = array<i64: 2048, 512>}, {pipeline_mode = #tpu.pipeline_mode<synchronous>, transform_indices = @transform_2, window_bounds = array<i64: 1, 512>}, {pipeline_mode = #tpu.pipeline_mode<synchronous>, transform_indices = @transform_3, window_bounds = array<i64: 1, 512>}, {pipeline_mode = #tpu.pipeline_mode<synchronous>, transform_indices = @transform_4, window_bounds = array<i64: 1, 1>}, {transform_indices = @transform_5, window_bounds = array<i64: 1, 128>}]} {
    %c0 = arith.constant 0 : index
    %c0_0 = arith.constant 0 : index
    %0 = vector.load %arg1[%c0, %c0_0] : memref<128x2048xbf16, #tpu.memory_space<vmem>>, vector<128x2048xbf16>
    %c0_1 = arith.constant 0 : index
    %c0_2 = arith.constant 0 : index
    %1 = vector.load %arg2[%c0_1, %c0_2] : memref<2048x512xbf16, #tpu.memory_space<vmem>>, vector<2048x512xbf16>
    %cst = arith.constant dense<0.000000e+00> : vector<128x512xf32>
    %2 = tpu.matmul %0, %1, %cst {dimension_numbers = #tpu.dot_dimension_numbers<[1], [0], [0], [1], [0, 0, 1, 1], [], []>} : vector<128x2048xbf16>, vector<2048x512xbf16>, vector<128x512xf32> -> vector<128x512xf32>
    %c0_3 = arith.constant 0 : index
    %c0_4 = arith.constant 0 : index
    %3 = vector.load %arg3[%c0_3, %c0_4] : memref<1x512xf32, #tpu.memory_space<vmem>>, vector<1x512xf32>
    %4 = vector.broadcast %3 : vector<1x512xf32> to vector<128x512xf32>
    %5 = arith.addf %2, %4 : vector<128x512xf32>
    %cst_5 = arith.constant 0.000000e+00 : f32
    %6 = vector.broadcast %cst_5 : f32 to vector<128x512xf32>
    %7 = arith.maximumf %5, %6 : vector<128x512xf32>
    %c0_6 = arith.constant 0 : index
    %c0_7 = arith.constant 0 : index
    %8 = vector.load %arg4[%c0_6, %c0_7] : memref<1x512xf32, #tpu.memory_space<vmem>>, vector<1x512xf32>
    %9 = vector.broadcast %8 : vector<1x512xf32> to vector<128x512xf32>
    %10 = arith.mulf %7, %9 : vector<128x512xf32>
    %cst_8 = arith.constant dense<0.000000e+00> : vector<128xf32>
    %11 = vector.multi_reduction <add>, %10, %cst_8 [1] : vector<128x512xf32> to vector<128xf32>
    %12 = vector.shape_cast %11 : vector<128xf32> to vector<1x128xf32>
    %c0_9 = arith.constant 0 : index
    %c0_10 = arith.constant 0 : index
    %13 = vector.load %arg5[%c0_9, %c0_10] : memref<1x1xf32, #tpu.memory_space<vmem>>, vector<1x1xf32>
    %14 = vector.broadcast %13 : vector<1x1xf32> to vector<1x128xf32>
    %15 = arith.addf %12, %14 : vector<1x128xf32>
    %c0_11 = arith.constant 0 : index
    %c0_12 = arith.constant 0 : index
    %16 = vector.load %arg6[%c0_11, %c0_12] : memref<1x128xf32, #tpu.memory_space<vmem>>, vector<1x128xf32>
    tpu.vector_store %arg6[%c0_11, %c0_12], %15 {strides = array<i32>} : memref<1x128xf32, #tpu.memory_space<vmem>>, vector<1x128xf32>,
    return
  }
  func.func @transform_0(%arg0: i32) -> (i32, i32) {
    %c0_i32 = arith.constant 0 : i32
    %c0_i32_0 = arith.constant 0 : i32
    return %arg0, %c0_i32 : i32, i32
  }
  func.func @transform_1(%arg0: i32) -> (i32, i32) {
    %c0_i32 = arith.constant 0 : i32
    %c0_i32_0 = arith.constant 0 : i32
    %c0_i32_1 = arith.constant 0 : i32
    return %c0_i32, %c0_i32_0 : i32, i32
  }
  func.func @transform_2(%arg0: i32) -> (i32, i32) {
    %c0_i32 = arith.constant 0 : i32
    %c0_i32_0 = arith.constant 0 : i32
    %c0_i32_1 = arith.constant 0 : i32
    return %c0_i32, %c0_i32_0 : i32, i32
  }
  func.func @transform_3(%arg0: i32) -> (i32, i32) {
    %c0_i32 = arith.constant 0 : i32
    %c0_i32_0 = arith.constant 0 : i32
    %c0_i32_1 = arith.constant 0 : i32
    return %c0_i32, %c0_i32_0 : i32, i32
  }
  func.func @transform_4(%arg0: i32) -> (i32, i32) {
    %c0_i32 = arith.constant 0 : i32
    %c0_i32_0 = arith.constant 0 : i32
    %c0_i32_1 = arith.constant 0 : i32
    return %c0_i32, %c0_i32_0 : i32, i32
  }
  func.func @transform_5(%arg0: i32) -> (i32, i32) {
    %c0_i32 = arith.constant 0 : i32
    %c0_i32_0 = arith.constant 0 : i32
    return %c0_i32, %arg0 : i32, i32
  }
}

</mosaic_0001>

<llo_original>
// kernel: tpu_custom_call.1
$region0: #{tpu_custom_call.1}
  #allocation0 [shape = 'u32[]', space=smem, size = 0x4, offset = 0x4, fixed_abs, tag = 'smem constant byte address 0x4 - core index']
  #allocation1 [shape = 'u32[144,128]{1,0:T(1,128)}', space=vmem, size = 0x12000, scoped, tag = 'internal scratch']
  #allocation2 [shape = 'f32[1,1]{1,0:T(1,128)S(1)}', space=vmem, size = 0x200, scoped, tag = 'scoped memory for tpu_custom_call.1']
  %s0 = inlined_call_operand.hbm [shape: bf16[128,2048], index: 0, kind: input, shape index: {}]
  %s1 = inlined_call_operand.hbm [shape: bf16[2048,512], index: 1, kind: input, shape index: {}]
  %s2 = inlined_call_operand.hbm [shape: f32[1,512], index: 2, kind: input, shape index: {}]
  %s3 = inlined_call_operand.hbm [shape: f32[1,512], index: 3, kind: input, shape index: {}]
  %s4 = inlined_call_operand.<no memory space> [shape: f32[1,1], index: 4, kind: input, shape index: {}]
  %s5 = inlined_call_operand.hbm [shape: f32[1,128], index: 5, kind: output, shape index: {}]
  %s6 = sld [smem:[#allocation0]]
  $region46: #{tpu_custom_call.1} parent=0
    _
  %s8 = ssub.s32 1, %s6
  %s9 = scalar_select 0, %s8, %s6
  %v10 = vstv %s4
  %11 = vst [vmem:[#allocation2] sm:$0x1] %v10
  $region1: #{tpu_custom_call.1} parent=0
    #allocation3 [shape = 'u8[524288]{0}', space=vmem, size = 0x80000, scoped, tag = 'input window, operand 0, single buffered']
    #allocation4 [shape = 's32[1]{0}', space=sflag, size = 0x4, scoped, tag = 'scoped memory for tpu_custom_call.1']
    #allocation5 [shape = 's32[1]{0}', space=sflag, size = 0x4, scoped, tag = 'scoped memory for tpu_custom_call.1']
    #allocation6 [shape = 'u8[2097152]{0}', space=vmem, size = 0x200000, scoped, tag = 'input window, operand 1, single buffered']
    #allocation7 [shape = 's32[1]{0}', space=sflag, size = 0x4, scoped, tag = 'scoped memory for tpu_custom_call.1']
    #allocation8 [shape = 'u8[2048]{0}', space=vmem, size = 0x800, scoped, tag = 'input window, operand 2, single buffered']
    #allocation9 [shape = 'u8[2048]{0}', space=vmem, size = 0x800, scoped, tag = 'input window, operand 3, single buffered']
    #allocation10 [shape = 's32[1]{0}', space=sflag, size = 0x4, scoped, tag = 'scoped memory for tpu_custom_call.1']
    #allocation11 [shape = 'u8[512]{0}', space=vmem, size = 0x400, scoped, tag = 'output window, operand 0, single buffered']
    %12 = vsyncpa [#allocation4], 0
    %13 = vsyncpa [#allocation7], 0
    %14 = vsyncpa [#allocation10], 0
    %15 = vsyncpa [#allocation5], 0
    // Predicated region
    $region2: #{tpu_custom_call.1} parent=1 // pred_check
      _
    $region3: #{tpu_custom_call.1} parent=1 // pred_check_branch
      %17 = sbr.rel (0) target = $region5
    $region4: #{tpu_custom_call.1} parent=1 // pred_region
      %s19 = ssub.s32 16384, 16384
      %20 = vsyncadd [#allocation4], %s19
      %s21 = sshll.u32 [#allocation3], 4
      %s22 = int_to_ptr.vmem [resolvable:$true] %s21
      %27 = dma.hbm_to_vmem [thread:$0]  %s0, 16384, %s22, [#allocation4], 1024, 1024, 64
    $region5: #{tpu_custom_call.1} parent=1 // pred_fallthru
      _
    // Predicated region
    $region6: #{tpu_custom_call.1} parent=1 // pred_check
      _
    $region7: #{tpu_custom_call.1} parent=1 // pred_check_branch
      %29 = sbr.rel (0) target = $region9
    $region8: #{tpu_custom_call.1} parent=1 // pred_region
      %s31 = ssub.s32 65536, 65536
      %32 = vsyncadd [#allocation7], %s31
      %s33 = sshll.u32 [#allocation6], 4
      %s34 = int_to_ptr.vmem [resolvable:$true] %s33
      %39 = dma.hbm_to_vmem [thread:$0]  %s1, 65536, %s34, [#allocation7], 256, 256, 16
    $region9: #{tpu_custom_call.1} parent=1 // pred_fallthru
      _
    // Predicated region
    $region10: #{tpu_custom_call.1} parent=1 // pred_check
      _
    $region11: #{tpu_custom_call.1} parent=1 // pred_check_branch
      %41 = sbr.rel (0) target = $region13
    $region12: #{tpu_custom_call.1} parent=1 // pred_region
      %s43 = ssub.s32 64, 64
      %44 = vsyncadd [#allocation7], %s43
      %s46 = sshll.u32 [#allocation8], 4
      %s47 = int_to_ptr.vmem [resolvable:$true] %s46
      %49 = dma.hbm_to_vmem [thread:$0]  %s2, 64, %s47, [#allocation7]
    $region13: #{tpu_custom_call.1} parent=1 // pred_fallthru
      _
    // Predicated region
    $region14: #{tpu_custom_call.1} parent=1 // pred_check
      _
    $region15: #{tpu_custom_call.1} parent=1 // pred_check_branch
      %51 = sbr.rel (0) target = $region17
    $region16: #{tpu_custom_call.1} parent=1 // pred_region
      %s53 = ssub.s32 64, 64
      %54 = vsyncadd [#allocation10], %s53
      %s56 = sshll.u32 [#allocation9], 4
      %s57 = int_to_ptr.vmem [resolvable:$true] %s56
      %59 = dma.hbm_to_vmem [thread:$0]  %s3, 64, %s57, [#allocation10]
    $region17: #{tpu_custom_call.1} parent=1 // pred_fallthru
      _
    // Predicated region
    $region18: #{tpu_custom_call.1} parent=1 // pred_check
      _
    $region19: #{tpu_custom_call.1} parent=1 // pred_check_branch
      %61 = sbr.rel (0) target = $region21
    $region20: #{tpu_custom_call.1} parent=1 // pred_region
      _
    $region21: #{tpu_custom_call.1} parent=1 // pred_fallthru
      _
    // Predicated region
    $region22: #{tpu_custom_call.1} parent=1 // pred_check
      _
    $region23: #{tpu_custom_call.1} parent=1 // pred_check_branch
      %63 = sbr.rel (0) target = $region25
    $region24: #{tpu_custom_call.1} parent=1 // pred_region
      %64 = dma.done [#allocation4], 16384
    $region25: #{tpu_custom_call.1} parent=1 // pred_fallthru
      _
    // Predicated region
    $region26: #{tpu_custom_call.1} parent=1 // pred_check
      _
    $region27: #{tpu_custom_call.1} parent=1 // pred_check_branch
      %66 = sbr.rel (0) target = $region29
    $region28: #{tpu_custom_call.1} parent=1 // pred_region
      %67 = dma.done [#allocation7], 65536
    $region29: #{tpu_custom_call.1} parent=1 // pred_fallthru
      _
    // Predicated region
    $region30: #{tpu_custom_call.1} parent=1 // pred_check
      _
    $region31: #{tpu_custom_call.1} parent=1 // pred_check_branch
      %69 = sbr.rel (0) target = $region33
    $region32: #{tpu_custom_call.1} parent=1 // pred_region
      %70 = dma.done [#allocation7], 64
    $region33: #{tpu_custom_call.1} parent=1 // pred_fallthru
      _
    // Predicated region
    $region34: #{tpu_custom_call.1} parent=1 // pred_check
      _
    $region35: #{tpu_custom_call.1} parent=1 // pred_check_branch
      %72 = sbr.rel (0) target = $region37
    $region36: #{tpu_custom_call.1} parent=1 // pred_region
      %73 = dma.done [#allocation10], 64
    $region37: #{tpu_custom_call.1} parent=1 // pred_fallthru
      _
    %v74 = vld [vmem:[#allocation3] sm:$0xff]
    %v75 = vld [vmem:[#allocation3 + $0x8] sm:$0xff]
    %v76 = vld [vmem:[#allocation3 + $0x10] sm:$0xff]
    %v77 = vld [vmem:[#allocation3 + $0x18] sm:$0xff]
    %v78 = vld [vmem:[#allocation3 + $0x20] sm:$0xff]
    %v79 = vld [vmem:[#allocation3 + $0x28] sm:$0xff]
    %v80 = vld [vmem:[#allocation3 + $0x30] sm:$0xff]
    %v81 = vld [vmem:[#allocation3 + $0x38] sm:$0xff]
    %v82 = vld [vmem:[#allocation3 + $0x40] sm:$0xff]
    %v83 = vld [vmem:[#allocation3 + $0x48] sm:$0xff]
    %v84 = vld [vmem:[#allocation3 + $0x50] sm:$0xff]
    %v85 = vld [vmem:[#allocation3 + $0x58] sm:$0xff]
    %v86 = vld [vmem:[#allocation3 + $0x60] sm:$0xff]
    %v87 = vld [vmem:[#allocation3 + $0x68] sm:$0xff]
    %v88 = vld [vmem:[#allocation3 + $0x70] sm:$0xff]
    %v89 = vld [vmem:[#allocation3 + $0x78] sm:$0xff]
    %v90 = vld [vmem:[#allocation3 + $0x80] sm:$0xff]
    %v91 = vld [vmem:[#allocation3 + $0x88] sm:$0xff]
    %v92 = vld [vmem:[#allocation3 + $0x90] sm:$0xff]
    %v93 = vld [vmem:[#allocation3 + $0x98] sm:$0xff]
    %v94 = vld [vmem:[#allocation3 + $0xa0] sm:$0xff]
    %v95 = vld [vmem:[#allocation3 + $0xa8] sm:$0xff]
    %v96 = vld [vmem:[#allocation3 + $0xb0] sm:$0xff]
    %v97 = vld [vmem:[#allocation3 + $0xb8] sm:$0xff]
    %v98 = vld [vmem:[#allocation3 + $0xc0] sm:$0xff]
    %v99 = vld [vmem:[#allocation3 + $0xc8] sm:$0xff]
    %v100 = vld [vmem:[#allocation3 + $0xd0] sm:$0xff]
    %v101 = vld [vmem:[#allocation3 + $0xd8] sm:$0xff]
    %v102 = vld [vmem:[#allocation3 + $0xe0] sm:$0xff]
    %v103 = vld [vmem:[#allocation3 + $0xe8] sm:$0xff]
    %v104 = vld [vmem:[#allocation3 + $0xf0] sm:$0xff]
    %v105 = vld [vmem:[#allocation3 + $0xf8] sm:$0xff]
    %v106 = vld [vmem:[#allocation3 + $0x100] sm:$0xff]
    %v107 = vld [vmem:[#allocation3 + $0x108] sm:$0xff]
    %v108 = vld [vmem:[#allocation3 + $0x110] sm:$0xff]
    %v109 = vld [vmem:[#allocation3 + $0x118] sm:$0xff]
    %v110 = vld [vmem:[#allocation3 + $0x120] sm:$0xff]
    %v111 = vld [vmem:[#allocation3 + $0x128] sm:$0xff]
    %v112 = vld [vmem:[#allocation3 + $0x130] sm:$0xff]
    %v113 = vld [vmem:[#allocation3 + $0x138] sm:$0xff]
    %v114 = vld [vmem:[#allocation3 + $0x140] sm:$0xff]
    %v115 = vld [vmem:[#allocation3 + $0x148] sm:$0xff]
    %v116 = vld [vmem:[#allocation3 + $0x150] sm:$0xff]
    %v117 = vld [vmem:[#allocation3 + $0x158] sm:$0xff]
    %v118 = vld [vmem:[#allocation3 + $0x160] sm:$0xff]
    %v119 = vld [vmem:[#allocation3 + $0x168] sm:$0xff]
    %v120 = vld [vmem:[#allocation3 + $0x170] sm:$0xff]
    %v121 = vld [vmem:[#allocation3 + $0x178] sm:$0xff]
    %v122 = vld [vmem:[#allocation3 + $0x180] sm:$0xff]
    %v123 = vld [vmem:[#allocation3 + $0x188] sm:$0xff]
    %v124 = vld [vmem:[#allocation3 + $0x190] sm:$0xff]
    %v125 = vld [vmem:[#allocation3 + $0x198] sm:$0xff]
    %v126 = vld [vmem:[#allocation3 + $0x1a0] sm:$0xff]
    %v127 = vld [vmem:[#allocation3 + $0x1a8] sm:$0xff]
    %v128 = vld [vmem:[#allocation3 + $0x1b0] sm:$0xff]
    %v129 = vld [vmem:[#allocation3 + $0x1b8] sm:$0xff]
    %v130 = vld [vmem:[#allocation3 + $0x1c0] sm:$0xff]
    %v131 = vld [vmem:[#allocation3 + $0x1c8] sm:$0xff]
    %v132 = vld [vmem:[#allocation3 + $0x1d0] sm:$0xff]
    %v133 = vld [vmem:[#allocation3 + $0x1d8] sm:$0xff]
    %v134 = vld [vmem:[#allocation3 + $0x1e0] sm:$0xff]
    %v135 = vld [vmem:[#allocation3 + $0x1e8] sm:$0xff]
    %v136 = vld [vmem:[#allocation3 + $0x1f0] sm:$0xff]
    %v137 = vld [vmem:[#allocation3 + $0x1f8] sm:$0xff]
    %v138 = vld [vmem:[#allocation3 + $0x200] sm:$0xff]
    %v139 = vld [vmem:[#allocation3 + $0x208] sm:$0xff]
    %v140 = vld [vmem:[#allocation3 + $0x210] sm:$0xff]
    %v141 = vld [vmem:[#allocation3 + $0x218] sm:$0xff]
    %v142 = vld [vmem:[#allocation3 + $0x220] sm:$0xff]
    %v143 = vld [vmem:[#allocation3 + $0x228] sm:$0xff]
    %v144 = vld [vmem:[#allocation3 + $0x230] sm:$0xff]
    %v145 = vld [vmem:[#allocation3 + $0x238] sm:$0xff]
    %v146 = vld [vmem:[#allocation3 + $0x240] sm:$0xff]
    %v147 = vld [vmem:[#allocation3 + $0x248] sm:$0xff]
    %v148 = vld [vmem:[#allocation3 + $0x250] sm:$0xff]
    %v149 = vld [vmem:[#allocation3 + $0x258] sm:$0xff]
    %v150 = vld [vmem:[#allocation3 + $0x260] sm:$0xff]
    %v151 = vld [vmem:[#allocation3 + $0x268] sm:$0xff]
    %v152 = vld [vmem:[#allocation3 + $0x270] sm:$0xff]
    %v153 = vld [vmem:[#allocation3 + $0x278] sm:$0xff]
    %v154 = vld [vmem:[#allocation3 + $0x280] sm:$0xff]
    %v155 = vld [vmem:[#allocation3 + $0x288] sm:$0xff]
    %v156 = vld [vmem:[#allocation3 + $0x290] sm:$0xff]
    %v157 = vld [vmem:[#allocation3 + $0x298] sm:$0xff]
    %v158 = vld [vmem:[#allocation3 + $0x2a0] sm:$0xff]
    %v159 = vld [vmem:[#allocation3 + $0x2a8] sm:$0xff]
    %v160 = vld [vmem:[#allocation3 + $0x2b0] sm:$0xff]
    %v161 = vld [vmem:[#allocation3 + $0x2b8] sm:$0xff]
    %v162 = vld [vmem:[#allocation3 + $0x2c0] sm:$0xff]
    %v163 = vld [vmem:[#allocation3 + $0x2c8] sm:$0xff]
    %v164 = vld [vmem:[#allocation3 + $0x2d0] sm:$0xff]
    %v165 = vld [vmem:[#allocation3 + $0x2d8] sm:$0xff]
    %v166 = vld [vmem:[#allocation3 + $0x2e0] sm:$0xff]
    %v167 = vld [vmem:[#allocation3 + $0x2e8] sm:$0xff]
    %v168 = vld [vmem:[#allocation3 + $0x2f0] sm:$0xff]
    %v169 = vld [vmem:[#allocation3 + $0x2f8] sm:$0xff]
    %v170 = vld [vmem:[#allocation3 + $0x300] sm:$0xff]
    %v171 = vld [vmem:[#allocation3 + $0x308] sm:$0xff]
    %v172 = vld [vmem:[#allocation3 + $0x310] sm:$0xff]
    %v173 = vld [vmem:[#allocation3 + $0x318] sm:$0xff]
    %v174 = vld [vmem:[#allocation3 + $0x320] sm:$0xff]
    %v175 = vld [vmem:[#allocation3 + $0x328] sm:$0xff]
    %v176 = vld [vmem:[#allocation3 + $0x330] sm:$0xff]
    %v177 = vld [vmem:[#allocation3 + $0x338] sm:$0xff]
    %v178 = vld [vmem:[#allocation3 + $0x340] sm:$0xff]
    %v179 = vld [vmem:[#allocation3 + $0x348] sm:$0xff]
    %v180 = vld [vmem:[#allocation3 + $0x350] sm:$0xff]
    %v181 = vld [vmem:[#allocation3 + $0x358] sm:$0xff]
    %v182 = vld [vmem:[#allocation3 + $0x360] sm:$0xff]
    %v183 = vld [vmem:[#allocation3 + $0x368] sm:$0xff]
    %v184 = vld [vmem:[#allocation3 + $0x370] sm:$0xff]
    %v185 = vld [vmem:[#allocation3 + $0x378] sm:$0xff]
    %v186 = vld [vmem:[#allocation3 + $0x380] sm:$0xff]
    %v187 = vld [vmem:[#allocation3 + $0x388] sm:$0xff]
    %v188 = vld [vmem:[#allocation3 + $0x390] sm:$0xff]
    %v189 = vld [vmem:[#allocation3 + $0x398] sm:$0xff]
    %v190 = vld [vmem:[#allocation3 + $0x3a0] sm:$0xff]
    %v191 = vld [vmem:[#allocation3 + $0x3a8] sm:$0xff]
    %v192 = vld [vmem:[#allocation3 + $0x3b0] sm:$0xff]
    %v193 = vld [vmem:[#allocation3 + $0x3b8] sm:$0xff]
    %v194 = vld [vmem:[#allocation3 + $0x3c0] sm:$0xff]
    %v195 = vld [vmem:[#allocation3 + $0x3c8] sm:$0xff]
    %v196 = vld [vmem:[#allocation3 + $0x3d0] sm:$0xff]
    %v197 = vld [vmem:[#allocation3 + $0x3d8] sm:$0xff]
    %v198 = vld [vmem:[#allocation3 + $0x3e0] sm:$0xff]
    %v199 = vld [vmem:[#allocation3 + $0x3e8] sm:$0xff]
    %v200 = vld [vmem:[#allocation3 + $0x3f0] sm:$0xff]
    %v201 = vld [vmem:[#allocation3 + $0x3f8] sm:$0xff]
    %v202 = vld [vmem:[#allocation6] sm:$0xff]
    %v203 = vld [vmem:[#allocation6 + $0x8] sm:$0xff]
    %v204 = vld [vmem:[#allocation6 + $0x10] sm:$0xff]
    %v205 = vld [vmem:[#allocation6 + $0x18] sm:$0xff]
    %v206 = vld [vmem:[#allocation6 + $0x20] sm:$0xff]
    %v207 = vld [vmem:[#allocation6 + $0x28] sm:$0xff]
    %v208 = vld [vmem:[#allocation6 + $0x30] sm:$0xff]
    %v209 = vld [vmem:[#allocation6 + $0x38] sm:$0xff]
    %v210 = vld [vmem:[#allocation6 + $0x40] sm:$0xff]
    %v211 = vld [vmem:[#allocation6 + $0x48] sm:$0xff]
    %v212 = vld [vmem:[#allocation6 + $0x50] sm:$0xff]
    %v213 = vld [vmem:[#allocation6 + $0x58] sm:$0xff]
    %v214 = vld [vmem:[#allocation6 + $0x60] sm:$0xff]
    %v215 = vld [vmem:[#allocation6 + $0x68] sm:$0xff]
    %v216 = vld [vmem:[#allocation6 + $0x70] sm:$0xff]
    %v217 = vld [vmem:[#allocation6 + $0x78] sm:$0xff]
    %v218 = vld [vmem:[#allocation6 + $0x80] sm:$0xff]
    %v219 = vld [vmem:[#allocation6 + $0x88] sm:$0xff]
    %v220 = vld [vmem:[#allocation6 + $0x90] sm:$0xff]
    %v221 = vld [vmem:[#allocation6 + $0x98] sm:$0xff]
    %v222 = vld [vmem:[#allocation6 + $0xa0] sm:$0xff]
    %v223 = vld [vmem:[#allocation6 + $0xa8] sm:$0xff]
    %v224 = vld [vmem:[#allocation6 + $0xb0] sm:$0xff]
    %v225 = vld [vmem:[#allocation6 + $0xb8] sm:$0xff]
    %v226 = vld [vmem:[#allocation6 + $0xc0] sm:$0xff]
    %v227 = vld [vmem:[#allocation6 + $0xc8] sm:$0xff]
    %v228 = vld [vmem:[#allocation6 + $0xd0] sm:$0xff]
    %v229 = vld [vmem:[#allocation6 + $0xd8] sm:$0xff]
    %v230 = vld [vmem:[#allocation6 + $0xe0] sm:$0xff]
    %v231 = vld [vmem:[#allocation6 + $0xe8] sm:$0xff]
    %v232 = vld [vmem:[#allocation6 + $0xf0] sm:$0xff]
    %v233 = vld [vmem:[#allocation6 + $0xf8] sm:$0xff]
    %v234 = vld [vmem:[#allocation6 + $0x100] sm:$0xff]
    %v235 = vld [vmem:[#allocation6 + $0x108] sm:$0xff]
    %v236 = vld [vmem:[#allocation6 + $0x110] sm:$0xff]
    %v237 = vld [vmem:[#allocation6 + $0x118] sm:$0xff]
    %v238 = vld [vmem:[#allocation6 + $0x120] sm:$0xff]
    %v239 = vld [vmem:[#allocation6 + $0x128] sm:$0xff]
    %v240 = vld [vmem:[#allocation6 + $0x130] sm:$0xff]
    %v241 = vld [vmem:[#allocation6 + $0x138] sm:$0xff]
    %v242 = vld [vmem:[#allocation6 + $0x140] sm:$0xff]
    %v243 = vld [vmem:[#allocation6 + $0x148] sm:$0xff]
    %v244 = vld [vmem:[#allocation6 + $0x150] sm:$0xff]
    %v245 = vld [vmem:[#allocation6 + $0x158] sm:$0xff]
    %v246 = vld [vmem:[#allocation6 + $0x160] sm:$0xff]
    %v247 = vld [vmem:[#allocation6 + $0x168] sm:$0xff]
    %v248 = vld [vmem:[#allocation6 + $0x170] sm:$0xff]
    %v249 = vld [vmem:[#allocation6 + $0x178] sm:$0xff]
    %v250 = vld [vmem:[#allocation6 + $0x180] sm:$0xff]
    %v251 = vld [vmem:[#allocation6 + $0x188] sm:$0xff]
    %v252 = vld [vmem:[#allocation6 + $0x190] sm:$0xff]
    %v253 = vld [vmem:[#allocation6 + $0x198] sm:$0xff]
    %v254 = vld [vmem:[#allocation6 + $0x1a0] sm:$0xff]
    %v255 = vld [vmem:[#allocation6 + $0x1a8] sm:$0xff]
    %v256 = vld [vmem:[#allocation6 + $0x1b0] sm:$0xff]
    %v257 = vld [vmem:[#allocation6 + $0x1b8] sm:$0xff]
    %v258 = vld [vmem:[#allocation6 + $0x1c0] sm:$0xff]
    %v259 = vld [vmem:[#allocation6 + $0x1c8] sm:$0xff]
    %v260 = vld [vmem:[#allocation6 + $0x1d0] sm:$0xff]
    %v261 = vld [vmem:[#allocation6 + $0x1d8] sm:$0xff]
    %v262 = vld [vmem:[#allocation6 + $0x1e0] sm:$0xff]
    %v263 = vld [vmem:[#allocation6 + $0x1e8] sm:$0xff]
    %v264 = vld [vmem:[#allocation6 + $0x1f0] sm:$0xff]
    %v265 = vld [vmem:[#allocation6 + $0x1f8] sm:$0xff]
    %v266 = vld [vmem:[#allocation6 + $0x200] sm:$0xff]
    %v267 = vld [vmem:[#allocation6 + $0x208] sm:$0xff]
    %v268 = vld [vmem:[#allocation6 + $0x210] sm:$0xff]
    %v269 = vld [vmem:[#allocation6 + $0x218] sm:$0xff]
    %v270 = vld [vmem:[#allocation6 + $0x220] sm:$0xff]
    %v271 = vld [vmem:[#allocation6 + $0x228] sm:$0xff]
    %v272 = vld [vmem:[#allocation6 + $0x230] sm:$0xff]
    %v273 = vld [vmem:[#allocation6 + $0x238] sm:$0xff]
    %v274 = vld [vmem:[#allocation6 + $0x240] sm:$0xff]
    %v275 = vld [vmem:[#allocation6 + $0x248] sm:$0xff]
    %v276 = vld [vmem:[#allocation6 + $0x250] sm:$0xff]
    %v277 = vld [vmem:[#allocation6 + $0x258] sm:$0xff]
    %v278 = vld [vmem:[#allocation6 + $0x260] sm:$0xff]
    %v279 = vld [vmem:[#allocation6 + $0x268] sm:$0xff]
    %v280 = vld [vmem:[#allocation6 + $0x270] sm:$0xff]
    %v281 = vld [vmem:[#allocation6 + $0x278] sm:$0xff]
    %v282 = vld [vmem:[#allocation6 + $0x280] sm:$0xff]
    %v283 = vld [vmem:[#allocation6 + $0x288] sm:$0xff]
    %v284 = vld [vmem:[#allocation6 + $0x290] sm:$0xff]
    %v285 = vld [vmem:[#allocation6 + $0x298] sm:$0xff]
    %v286 = vld [vmem:[#allocation6 + $0x2a0] sm:$0xff]
    %v287 = vld [vmem:[#allocation6 + $0x2a8] sm:$0xff]
    %v288 = vld [vmem:[#allocation6 + $0x2b0] sm:$0xff]
    %v289 = vld [vmem:[#allocation6 + $0x2b8] sm:$0xff]
    %v290 = vld [vmem:[#allocation6 + $0x2c0] sm:$0xff]
    %v291 = vld [vmem:[#allocation6 + $0x2c8] sm:$0xff]
    %v292 = vld [vmem:[#allocation6 + $0x2d0] sm:$0xff]
    %v293 = vld [vmem:[#allocation6 + $0x2d8] sm:$0xff]
    %v294 = vld [vmem:[#allocation6 + $0x2e0] sm:$0xff]
    %v295 = vld [vmem:[#allocation6 + $0x2e8] sm:$0xff]
    %v296 = vld [vmem:[#allocation6 + $0x2f0] sm:$0xff]
    %v297 = vld [vmem:[#allocation6 + $0x2f8] sm:$0xff]
    %v298 = vld [vmem:[#allocation6 + $0x300] sm:$0xff]
    %v299 = vld [vmem:[#allocation6 + $0x308] sm:$0xff]
    %v300 = vld [vmem:[#allocation6 + $0x310] sm:$0xff]
    %v301 = vld [vmem:[#allocation6 + $0x318] sm:$0xff]
    %v302 = vld [vmem:[#allocation6 + $0x320] sm:$0xff]
    %v303 = vld [vmem:[#allocation6 + $0x328] sm:$0xff]
    %v304 = vld [vmem:[#allocation6 + $0x330] sm:$0xff]
    %v305 = vld [vmem:[#allocation6 + $0x338] sm:$0xff]
    %v306 = vld [vmem:[#allocation6 + $0x340] sm:$0xff]
    %v307 = vld [vmem:[#allocation6 + $0x348] sm:$0xff]
    %v308 = vld [vmem:[#allocation6 + $0x350] sm:$0xff]
    %v309 = vld [vmem:[#allocation6 + $0x358] sm:$0xff]
    %v310 = vld [vmem:[#allocation6 + $0x360] sm:$0xff]
    %v311 = vld [vmem:[#allocation6 + $0x368] sm:$0xff]
    %v312 = vld [vmem:[#allocation6 + $0x370] sm:$0xff]
    %v313 = vld [vmem:[#allocation6 + $0x378] sm:$0xff]
    %v314 = vld [vmem:[#allocation6 + $0x380] sm:$0xff]
    %v315 = vld [vmem:[#allocation6 + $0x388] sm:$0xff]
    %v316 = vld [vmem:[#allocation6 + $0x390] sm:$0xff]
    %v317 = vld [vmem:[#allocation6 + $0x398] sm:$0xff]
    %v318 = vld [vmem:[#allocation6 + $0x3a0] sm:$0xff]
    %v319 = vld [vmem:[#allocation6 + $0x3a8] sm:$0xff]
    %v320 = vld [vmem:[#allocation6 + $0x3b0] sm:$0xff]
    %v321 = vld [vmem:[#allocation6 + $0x3b8] sm:$0xff]
    %v322 = vld [vmem:[#allocation6 + $0x3c0] sm:$0xff]
    %v323 = vld [vmem:[#allocation6 + $0x3c8] sm:$0xff]
    %v324 = vld [vmem:[#allocation6 + $0x3d0] sm:$0xff]
    %v325 = vld [vmem:[#allocation6 + $0x3d8] sm:$0xff]
    %v326 = vld [vmem:[#allocation6 + $0x3e0] sm:$0xff]
    %v327 = vld [vmem:[#allocation6 + $0x3e8] sm:$0xff]
    %v328 = vld [vmem:[#allocation6 + $0x3f0] sm:$0xff]
    %v329 = vld [vmem:[#allocation6 + $0x3f8] sm:$0xff]
    %v330 = vld [vmem:[#allocation6 + $0x400] sm:$0xff]
    %v331 = vld [vmem:[#allocation6 + $0x408] sm:$0xff]
    %v332 = vld [vmem:[#allocation6 + $0x410] sm:$0xff]
    %v333 = vld [vmem:[#allocation6 + $0x418] sm:$0xff]
    %v334 = vld [vmem:[#allocation6 + $0x420] sm:$0xff]
    %v335 = vld [vmem:[#allocation6 + $0x428] sm:$0xff]
    %v336 = vld [vmem:[#allocation6 + $0x430] sm:$0xff]
    %v337 = vld [vmem:[#allocation6 + $0x438] sm:$0xff]
    %v338 = vld [vmem:[#allocation6 + $0x440] sm:$0xff]
    %v339 = vld [vmem:[#allocation6 + $0x448] sm:$0xff]
    %v340 = vld [vmem:[#allocation6 + $0x450] sm:$0xff]
    %v341 = vld [vmem:[#allocation6 + $0x458] sm:$0xff]
    %v342 = vld [vmem:[#allocation6 + $0x460] sm:$0xff]
    %v343 = vld [vmem:[#allocation6 + $0x468] sm:$0xff]
    %v344 = vld [vmem:[#allocation6 + $0x470] sm:$0xff]
    %v345 = vld [vmem:[#allocation6 + $0x478] sm:$0xff]
    %v346 = vld [vmem:[#allocation6 + $0x480] sm:$0xff]
    %v347 = vld [vmem:[#allocation6 + $0x488] sm:$0xff]
    %v348 = vld [vmem:[#allocation6 + $0x490] sm:$0xff]
    %v349 = vld [vmem:[#allocation6 + $0x498] sm:$0xff]
    %v350 = vld [vmem:[#allocation6 + $0x4a0] sm:$0xff]
    %v351 = vld [vmem:[#allocation6 + $0x4a8] sm:$0xff]
    %v352 = vld [vmem:[#allocation6 + $0x4b0] sm:$0xff]
    %v353 = vld [vmem:[#allocation6 + $0x4b8] sm:$0xff]
    %v354 = vld [vmem:[#allocation6 + $0x4c0] sm:$0xff]
    %v355 = vld [vmem:[#allocation6 + $0x4c8] sm:$0xff]
    %v356 = vld [vmem:[#allocation6 + $0x4d0] sm:$0xff]
    %v357 = vld [vmem:[#allocation6 + $0x4d8] sm:$0xff]
    %v358 = vld [vmem:[#allocation6 + $0x4e0] sm:$0xff]
    %v359 = vld [vmem:[#allocation6 + $0x4e8] sm:$0xff]
    %v360 = vld [vmem:[#allocation6 + $0x4f0] sm:$0xff]
    %v361 = vld [vmem:[#allocation6 + $0x4f8] sm:$0xff]
    %v362 = vld [vmem:[#allocation6 + $0x500] sm:$0xff]
    %v363 = vld [vmem:[#allocation6 + $0x508] sm:$0xff]
    %v364 = vld [vmem:[#allocation6 + $0x510] sm:$0xff]
    %v365 = vld [vmem:[#allocation6 + $0x518] sm:$0xff]
    %v366 = vld [vmem:[#allocation6 + $0x520] sm:$0xff]
    %v367 = vld [vmem:[#allocation6 + $0x528] sm:$0xff]
    %v368 = vld [vmem:[#allocation6 + $0x530] sm:$0xff]
    %v369 = vld [vmem:[#allocation6 + $0x538] sm:$0xff]
    %v370 = vld [vmem:[#allocation6 + $0x540] sm:$0xff]
    %v371 = vld [vmem:[#allocation6 + $0x548] sm:$0xff]
    %v372 = vld [vmem:[#allocation6 + $0x550] sm:$0xff]
    %v373 = vld [vmem:[#allocation6 + $0x558] sm:$0xff]
    %v374 = vld [vmem:[#allocation6 + $0x560] sm:$0xff]
    %v375 = vld [vmem:[#allocation6 + $0x568] sm:$0xff]
    %v376 = vld [vmem:[#allocation6 + $0x570] sm:$0xff]
    %v377 = vld [vmem:[#allocation6 + $0x578] sm:$0xff]
    %v378 = vld [vmem:[#allocation6 + $0x580] sm:$0xff]
    %v379 = vld [vmem:[#allocation6 + $0x588] sm:$0xff]
    %v380 = vld [vmem:[#allocation6 + $0x590] sm:$0xff]
    %v381 = vld [vmem:[#allocation6 + $0x598] sm:$0xff]
    %v382 = vld [vmem:[#allocation6 + $0x5a0] sm:$0xff]
    %v383 = vld [vmem:[#allocation6 + $0x5a8] sm:$0xff]
    %v384 = vld [vmem:[#allocation6 + $0x5b0] sm:$0xff]
    %v385 = vld [vmem:[#allocation6 + $0x5b8] sm:$0xff]
    %v386 = vld [vmem:[#allocation6 + $0x5c0] sm:$0xff]
    %v387 = vld [vmem:[#allocation6 + $0x5c8] sm:$0xff]
    %v388 = vld [vmem:[#allocation6 + $0x5d0] sm:$0xff]
    %v389 = vld [vmem:[#allocation6 + $0x5d8] sm:$0xff]
    %v390 = vld [vmem:[#allocation6 + $0x5e0] sm:$0xff]
    %v391 = vld [vmem:[#allocation6 + $0x5e8] sm:$0xff]
    %v392 = vld [vmem:[#allocation6 + $0x5f0] sm:$0xff]
    %v393 = vld [vmem:[#allocation6 + $0x5f8] sm:$0xff]
    %v394 = vld [vmem:[#allocation6 + $0x600] sm:$0xff]
    %v395 = vld [vmem:[#allocation6 + $0x608] sm:$0xff]
    %v396 = vld [vmem:[#allocation6 + $0x610] sm:$0xff]
    %v397 = vld [vmem:[#allocation6 + $0x618] sm:$0xff]
    %v398 = vld [vmem:[#allocation6 + $0x620] sm:$0xff]
    %v399 = vld [vmem:[#allocation6 + $0x628] sm:$0xff]
    %v400 = vld [vmem:[#allocation6 + $0x630] sm:$0xff]
    %v401 = vld [vmem:[#allocation6 + $0x638] sm:$0xff]
    %v402 = vld [vmem:[#allocation6 + $0x640] sm:$0xff]
    %v403 = vld [vmem:[#allocation6 + $0x648] sm:$0xff]
    %v404 = vld [vmem:[#allocation6 + $0x650] sm:$0xff]
    %v405 = vld [vmem:[#allocation6 + $0x658] sm:$0xff]
    %v406 = vld [vmem:[#allocation6 + $0x660] sm:$0xff]
    %v407 = vld [vmem:[#allocation6 + $0x668] sm:$0xff]
    %v408 = vld [vmem:[#allocation6 + $0x670] sm:$0xff]
    %v409 = vld [vmem:[#allocation6 + $0x678] sm:$0xff]
    %v410 = vld [vmem:[#allocation6 + $0x680] sm:$0xff]
    %v411 = vld [vmem:[#allocation6 + $0x688] sm:$0xff]
    %v412 = vld [vmem:[#allocation6 + $0x690] sm:$0xff]
    %v413 = vld [vmem:[#allocation6 + $0x698] sm:$0xff]
    %v414 = vld [vmem:[#allocation6 + $0x6a0] sm:$0xff]
    %v415 = vld [vmem:[#allocation6 + $0x6a8] sm:$0xff]
    %v416 = vld [vmem:[#allocation6 + $0x6b0] sm:$0xff]
    %v417 = vld [vmem:[#allocation6 + $0x6b8] sm:$0xff]
    %v418 = vld [vmem:[#allocation6 + $0x6c0] sm:$0xff]
    %v419 = vld [vmem:[#allocation6 + $0x6c8] sm:$0xff]
    %v420 = vld [vmem:[#allocation6 + $0x6d0] sm:$0xff]
    %v421 = vld [vmem:[#allocation6 + $0x6d8] sm:$0xff]
    %v422 = vld [vmem:[#allocation6 + $0x6e0] sm:$0xff]
    %v423 = vld [vmem:[#allocation6 + $0x6e8] sm:$0xff]
    %v424 = vld [vmem:[#allocation6 + $0x6f0] sm:$0xff]
    %v425 = vld [vmem:[#allocation6 + $0x6f8] sm:$0xff]
    %v426 = vld [vmem:[#allocation6 + $0x700] sm:$0xff]
    %v427 = vld [vmem:[#allocation6 + $0x708] sm:$0xff]
    %v428 = vld [vmem:[#allocation6 + $0x710] sm:$0xff]
    %v429 = vld [vmem:[#allocation6 + $0x718] sm:$0xff]
    %v430 = vld [vmem:[#allocation6 + $0x720] sm:$0xff]
    %v431 = vld [vmem:[#allocation6 + $0x728] sm:$0xff]
    %v432 = vld [vmem:[#allocation6 + $0x730] sm:$0xff]
    %v433 = vld [vmem:[#allocation6 + $0x738] sm:$0xff]
    %v434 = vld [vmem:[#allocation6 + $0x740] sm:$0xff]
    %v435 = vld [vmem:[#allocation6 + $0x748] sm:$0xff]
    %v436 = vld [vmem:[#allocation6 + $0x750] sm:$0xff]
    %v437 = vld [vmem:[#allocation6 + $0x758] sm:$0xff]
    %v438 = vld [vmem:[#allocation6 + $0x760] sm:$0xff]
    %v439 = vld [vmem:[#allocation6 + $0x768] sm:$0xff]
    %v440 = vld [vmem:[#allocation6 + $0x770] sm:$0xff]
    %v441 = vld [vmem:[#allocation6 + $0x778] sm:$0xff]
    %v442 = vld [vmem:[#allocation6 + $0x780] sm:$0xff]
    %v443 = vld [vmem:[#allocation6 + $0x788] sm:$0xff]
    %v444 = vld [vmem:[#allocation6 + $0x790] sm:$0xff]
    %v445 = vld [vmem:[#allocation6 + $0x798] sm:$0xff]
    %v446 = vld [vmem:[#allocation6 + $0x7a0] sm:$0xff]
    %v447 = vld [vmem:[#allocation6 + $0x7a8] sm:$0xff]
    %v448 = vld [vmem:[#allocation6 + $0x7b0] sm:$0xff]
    %v449 = vld [vmem:[#allocation6 + $0x7b8] sm:$0xff]
    %v450 = vld [vmem:[#allocation6 + $0x7c0] sm:$0xff]
    %v451 = vld [vmem:[#allocation6 + $0x7c8] sm:$0xff]
    %v452 = vld [vmem:[#allocation6 + $0x7d0] sm:$0xff]
    %v453 = vld [vmem:[#allocation6 + $0x7d8] sm:$0xff]
    %v454 = vld [vmem:[#allocation6 + $0x7e0] sm:$0xff]
    %v455 = vld [vmem:[#allocation6 + $0x7e8] sm:$0xff]
    %v456 = vld [vmem:[#allocation6 + $0x7f0] sm:$0xff]
    %v457 = vld [vmem:[#allocation6 + $0x7f8] sm:$0xff]
    %v458 = vld [vmem:[#allocation6 + $0x800] sm:$0xff]
    %v459 = vld [vmem:[#allocation6 + $0x808] sm:$0xff]
    %v460 = vld [vmem:[#allocation6 + $0x810] sm:$0xff]
    %v461 = vld [vmem:[#allocation6 + $0x818] sm:$0xff]
    %v462 = vld [vmem:[#allocation6 + $0x820] sm:$0xff]
    %v463 = vld [vmem:[#allocation6 + $0x828] sm:$0xff]
    %v464 = vld [vmem:[#allocation6 + $0x830] sm:$0xff]
    %v465 = vld [vmem:[#allocation6 + $0x838] sm:$0xff]
    %v466 = vld [vmem:[#allocation6 + $0x840] sm:$0xff]
    %v467 = vld [vmem:[#allocation6 + $0x848] sm:$0xff]
    %v468 = vld [vmem:[#allocation6 + $0x850] sm:$0xff]
    %v469 = vld [vmem:[#allocation6 + $0x858] sm:$0xff]
    %v470 = vld [vmem:[#allocation6 + $0x860] sm:$0xff]
    %v471 = vld [vmem:[#allocation6 + $0x868] sm:$0xff]
    %v472 = vld [vmem:[#allocation6 + $0x870] sm:$0xff]
    %v473 = vld [vmem:[#allocation6 + $0x878] sm:$0xff]
    %v474 = vld [vmem:[#allocation6 + $0x880] sm:$0xff]
    %v475 = vld [vmem:[#allocation6 + $0x888] sm:$0xff]
    %v476 = vld [vmem:[#allocation6 + $0x890] sm:$0xff]
    %v477 = vld [vmem:[#allocation6 + $0x898] sm:$0xff]
    %v478 = vld [vmem:[#allocation6 + $0x8a0] sm:$0xff]
    %v479 = vld [vmem:[#allocation6 + $0x8a8] sm:$0xff]
    %v480 = vld [vmem:[#allocation6 + $0x8b0] sm:$0xff]
    %v481 = vld [vmem:[#allocation6 + $0x8b8] sm:$0xff]
    %v482 = vld [vmem:[#allocation6 + $0x8c0] sm:$0xff]
    %v483 = vld [vmem:[#allocation6 + $0x8c8] sm:$0xff]
    %v484 = vld [vmem:[#allocation6 + $0x8d0] sm:$0xff]
    %v485 = vld [vmem:[#allocation6 + $0x8d8] sm:$0xff]
    %v486 = vld [vmem:[#allocation6 + $0x8e0] sm:$0xff]
    %v487 = vld [vmem:[#allocation6 + $0x8e8] sm:$0xff]
    %v488 = vld [vmem:[#allocation6 + $0x8f0] sm:$0xff]
    %v489 = vld [vmem:[#allocation6 + $0x8f8] sm:$0xff]
    %v490 = vld [vmem:[#allocation6 + $0x900] sm:$0xff]
    %v491 = vld [vmem:[#allocation6 + $0x908] sm:$0xff]
    %v492 = vld [vmem:[#allocation6 + $0x910] sm:$0xff]
    %v493 = vld [vmem:[#allocation6 + $0x918] sm:$0xff]
    %v494 = vld [vmem:[#allocation6 + $0x920] sm:$0xff]
    %v495 = vld [vmem:[#allocation6 + $0x928] sm:$0xff]
    %v496 = vld [vmem:[#allocation6 + $0x930] sm:$0xff]
    %v497 = vld [vmem:[#allocation6 + $0x938] sm:$0xff]
    %v498 = vld [vmem:[#allocation6 + $0x940] sm:$0xff]
    %v499 = vld [vmem:[#allocation6 + $0x948] sm:$0xff]
    %v500 = vld [vmem:[#allocation6 + $0x950] sm:$0xff]
    %v501 = vld [vmem:[#allocation6 + $0x958] sm:$0xff]
    %v502 = vld [vmem:[#allocation6 + $0x960] sm:$0xff]
    %v503 = vld [vmem:[#allocation6 + $0x968] sm:$0xff]
    %v504 = vld [vmem:[#allocation6 + $0x970] sm:$0xff]
    %v505 = vld [vmem:[#allocation6 + $0x978] sm:$0xff]
    %v506 = vld [vmem:[#allocation6 + $0x980] sm:$0xff]
    %v507 = vld [vmem:[#allocation6 + $0x988] sm:$0xff]
    %v508 = vld [vmem:[#allocation6 + $0x990] sm:$0xff]
    %v509 = vld [vmem:[#allocation6 + $0x998] sm:$0xff]
    %v510 = vld [vmem:[#allocation6 + $0x9a0] sm:$0xff]
    %v511 = vld [vmem:[#allocation6 + $0x9a8] sm:$0xff]
    %v512 = vld [vmem:[#allocation6 + $0x9b0] sm:$0xff]
    %v513 = vld [vmem:[#allocation6 + $0x9b8] sm:$0xff]
    %v514 = vld [vmem:[#allocation6 + $0x9c0] sm:$0xff]
    %v515 = vld [vmem:[#allocation6 + $0x9c8] sm:$0xff]
    %v516 = vld [vmem:[#allocation6 + $0x9d0] sm:$0xff]
    %v517 = vld [vmem:[#allocation6 + $0x9d8] sm:$0xff]
    %v518 = vld [vmem:[#allocation6 + $0x9e0] sm:$0xff]
    %v519 = vld [vmem:[#allocation6 + $0x9e8] sm:$0xff]
    %v520 = vld [vmem:[#allocation6 + $0x9f0] sm:$0xff]
    %v521 = vld [vmem:[#allocation6 + $0x9f8] sm:$0xff]
    %v522 = vld [vmem:[#allocation6 + $0xa00] sm:$0xff]
    %v523 = vld [vmem:[#allocation6 + $0xa08] sm:$0xff]
    %v524 = vld [vmem:[#allocation6 + $0xa10] sm:$0xff]
    %v525 = vld [vmem:[#allocation6 + $0xa18] sm:$0xff]
    %v526 = vld [vmem:[#allocation6 + $0xa20] sm:$0xff]
    %v527 = vld [vmem:[#allocation6 + $0xa28] sm:$0xff]
    %v528 = vld [vmem:[#allocation6 + $0xa30] sm:$0xff]
    %v529 = vld [vmem:[#allocation6 + $0xa38] sm:$0xff]
    %v530 = vld [vmem:[#allocation6 + $0xa40] sm:$0xff]
    %v531 = vld [vmem:[#allocation6 + $0xa48] sm:$0xff]
    %v532 = vld [vmem:[#allocation6 + $0xa50] sm:$0xff]
    %v533 = vld [vmem:[#allocation6 + $0xa58] sm:$0xff]
    %v534 = vld [vmem:[#allocation6 + $0xa60] sm:$0xff]
    %v535 = vld [vmem:[#allocation6 + $0xa68] sm:$0xff]
    %v536 = vld [vmem:[#allocation6 + $0xa70] sm:$0xff]
    %v537 = vld [vmem:[#allocation6 + $0xa78] sm:$0xff]
    %v538 = vld [vmem:[#allocation6 + $0xa80] sm:$0xff]
    %v539 = vld [vmem:[#allocation6 + $0xa88] sm:$0xff]
    %v540 = vld [vmem:[#allocation6 + $0xa90] sm:$0xff]
    %v541 = vld [vmem:[#allocation6 + $0xa98] sm:$0xff]
    %v542 = vld [vmem:[#allocation6 + $0xaa0] sm:$0xff]
    %v543 = vld [vmem:[#allocation6 + $0xaa8] sm:$0xff]
    %v544 = vld [vmem:[#allocation6 + $0xab0] sm:$0xff]
    %v545 = vld [vmem:[#allocation6 + $0xab8] sm:$0xff]
    %v546 = vld [vmem:[#allocation6 + $0xac0] sm:$0xff]
    %v547 = vld [vmem:[#allocation6 + $0xac8] sm:$0xff]
    %v548 = vld [vmem:[#allocation6 + $0xad0] sm:$0xff]
    %v549 = vld [vmem:[#allocation6 + $0xad8] sm:$0xff]
    %v550 = vld [vmem:[#allocation6 + $0xae0] sm:$0xff]
    %v551 = vld [vmem:[#allocation6 + $0xae8] sm:$0xff]
    %v552 = vld [vmem:[#allocation6 + $0xaf0] sm:$0xff]
    %v553 = vld [vmem:[#allocation6 + $0xaf8] sm:$0xff]
    %v554 = vld [vmem:[#allocation6 + $0xb00] sm:$0xff]
    %v555 = vld [vmem:[#allocation6 + $0xb08] sm:$0xff]
    %v556 = vld [vmem:[#allocation6 + $0xb10] sm:$0xff]
    %v557 = vld [vmem:[#allocation6 + $0xb18] sm:$0xff]
    %v558 = vld [vmem:[#allocation6 + $0xb20] sm:$0xff]
    %v559 = vld [vmem:[#allocation6 + $0xb28] sm:$0xff]
    %v560 = vld [vmem:[#allocation6 + $0xb30] sm:$0xff]
    %v561 = vld [vmem:[#allocation6 + $0xb38] sm:$0xff]
    %v562 = vld [vmem:[#allocation6 + $0xb40] sm:$0xff]
    %v563 = vld [vmem:[#allocation6 + $0xb48] sm:$0xff]
    %v564 = vld [vmem:[#allocation6 + $0xb50] sm:$0xff]
    %v565 = vld [vmem:[#allocation6 + $0xb58] sm:$0xff]
    %v566 = vld [vmem:[#allocation6 + $0xb60] sm:$0xff]
    %v567 = vld [vmem:[#allocation6 + $0xb68] sm:$0xff]
    %v568 = vld [vmem:[#allocation6 + $0xb70] sm:$0xff]
    %v569 = vld [vmem:[#allocation6 + $0xb78] sm:$0xff]
    %v570 = vld [vmem:[#allocation6 + $0xb80] sm:$0xff]
    %v571 = vld [vmem:[#allocation6 + $0xb88] sm:$0xff]
    %v572 = vld [vmem:[#allocation6 + $0xb90] sm:$0xff]
    %v573 = vld [vmem:[#allocation6 + $0xb98] sm:$0xff]
    %v574 = vld [vmem:[#allocation6 + $0xba0] sm:$0xff]
    %v575 = vld [vmem:[#allocation6 + $0xba8] sm:$0xff]
    %v576 = vld [vmem:[#allocation6 + $0xbb0] sm:$0xff]
    %v577 = vld [vmem:[#allocation6 + $0xbb8] sm:$0xff]
    %v578 = vld [vmem:[#allocation6 + $0xbc0] sm:$0xff]
    %v579 = vld [vmem:[#allocation6 + $0xbc8] sm:$0xff]
    %v580 = vld [vmem:[#allocation6 + $0xbd0] sm:$0xff]
    %v581 = vld [vmem:[#allocation6 + $0xbd8] sm:$0xff]
    %v582 = vld [vmem:[#allocation6 + $0xbe0] sm:$0xff]
    %v583 = vld [vmem:[#allocation6 + $0xbe8] sm:$0xff]
    %v584 = vld [vmem:[#allocation6 + $0xbf0] sm:$0xff]
    %v585 = vld [vmem:[#allocation6 + $0xbf8] sm:$0xff]
    %v586 = vld [vmem:[#allocation6 + $0xc00] sm:$0xff]
    %v587 = vld [vmem:[#allocation6 + $0xc08] sm:$0xff]
    %v588 = vld [vmem:[#allocation6 + $0xc10] sm:$0xff]
    %v589 = vld [vmem:[#allocation6 + $0xc18] sm:$0xff]
    %v590 = vld [vmem:[#allocation6 + $0xc20] sm:$0xff]
    %v591 = vld [vmem:[#allocation6 + $0xc28] sm:$0xff]
    %v592 = vld [vmem:[#allocation6 + $0xc30] sm:$0xff]
    %v593 = vld [vmem:[#allocation6 + $0xc38] sm:$0xff]
    %v594 = vld [vmem:[#allocation6 + $0xc40] sm:$0xff]
    %v595 = vld [vmem:[#allocation6 + $0xc48] sm:$0xff]
    %v596 = vld [vmem:[#allocation6 + $0xc50] sm:$0xff]
    %v597 = vld [vmem:[#allocation6 + $0xc58] sm:$0xff]
    %v598 = vld [vmem:[#allocation6 + $0xc60] sm:$0xff]
    %v599 = vld [vmem:[#allocation6 + $0xc68] sm:$0xff]
    %v600 = vld [vmem:[#allocation6 + $0xc70] sm:$0xff]
    %v601 = vld [vmem:[#allocation6 + $0xc78] sm:$0xff]
    %v602 = vld [vmem:[#allocation6 + $0xc80] sm:$0xff]
    %v603 = vld [vmem:[#allocation6 + $0xc88] sm:$0xff]
    %v604 = vld [vmem:[#allocation6 + $0xc90] sm:$0xff]
    %v605 = vld [vmem:[#allocation6 + $0xc98] sm:$0xff]
    %v606 = vld [vmem:[#allocation6 + $0xca0] sm:$0xff]
    %v607 = vld [vmem:[#allocation6 + $0xca8] sm:$0xff]
    %v608 = vld [vmem:[#allocation6 + $0xcb0] sm:$0xff]
    %v609 = vld [vmem:[#allocation6 + $0xcb8] sm:$0xff]
    %v610 = vld [vmem:[#allocation6 + $0xcc0] sm:$0xff]
    %v611 = vld [vmem:[#allocation6 + $0xcc8] sm:$0xff]
    %v612 = vld [vmem:[#allocation6 + $0xcd0] sm:$0xff]
    %v613 = vld [vmem:[#allocation6 + $0xcd8] sm:$0xff]
    %v614 = vld [vmem:[#allocation6 + $0xce0] sm:$0xff]
    %v615 = vld [vmem:[#allocation6 + $0xce8] sm:$0xff]
    %v616 = vld [vmem:[#allocation6 + $0xcf0] sm:$0xff]
    %v617 = vld [vmem:[#allocation6 + $0xcf8] sm:$0xff]
    %v618 = vld [vmem:[#allocation6 + $0xd00] sm:$0xff]
    %v619 = vld [vmem:[#allocation6 + $0xd08] sm:$0xff]
    %v620 = vld [vmem:[#allocation6 + $0xd10] sm:$0xff]
    %v621 = vld [vmem:[#allocation6 + $0xd18] sm:$0xff]
    %v622 = vld [vmem:[#allocation6 + $0xd20] sm:$0xff]
    %v623 = vld [vmem:[#allocation6 + $0xd28] sm:$0xff]
    %v624 = vld [vmem:[#allocation6 + $0xd30] sm:$0xff]
    %v625 = vld [vmem:[#allocation6 + $0xd38] sm:$0xff]
    %v626 = vld [vmem:[#allocation6 + $0xd40] sm:$0xff]
    %v627 = vld [vmem:[#allocation6 + $0xd48] sm:$0xff]
    %v628 = vld [vmem:[#allocation6 + $0xd50] sm:$0xff]
    %v629 = vld [vmem:[#allocation6 + $0xd58] sm:$0xff]
    %v630 = vld [vmem:[#allocation6 + $0xd60] sm:$0xff]
    %v631 = vld [vmem:[#allocation6 + $0xd68] sm:$0xff]
    %v632 = vld [vmem:[#allocation6 + $0xd70] sm:$0xff]
    %v633 = vld [vmem:[#allocation6 + $0xd78] sm:$0xff]
    %v634 = vld [vmem:[#allocation6 + $0xd80] sm:$0xff]
    %v635 = vld [vmem:[#allocation6 + $0xd88] sm:$0xff]
    %v636 = vld [vmem:[#allocation6 + $0xd90] sm:$0xff]
    %v637 = vld [vmem:[#allocation6 + $0xd98] sm:$0xff]
    %v638 = vld [vmem:[#allocation6 + $0xda0] sm:$0xff]
    %v639 = vld [vmem:[#allocation6 + $0xda8] sm:$0xff]
    %v640 = vld [vmem:[#allocation6 + $0xdb0] sm:$0xff]
    %v641 = vld [vmem:[#allocation6 + $0xdb8] sm:$0xff]
    %v642 = vld [vmem:[#allocation6 + $0xdc0] sm:$0xff]
    %v643 = vld [vmem:[#allocation6 + $0xdc8] sm:$0xff]
    %v644 = vld [vmem:[#allocation6 + $0xdd0] sm:$0xff]
    %v645 = vld [vmem:[#allocation6 + $0xdd8] sm:$0xff]
    %v646 = vld [vmem:[#allocation6 + $0xde0] sm:$0xff]
    %v647 = vld [vmem:[#allocation6 + $0xde8] sm:$0xff]
    %v648 = vld [vmem:[#allocation6 + $0xdf0] sm:$0xff]
    %v649 = vld [vmem:[#allocation6 + $0xdf8] sm:$0xff]
    %v650 = vld [vmem:[#allocation6 + $0xe00] sm:$0xff]
    %v651 = vld [vmem:[#allocation6 + $0xe08] sm:$0xff]
    %v652 = vld [vmem:[#allocation6 + $0xe10] sm:$0xff]
    %v653 = vld [vmem:[#allocation6 + $0xe18] sm:$0xff]
    %v654 = vld [vmem:[#allocation6 + $0xe20] sm:$0xff]
    %v655 = vld [vmem:[#allocation6 + $0xe28] sm:$0xff]
    %v656 = vld [vmem:[#allocation6 + $0xe30] sm:$0xff]
    %v657 = vld [vmem:[#allocation6 + $0xe38] sm:$0xff]
    %v658 = vld [vmem:[#allocation6 + $0xe40] sm:$0xff]
    %v659 = vld [vmem:[#allocation6 + $0xe48] sm:$0xff]
    %v660 = vld [vmem:[#allocation6 + $0xe50] sm:$0xff]
    %v661 = vld [vmem:[#allocation6 + $0xe58] sm:$0xff]
    %v662 = vld [vmem:[#allocation6 + $0xe60] sm:$0xff]
    %v663 = vld [vmem:[#allocation6 + $0xe68] sm:$0xff]
    %v664 = vld [vmem:[#allocation6 + $0xe70] sm:$0xff]
    %v665 = vld [vmem:[#allocation6 + $0xe78] sm:$0xff]
    %v666 = vld [vmem:[#allocation6 + $0xe80] sm:$0xff]
    %v667 = vld [vmem:[#allocation6 + $0xe88] sm:$0xff]
    %v668 = vld [vmem:[#allocation6 + $0xe90] sm:$0xff]
    %v669 = vld [vmem:[#allocation6 + $0xe98] sm:$0xff]
    %v670 = vld [vmem:[#allocation6 + $0xea0] sm:$0xff]
    %v671 = vld [vmem:[#allocation6 + $0xea8] sm:$0xff]
    %v672 = vld [vmem:[#allocation6 + $0xeb0] sm:$0xff]
    %v673 = vld [vmem:[#allocation6 + $0xeb8] sm:$0xff]
    %v674 = vld [vmem:[#allocation6 + $0xec0] sm:$0xff]
    %v675 = vld [vmem:[#allocation6 + $0xec8] sm:$0xff]
    %v676 = vld [vmem:[#allocation6 + $0xed0] sm:$0xff]
    %v677 = vld [vmem:[#allocation6 + $0xed8] sm:$0xff]
    %v678 = vld [vmem:[#allocation6 + $0xee0] sm:$0xff]
    %v679 = vld [vmem:[#allocation6 + $0xee8] sm:$0xff]
    %v680 = vld [vmem:[#allocation6 + $0xef0] sm:$0xff]
    %v681 = vld [vmem:[#allocation6 + $0xef8] sm:$0xff]
    %v682 = vld [vmem:[#allocation6 + $0xf00] sm:$0xff]
    %v683 = vld [vmem:[#allocation6 + $0xf08] sm:$0xff]
    %v684 = vld [vmem:[#allocation6 + $0xf10] sm:$0xff]
    %v685 = vld [vmem:[#allocation6 + $0xf18] sm:$0xff]
    %v686 = vld [vmem:[#allocation6 + $0xf20] sm:$0xff]
    %v687 = vld [vmem:[#allocation6 + $0xf28] sm:$0xff]
    %v688 = vld [vmem:[#allocation6 + $0xf30] sm:$0xff]
    %v689 = vld [vmem:[#allocation6 + $0xf38] sm:$0xff]
    %v690 = vld [vmem:[#allocation6 + $0xf40] sm:$0xff]
    %v691 = vld [vmem:[#allocation6 + $0xf48] sm:$0xff]
    %v692 = vld [vmem:[#allocation6 + $0xf50] sm:$0xff]
    %v693 = vld [vmem:[#allocation6 + $0xf58] sm:$0xff]
    %v694 = vld [vmem:[#allocation6 + $0xf60] sm:$0xff]
    %v695 = vld [vmem:[#allocation6 + $0xf68] sm:$0xff]
    %v696 = vld [vmem:[#allocation6 + $0xf70] sm:$0xff]
    %v697 = vld [vmem:[#allocation6 + $0xf78] sm:$0xff]
    %v698 = vld [vmem:[#allocation6 + $0xf80] sm:$0xff]
    %v699 = vld [vmem:[#allocation6 + $0xf88] sm:$0xff]
    %v700 = vld [vmem:[#allocation6 + $0xf90] sm:$0xff]
    %v701 = vld [vmem:[#allocation6 + $0xf98] sm:$0xff]
    %v702 = vld [vmem:[#allocation6 + $0xfa0] sm:$0xff]
    %v703 = vld [vmem:[#allocation6 + $0xfa8] sm:$0xff]
    %v704 = vld [vmem:[#allocation6 + $0xfb0] sm:$0xff]
    %v705 = vld [vmem:[#allocation6 + $0xfb8] sm:$0xff]
    %v706 = vld [vmem:[#allocation6 + $0xfc0] sm:$0xff]
    %v707 = vld [vmem:[#allocation6 + $0xfc8] sm:$0xff]
    %v708 = vld [vmem:[#allocation6 + $0xfd0] sm:$0xff]
    %v709 = vld [vmem:[#allocation6 + $0xfd8] sm:$0xff]
    %v710 = vld [vmem:[#allocation6 + $0xfe0] sm:$0xff]
    %v711 = vld [vmem:[#allocation6 + $0xfe8] sm:$0xff]
    %v712 = vld [vmem:[#allocation6 + $0xff0] sm:$0xff]
    %v713 = vld [vmem:[#allocation6 + $0xff8] sm:$0xff]
    %v714 = vld [vmem:[#allocation8] sm:$0xf]
    %v716 = vlaneseq
    %v717 = vshrl.u32 %v716, 7
    %v718 = vsub.s32 0, %v717
    %v719 = vrot.slane %v714, %v718
    %v720 = vlaneseq
    %v721 = vshrl.u32 %v720, 7
    %v722 = vsub.s32 1, %v721
    %v723 = vrot.slane %v714, %v722
    %v724 = vlaneseq
    %v725 = vshrl.u32 %v724, 7
    %v726 = vsub.s32 2, %v725
    %v727 = vrot.slane %v714, %v726
    %v728 = vlaneseq
    %v729 = vshrl.u32 %v728, 7
    %v730 = vsub.s32 3, %v729
    %v731 = vrot.slane %v714, %v730
    %v864 = vunpack.c.l.b16 %v74
    %v865 = vunpack.c.h.b16 %v74
    %v866 = vunpack.c.l.b16 %v75
    %v867 = vunpack.c.h.b16 %v75
    %v868 = vunpack.c.l.b16 %v76
    %v869 = vunpack.c.h.b16 %v76
    %v870 = vunpack.c.l.b16 %v77
    %v871 = vunpack.c.h.b16 %v77
    %v872 = vunpack.c.l.b16 %v78
    %v873 = vunpack.c.h.b16 %v78
    %v874 = vunpack.c.l.b16 %v79
    %v875 = vunpack.c.h.b16 %v79
    %v876 = vunpack.c.l.b16 %v80
    %v877 = vunpack.c.h.b16 %v80
    %v878 = vunpack.c.l.b16 %v81
    %v879 = vunpack.c.h.b16 %v81
    %v880 = vunpack.c.l.b16 %v82
    %v881 = vunpack.c.h.b16 %v82
    %v882 = vunpack.c.l.b16 %v83
    %v883 = vunpack.c.h.b16 %v83
    %v884 = vunpack.c.l.b16 %v84
    %v885 = vunpack.c.h.b16 %v84
    %v886 = vunpack.c.l.b16 %v85
    %v887 = vunpack.c.h.b16 %v85
    %v888 = vunpack.c.l.b16 %v86
    %v889 = vunpack.c.h.b16 %v86
    %v890 = vunpack.c.l.b16 %v87
    %v891 = vunpack.c.h.b16 %v87
    %v892 = vunpack.c.l.b16 %v88
    %v893 = vunpack.c.h.b16 %v88
    %v894 = vunpack.c.l.b16 %v89
    %v895 = vunpack.c.h.b16 %v89
    %v896 = vunpack.c.l.b16 %v90
    %v897 = vunpack.c.h.b16 %v90
    %v898 = vunpack.c.l.b16 %v91
    %v899 = vunpack.c.h.b16 %v91
    %v900 = vunpack.c.l.b16 %v92
    %v901 = vunpack.c.h.b16 %v92
    %v902 = vunpack.c.l.b16 %v93
    %v903 = vunpack.c.h.b16 %v93
    %v904 = vunpack.c.l.b16 %v94
    %v905 = vunpack.c.h.b16 %v94
    %v906 = vunpack.c.l.b16 %v95
    %v907 = vunpack.c.h.b16 %v95
    %v908 = vunpack.c.l.b16 %v96
    %v909 = vunpack.c.h.b16 %v96
    %v910 = vunpack.c.l.b16 %v97
    %v911 = vunpack.c.h.b16 %v97
    %v912 = vunpack.c.l.b16 %v98
    %v913 = vunpack.c.h.b16 %v98
    %v914 = vunpack.c.l.b16 %v99
    %v915 = vunpack.c.h.b16 %v99
    %v916 = vunpack.c.l.b16 %v100
    %v917 = vunpack.c.h.b16 %v100
    %v918 = vunpack.c.l.b16 %v101
    %v919 = vunpack.c.h.b16 %v101
    %v920 = vunpack.c.l.b16 %v102
    %v921 = vunpack.c.h.b16 %v102
    %v922 = vunpack.c.l.b16 %v103
    %v923 = vunpack.c.h.b16 %v103
    %v924 = vunpack.c.l.b16 %v104
    %v925 = vunpack.c.h.b16 %v104
    %v926 = vunpack.c.l.b16 %v105
    %v927 = vunpack.c.h.b16 %v105
    %v928 = vunpack.c.l.b16 %v106
    %v929 = vunpack.c.h.b16 %v106
    %v930 = vunpack.c.l.b16 %v107
    %v931 = vunpack.c.h.b16 %v107
    %v932 = vunpack.c.l.b16 %v108
    %v933 = vunpack.c.h.b16 %v108
    %v934 = vunpack.c.l.b16 %v109
    %v935 = vunpack.c.h.b16 %v109
    %v936 = vunpack.c.l.b16 %v110
    %v937 = vunpack.c.h.b16 %v110
    %v938 = vunpack.c.l.b16 %v111
    %v939 = vunpack.c.h.b16 %v111
    %v940 = vunpack.c.l.b16 %v112
    %v941 = vunpack.c.h.b16 %v112
    %v942 = vunpack.c.l.b16 %v113
    %v943 = vunpack.c.h.b16 %v113
    %v944 = vunpack.c.l.b16 %v114
    %v945 = vunpack.c.h.b16 %v114
    %v946 = vunpack.c.l.b16 %v115
    %v947 = vunpack.c.h.b16 %v115
    %v948 = vunpack.c.l.b16 %v116
    %v949 = vunpack.c.h.b16 %v116
    %v950 = vunpack.c.l.b16 %v117
    %v951 = vunpack.c.h.b16 %v117
    %v952 = vunpack.c.l.b16 %v118
    %v953 = vunpack.c.h.b16 %v118
    %v954 = vunpack.c.l.b16 %v119
    %v955 = vunpack.c.h.b16 %v119
    %v956 = vunpack.c.l.b16 %v120
    %v957 = vunpack.c.h.b16 %v120
    %v958 = vunpack.c.l.b16 %v121
    %v959 = vunpack.c.h.b16 %v121
    %v960 = vunpack.c.l.b16 %v122
    %v961 = vunpack.c.h.b16 %v122
    %v962 = vunpack.c.l.b16 %v123
    %v963 = vunpack.c.h.b16 %v123
    %v964 = vunpack.c.l.b16 %v124
    %v965 = vunpack.c.h.b16 %v124
    %v966 = vunpack.c.l.b16 %v125
    %v967 = vunpack.c.h.b16 %v125
    %v968 = vunpack.c.l.b16 %v126
    %v969 = vunpack.c.h.b16 %v126
    %v970 = vunpack.c.l.b16 %v127
    %v971 = vunpack.c.h.b16 %v127
    %v972 = vunpack.c.l.b16 %v128
    %v973 = vunpack.c.h.b16 %v128
    %v974 = vunpack.c.l.b16 %v129
    %v975 = vunpack.c.h.b16 %v129
    %v976 = vunpack.c.l.b16 %v130
    %v977 = vunpack.c.h.b16 %v130
    %v978 = vunpack.c.l.b16 %v131
    %v979 = vunpack.c.h.b16 %v131
    %v980 = vunpack.c.l.b16 %v132
    %v981 = vunpack.c.h.b16 %v132
    %v982 = vunpack.c.l.b16 %v133
    %v983 = vunpack.c.h.b16 %v133
    %v984 = vunpack.c.l.b16 %v134
    %v985 = vunpack.c.h.b16 %v134
    %v986 = vunpack.c.l.b16 %v135
    %v987 = vunpack.c.h.b16 %v135
    %v988 = vunpack.c.l.b16 %v136
    %v989 = vunpack.c.h.b16 %v136
    %v990 = vunpack.c.l.b16 %v137
    %v991 = vunpack.c.h.b16 %v137
    %v992 = vunpack.c.l.b16 %v138
    %v993 = vunpack.c.h.b16 %v138
    %v994 = vunpack.c.l.b16 %v139
    %v995 = vunpack.c.h.b16 %v139
    %v996 = vunpack.c.l.b16 %v140
    %v997 = vunpack.c.h.b16 %v140
    %v998 = vunpack.c.l.b16 %v141
    %v999 = vunpack.c.h.b16 %v141
    %v1000 = vunpack.c.l.b16 %v142
    %v1001 = vunpack.c.h.b16 %v142
    %v1002 = vunpack.c.l.b16 %v143
    %v1003 = vunpack.c.h.b16 %v143
    %v1004 = vunpack.c.l.b16 %v144
    %v1005 = vunpack.c.h.b16 %v144
    %v1006 = vunpack.c.l.b16 %v145
    %v1007 = vunpack.c.h.b16 %v145
    %v1008 = vunpack.c.l.b16 %v146
    %v1009 = vunpack.c.h.b16 %v146
    %v1010 = vunpack.c.l.b16 %v147
    %v1011 = vunpack.c.h.b16 %v147
    %v1012 = vunpack.c.l.b16 %v148
    %v1013 = vunpack.c.h.b16 %v148
    %v1014 = vunpack.c.l.b16 %v149
    %v1015 = vunpack.c.h.b16 %v149
    %v1016 = vunpack.c.l.b16 %v150
    %v1017 = vunpack.c.h.b16 %v150
    %v1018 = vunpack.c.l.b16 %v151
    %v1019 = vunpack.c.h.b16 %v151
    %v1020 = vunpack.c.l.b16 %v152
    %v1021 = vunpack.c.h.b16 %v152
    %v1022 = vunpack.c.l.b16 %v153
    %v1023 = vunpack.c.h.b16 %v153
    %v1024 = vunpack.c.l.b16 %v154
    %v1025 = vunpack.c.h.b16 %v154
    %v1026 = vunpack.c.l.b16 %v155
    %v1027 = vunpack.c.h.b16 %v155
    %v1028 = vunpack.c.l.b16 %v156
    %v1029 = vunpack.c.h.b16 %v156
    %v1030 = vunpack.c.l.b16 %v157
    %v1031 = vunpack.c.h.b16 %v157
    %v1032 = vunpack.c.l.b16 %v158
    %v1033 = vunpack.c.h.b16 %v158
    %v1034 = vunpack.c.l.b16 %v159
    %v1035 = vunpack.c.h.b16 %v159
    %v1036 = vunpack.c.l.b16 %v160
    %v1037 = vunpack.c.h.b16 %v160
    %v1038 = vunpack.c.l.b16 %v161
    %v1039 = vunpack.c.h.b16 %v161
    %v1040 = vunpack.c.l.b16 %v162
    %v1041 = vunpack.c.h.b16 %v162
    %v1042 = vunpack.c.l.b16 %v163
    %v1043 = vunpack.c.h.b16 %v163
    %v1044 = vunpack.c.l.b16 %v164
    %v1045 = vunpack.c.h.b16 %v164
    %v1046 = vunpack.c.l.b16 %v165
    %v1047 = vunpack.c.h.b16 %v165
    %v1048 = vunpack.c.l.b16 %v166
    %v1049 = vunpack.c.h.b16 %v166
    %v1050 = vunpack.c.l.b16 %v167
    %v1051 = vunpack.c.h.b16 %v167
    %v1052 = vunpack.c.l.b16 %v168
    %v1053 = vunpack.c.h.b16 %v168
    %v1054 = vunpack.c.l.b16 %v169
    %v1055 = vunpack.c.h.b16 %v169
    %v1056 = vunpack.c.l.b16 %v170
    %v1057 = vunpack.c.h.b16 %v170
    %v1058 = vunpack.c.l.b16 %v171
    %v1059 = vunpack.c.h.b16 %v171
    %v1060 = vunpack.c.l.b16 %v172
    %v1061 = vunpack.c.h.b16 %v172
    %v1062 = vunpack.c.l.b16 %v173
    %v1063 = vunpack.c.h.b16 %v173
    %v1064 = vunpack.c.l.b16 %v174
    %v1065 = vunpack.c.h.b16 %v174
    %v1066 = vunpack.c.l.b16 %v175
    %v1067 = vunpack.c.h.b16 %v175
    %v1068 = vunpack.c.l.b16 %v176
    %v1069 = vunpack.c.h.b16 %v176
    %v1070 = vunpack.c.l.b16 %v177
    %v1071 = vunpack.c.h.b16 %v177
    %v1072 = vunpack.c.l.b16 %v178
    %v1073 = vunpack.c.h.b16 %v178
    %v1074 = vunpack.c.l.b16 %v179
    %v1075 = vunpack.c.h.b16 %v179
    %v1076 = vunpack.c.l.b16 %v180
    %v1077 = vunpack.c.h.b16 %v180
    %v1078 = vunpack.c.l.b16 %v181
    %v1079 = vunpack.c.h.b16 %v181
    %v1080 = vunpack.c.l.b16 %v182
    %v1081 = vunpack.c.h.b16 %v182
    %v1082 = vunpack.c.l.b16 %v183
    %v1083 = vunpack.c.h.b16 %v183
    %v1084 = vunpack.c.l.b16 %v184
    %v1085 = vunpack.c.h.b16 %v184
    %v1086 = vunpack.c.l.b16 %v185
    %v1087 = vunpack.c.h.b16 %v185
    %v1088 = vunpack.c.l.b16 %v186
    %v1089 = vunpack.c.h.b16 %v186
    %v1090 = vunpack.c.l.b16 %v187
    %v1091 = vunpack.c.h.b16 %v187
    %v1092 = vunpack.c.l.b16 %v188
    %v1093 = vunpack.c.h.b16 %v188
    %v1094 = vunpack.c.l.b16 %v189
    %v1095 = vunpack.c.h.b16 %v189
    %v1096 = vunpack.c.l.b16 %v190
    %v1097 = vunpack.c.h.b16 %v190
    %v1098 = vunpack.c.l.b16 %v191
    %v1099 = vunpack.c.h.b16 %v191
    %v1100 = vunpack.c.l.b16 %v192
    %v1101 = vunpack.c.h.b16 %v192
    %v1102 = vunpack.c.l.b16 %v193
    %v1103 = vunpack.c.h.b16 %v193
    %v1104 = vunpack.c.l.b16 %v194
    %v1105 = vunpack.c.h.b16 %v194
    %v1106 = vunpack.c.l.b16 %v195
    %v1107 = vunpack.c.h.b16 %v195
    %v1108 = vunpack.c.l.b16 %v196
    %v1109 = vunpack.c.h.b16 %v196
    %v1110 = vunpack.c.l.b16 %v197
    %v1111 = vunpack.c.h.b16 %v197
    %v1112 = vunpack.c.l.b16 %v198
    %v1113 = vunpack.c.h.b16 %v198
    %v1114 = vunpack.c.l.b16 %v199
    %v1115 = vunpack.c.h.b16 %v199
    %v1116 = vunpack.c.l.b16 %v200
    %v1117 = vunpack.c.h.b16 %v200
    %v1118 = vunpack.c.l.b16 %v201
    %v1119 = vunpack.c.h.b16 %v201
    %v1120 = vpack.c.b16 %v880, %v864
    %v1121 = vpack.c.b16 %v881, %v865
    %v1122 = vpack.c.b16 %v882, %v866
    %v1123 = vpack.c.b16 %v883, %v867
    %v1124 = vpack.c.b16 %v884, %v868
    %v1125 = vpack.c.b16 %v885, %v869
    %v1126 = vpack.c.b16 %v886, %v870
    %v1127 = vpack.c.b16 %v887, %v871
    %v1128 = vpack.c.b16 %v888, %v872
    %v1129 = vpack.c.b16 %v889, %v873
    %v1130 = vpack.c.b16 %v890, %v874
    %v1131 = vpack.c.b16 %v891, %v875
    %v1132 = vpack.c.b16 %v892, %v876
    %v1133 = vpack.c.b16 %v893, %v877
    %v1134 = vpack.c.b16 %v894, %v878
    %v1135 = vpack.c.b16 %v895, %v879
    %v1136 = vpack.c.b16 %v912, %v896
    %v1137 = vpack.c.b16 %v913, %v897
    %v1138 = vpack.c.b16 %v914, %v898
    %v1139 = vpack.c.b16 %v915, %v899
    %v1140 = vpack.c.b16 %v916, %v900
    %v1141 = vpack.c.b16 %v917, %v901
    %v1142 = vpack.c.b16 %v918, %v902
    %v1143 = vpack.c.b16 %v919, %v903
    %v1144 = vpack.c.b16 %v920, %v904
    %v1145 = vpack.c.b16 %v921, %v905
    %v1146 = vpack.c.b16 %v922, %v906
    %v1147 = vpack.c.b16 %v923, %v907
    %v1148 = vpack.c.b16 %v924, %v908
    %v1149 = vpack.c.b16 %v925, %v909
    %v1150 = vpack.c.b16 %v926, %v910
    %v1151 = vpack.c.b16 %v927, %v911
    %v1152 = vpack.c.b16 %v944, %v928
    %v1153 = vpack.c.b16 %v945, %v929
    %v1154 = vpack.c.b16 %v946, %v930
    %v1155 = vpack.c.b16 %v947, %v931
    %v1156 = vpack.c.b16 %v948, %v932
    %v1157 = vpack.c.b16 %v949, %v933
    %v1158 = vpack.c.b16 %v950, %v934
    %v1159 = vpack.c.b16 %v951, %v935
    %v1160 = vpack.c.b16 %v952, %v936
    %v1161 = vpack.c.b16 %v953, %v937
    %v1162 = vpack.c.b16 %v954, %v938
    %v1163 = vpack.c.b16 %v955, %v939
    %v1164 = vpack.c.b16 %v956, %v940
    %v1165 = vpack.c.b16 %v957, %v941
    %v1166 = vpack.c.b16 %v958, %v942
    %v1167 = vpack.c.b16 %v959, %v943
    %v1168 = vpack.c.b16 %v976, %v960
    %v1169 = vpack.c.b16 %v977, %v961
    %v1170 = vpack.c.b16 %v978, %v962
    %v1171 = vpack.c.b16 %v979, %v963
    %v1172 = vpack.c.b16 %v980, %v964
    %v1173 = vpack.c.b16 %v981, %v965
    %v1174 = vpack.c.b16 %v982, %v966
    %v1175 = vpack.c.b16 %v983, %v967
    %v1176 = vpack.c.b16 %v984, %v968
    %v1177 = vpack.c.b16 %v985, %v969
    %v1178 = vpack.c.b16 %v986, %v970
    %v1179 = vpack.c.b16 %v987, %v971
    %v1180 = vpack.c.b16 %v988, %v972
    %v1181 = vpack.c.b16 %v989, %v973
    %v1182 = vpack.c.b16 %v990, %v974
    %v1183 = vpack.c.b16 %v991, %v975
    %v1184 = vpack.c.b16 %v1008, %v992
    %v1185 = vpack.c.b16 %v1009, %v993
    %v1186 = vpack.c.b16 %v1010, %v994
    %v1187 = vpack.c.b16 %v1011, %v995
    %v1188 = vpack.c.b16 %v1012, %v996
    %v1189 = vpack.c.b16 %v1013, %v997
    %v1190 = vpack.c.b16 %v1014, %v998
    %v1191 = vpack.c.b16 %v1015, %v999
    %v1192 = vpack.c.b16 %v1016, %v1000
    %v1193 = vpack.c.b16 %v1017, %v1001
    %v1194 = vpack.c.b16 %v1018, %v1002
    %v1195 = vpack.c.b16 %v1019, %v1003
    %v1196 = vpack.c.b16 %v1020, %v1004
    %v1197 = vpack.c.b16 %v1021, %v1005
    %v1198 = vpack.c.b16 %v1022, %v1006
    %v1199 = vpack.c.b16 %v1023, %v1007
    %v1200 = vpack.c.b16 %v1040, %v1024
    %v1201 = vpack.c.b16 %v1041, %v1025
    %v1202 = vpack.c.b16 %v1042, %v1026
    %v1203 = vpack.c.b16 %v1043, %v1027
    %v1204 = vpack.c.b16 %v1044, %v1028
    %v1205 = vpack.c.b16 %v1045, %v1029
    %v1206 = vpack.c.b16 %v1046, %v1030
    %v1207 = vpack.c.b16 %v1047, %v1031
    %v1208 = vpack.c.b16 %v1048, %v1032
    %v1209 = vpack.c.b16 %v1049, %v1033
    %v1210 = vpack.c.b16 %v1050, %v1034
    %v1211 = vpack.c.b16 %v1051, %v1035
    %v1212 = vpack.c.b16 %v1052, %v1036
    %v1213 = vpack.c.b16 %v1053, %v1037
    %v1214 = vpack.c.b16 %v1054, %v1038
    %v1215 = vpack.c.b16 %v1055, %v1039
    %v1216 = vpack.c.b16 %v1072, %v1056
    %v1217 = vpack.c.b16 %v1073, %v1057
    %v1218 = vpack.c.b16 %v1074, %v1058
    %v1219 = vpack.c.b16 %v1075, %v1059
    %v1220 = vpack.c.b16 %v1076, %v1060
    %v1221 = vpack.c.b16 %v1077, %v1061
    %v1222 = vpack.c.b16 %v1078, %v1062
    %v1223 = vpack.c.b16 %v1079, %v1063
    %v1224 = vpack.c.b16 %v1080, %v1064
    %v1225 = vpack.c.b16 %v1081, %v1065
    %v1226 = vpack.c.b16 %v1082, %v1066
    %v1227 = vpack.c.b16 %v1083, %v1067
    %v1228 = vpack.c.b16 %v1084, %v1068
    %v1229 = vpack.c.b16 %v1085, %v1069
    %v1230 = vpack.c.b16 %v1086, %v1070
    %v1231 = vpack.c.b16 %v1087, %v1071
    %v1232 = vpack.c.b16 %v1104, %v1088
    %v1233 = vpack.c.b16 %v1105, %v1089
    %v1234 = vpack.c.b16 %v1106, %v1090
    %v1235 = vpack.c.b16 %v1107, %v1091
    %v1236 = vpack.c.b16 %v1108, %v1092
    %v1237 = vpack.c.b16 %v1109, %v1093
    %v1238 = vpack.c.b16 %v1110, %v1094
    %v1239 = vpack.c.b16 %v1111, %v1095
    %v1240 = vpack.c.b16 %v1112, %v1096
    %v1241 = vpack.c.b16 %v1113, %v1097
    %v1242 = vpack.c.b16 %v1114, %v1098
    %v1243 = vpack.c.b16 %v1115, %v1099
    %v1244 = vpack.c.b16 %v1116, %v1100
    %v1245 = vpack.c.b16 %v1117, %v1101
    %v1246 = vpack.c.b16 %v1118, %v1102
    %v1247 = vpack.c.b16 %v1119, %v1103
    %v1888 = vunpack.c.l.b16 %v202
    %v1889 = vunpack.c.h.b16 %v202
    %v1890 = vunpack.c.l.b16 %v203
    %v1891 = vunpack.c.h.b16 %v203
    %v1892 = vunpack.c.l.b16 %v204
    %v1893 = vunpack.c.h.b16 %v204
    %v1894 = vunpack.c.l.b16 %v205
    %v1895 = vunpack.c.h.b16 %v205
    %v1896 = vunpack.c.l.b16 %v206
    %v1897 = vunpack.c.h.b16 %v206
    %v1898 = vunpack.c.l.b16 %v207
    %v1899 = vunpack.c.h.b16 %v207
    %v1900 = vunpack.c.l.b16 %v208
    %v1901 = vunpack.c.h.b16 %v208
    %v1902 = vunpack.c.l.b16 %v209
    %v1903 = vunpack.c.h.b16 %v209
    %v1904 = vunpack.c.l.b16 %v210
    %v1905 = vunpack.c.h.b16 %v210
    %v1906 = vunpack.c.l.b16 %v211
    %v1907 = vunpack.c.h.b16 %v211
    %v1908 = vunpack.c.l.b16 %v212
    %v1909 = vunpack.c.h.b16 %v212
    %v1910 = vunpack.c.l.b16 %v213
    %v1911 = vunpack.c.h.b16 %v213
    %v1912 = vunpack.c.l.b16 %v214
    %v1913 = vunpack.c.h.b16 %v214
    %v1914 = vunpack.c.l.b16 %v215
    %v1915 = vunpack.c.h.b16 %v215
    %v1916 = vunpack.c.l.b16 %v216
    %v1917 = vunpack.c.h.b16 %v216
    %v1918 = vunpack.c.l.b16 %v217
    %v1919 = vunpack.c.h.b16 %v217
    %v1920 = vunpack.c.l.b16 %v218
    %v1921 = vunpack.c.h.b16 %v218
    %v1922 = vunpack.c.l.b16 %v219
    %v1923 = vunpack.c.h.b16 %v219
    %v1924 = vunpack.c.l.b16 %v220
    %v1925 = vunpack.c.h.b16 %v220
    %v1926 = vunpack.c.l.b16 %v221
    %v1927 = vunpack.c.h.b16 %v221
    %v1928 = vunpack.c.l.b16 %v222
    %v1929 = vunpack.c.h.b16 %v222
    %v1930 = vunpack.c.l.b16 %v223
    %v1931 = vunpack.c.h.b16 %v223
    %v1932 = vunpack.c.l.b16 %v224
    %v1933 = vunpack.c.h.b16 %v224
    %v1934 = vunpack.c.l.b16 %v225
    %v1935 = vunpack.c.h.b16 %v225
    %v1936 = vunpack.c.l.b16 %v226
    %v1937 = vunpack.c.h.b16 %v226
    %v1938 = vunpack.c.l.b16 %v227
    %v1939 = vunpack.c.h.b16 %v227
    %v1940 = vunpack.c.l.b16 %v228
    %v1941 = vunpack.c.h.b16 %v228
    %v1942 = vunpack.c.l.b16 %v229
    %v1943 = vunpack.c.h.b16 %v229
    %v1944 = vunpack.c.l.b16 %v230
    %v1945 = vunpack.c.h.b16 %v230
    %v1946 = vunpack.c.l.b16 %v231
    %v1947 = vunpack.c.h.b16 %v231
    %v1948 = vunpack.c.l.b16 %v232
    %v1949 = vunpack.c.h.b16 %v232
    %v1950 = vunpack.c.l.b16 %v233
    %v1951 = vunpack.c.h.b16 %v233
    %v1952 = vunpack.c.l.b16 %v234
    %v1953 = vunpack.c.h.b16 %v234
    %v1954 = vunpack.c.l.b16 %v235
    %v1955 = vunpack.c.h.b16 %v235
    %v1956 = vunpack.c.l.b16 %v236
    %v1957 = vunpack.c.h.b16 %v236
    %v1958 = vunpack.c.l.b16 %v237
    %v1959 = vunpack.c.h.b16 %v237
    %v1960 = vunpack.c.l.b16 %v238
    %v1961 = vunpack.c.h.b16 %v238
    %v1962 = vunpack.c.l.b16 %v239
    %v1963 = vunpack.c.h.b16 %v239
    %v1964 = vunpack.c.l.b16 %v240
    %v1965 = vunpack.c.h.b16 %v240
    %v1966 = vunpack.c.l.b16 %v241
    %v1967 = vunpack.c.h.b16 %v241
    %v1968 = vunpack.c.l.b16 %v242
    %v1969 = vunpack.c.h.b16 %v242
    %v1970 = vunpack.c.l.b16 %v243
    %v1971 = vunpack.c.h.b16 %v243
    %v1972 = vunpack.c.l.b16 %v244
    %v1973 = vunpack.c.h.b16 %v244
    %v1974 = vunpack.c.l.b16 %v245
    %v1975 = vunpack.c.h.b16 %v245
    %v1976 = vunpack.c.l.b16 %v246
    %v1977 = vunpack.c.h.b16 %v246
    %v1978 = vunpack.c.l.b16 %v247
    %v1979 = vunpack.c.h.b16 %v247
    %v1980 = vunpack.c.l.b16 %v248
    %v1981 = vunpack.c.h.b16 %v248
    %v1982 = vunpack.c.l.b16 %v249
    %v1983 = vunpack.c.h.b16 %v249
    %v1984 = vunpack.c.l.b16 %v250
    %v1985 = vunpack.c.h.b16 %v250
    %v1986 = vunpack.c.l.b16 %v251
    %v1987 = vunpack.c.h.b16 %v251
    %v1988 = vunpack.c.l.b16 %v252
    %v1989 = vunpack.c.h.b16 %v252
    %v1990 = vunpack.c.l.b16 %v253
    %v1991 = vunpack.c.h.b16 %v253
    %v1992 = vunpack.c.l.b16 %v254
    %v1993 = vunpack.c.h.b16 %v254
    %v1994 = vunpack.c.l.b16 %v255
    %v1995 = vunpack.c.h.b16 %v255
    %v1996 = vunpack.c.l.b16 %v256
    %v1997 = vunpack.c.h.b16 %v256
    %v1998 = vunpack.c.l.b16 %v257
    %v1999 = vunpack.c.h.b16 %v257
    %v2000 = vunpack.c.l.b16 %v258
    %v2001 = vunpack.c.h.b16 %v258
    %v2002 = vunpack.c.l.b16 %v259
    %v2003 = vunpack.c.h.b16 %v259
    %v2004 = vunpack.c.l.b16 %v260
    %v2005 = vunpack.c.h.b16 %v260
    %v2006 = vunpack.c.l.b16 %v261
    %v2007 = vunpack.c.h.b16 %v261
    %v2008 = vunpack.c.l.b16 %v262
    %v2009 = vunpack.c.h.b16 %v262
    %v2010 = vunpack.c.l.b16 %v263
    %v2011 = vunpack.c.h.b16 %v263
    %v2012 = vunpack.c.l.b16 %v264
    %v2013 = vunpack.c.h.b16 %v264
    %v2014 = vunpack.c.l.b16 %v265
    %v2015 = vunpack.c.h.b16 %v265
    %v2016 = vunpack.c.l.b16 %v266
    %v2017 = vunpack.c.h.b16 %v266
    %v2018 = vunpack.c.l.b16 %v267
    %v2019 = vunpack.c.h.b16 %v267
    %v2020 = vunpack.c.l.b16 %v268
    %v2021 = vunpack.c.h.b16 %v268
    %v2022 = vunpack.c.l.b16 %v269
    %v2023 = vunpack.c.h.b16 %v269
    %v2024 = vunpack.c.l.b16 %v270
    %v2025 = vunpack.c.h.b16 %v270
    %v2026 = vunpack.c.l.b16 %v271
    %v2027 = vunpack.c.h.b16 %v271
    %v2028 = vunpack.c.l.b16 %v272
    %v2029 = vunpack.c.h.b16 %v272
    %v2030 = vunpack.c.l.b16 %v273
    %v2031 = vunpack.c.h.b16 %v273
    %v2032 = vunpack.c.l.b16 %v274
    %v2033 = vunpack.c.h.b16 %v274
    %v2034 = vunpack.c.l.b16 %v275
    %v2035 = vunpack.c.h.b16 %v275
    %v2036 = vunpack.c.l.b16 %v276
    %v2037 = vunpack.c.h.b16 %v276
    %v2038 = vunpack.c.l.b16 %v277
    %v2039 = vunpack.c.h.b16 %v277
    %v2040 = vunpack.c.l.b16 %v278
    %v2041 = vunpack.c.h.b16 %v278
    %v2042 = vunpack.c.l.b16 %v279
    %v2043 = vunpack.c.h.b16 %v279
    %v2044 = vunpack.c.l.b16 %v280
    %v2045 = vunpack.c.h.b16 %v280
    %v2046 = vunpack.c.l.b16 %v281
    %v2047 = vunpack.c.h.b16 %v281
    %v2048 = vunpack.c.l.b16 %v282
    %v2049 = vunpack.c.h.b16 %v282
    %v2050 = vunpack.c.l.b16 %v283
    %v2051 = vunpack.c.h.b16 %v283
    %v2052 = vunpack.c.l.b16 %v284
    %v2053 = vunpack.c.h.b16 %v284
    %v2054 = vunpack.c.l.b16 %v285
    %v2055 = vunpack.c.h.b16 %v285
    %v2056 = vunpack.c.l.b16 %v286
    %v2057 = vunpack.c.h.b16 %v286
    %v2058 = vunpack.c.l.b16 %v287
    %v2059 = vunpack.c.h.b16 %v287
    %v2060 = vunpack.c.l.b16 %v288
    %v2061 = vunpack.c.h.b16 %v288
    %v2062 = vunpack.c.l.b16 %v289
    %v2063 = vunpack.c.h.b16 %v289
    %v2064 = vunpack.c.l.b16 %v290
    %v2065 = vunpack.c.h.b16 %v290
    %v2066 = vunpack.c.l.b16 %v291
    %v2067 = vunpack.c.h.b16 %v291
    %v2068 = vunpack.c.l.b16 %v292
    %v2069 = vunpack.c.h.b16 %v292
    %v2070 = vunpack.c.l.b16 %v293
    %v2071 = vunpack.c.h.b16 %v293
    %v2072 = vunpack.c.l.b16 %v294
    %v2073 = vunpack.c.h.b16 %v294
    %v2074 = vunpack.c.l.b16 %v295
    %v2075 = vunpack.c.h.b16 %v295
    %v2076 = vunpack.c.l.b16 %v296
    %v2077 = vunpack.c.h.b16 %v296
    %v2078 = vunpack.c.l.b16 %v297
    %v2079 = vunpack.c.h.b16 %v297
    %v2080 = vunpack.c.l.b16 %v298
    %v2081 = vunpack.c.h.b16 %v298
    %v2082 = vunpack.c.l.b16 %v299
    %v2083 = vunpack.c.h.b16 %v299
    %v2084 = vunpack.c.l.b16 %v300
    %v2085 = vunpack.c.h.b16 %v300
    %v2086 = vunpack.c.l.b16 %v301
    %v2087 = vunpack.c.h.b16 %v301
    %v2088 = vunpack.c.l.b16 %v302
    %v2089 = vunpack.c.h.b16 %v302
    %v2090 = vunpack.c.l.b16 %v303
    %v2091 = vunpack.c.h.b16 %v303
    %v2092 = vunpack.c.l.b16 %v304
    %v2093 = vunpack.c.h.b16 %v304
    %v2094 = vunpack.c.l.b16 %v305
    %v2095 = vunpack.c.h.b16 %v305
    %v2096 = vunpack.c.l.b16 %v306
    %v2097 = vunpack.c.h.b16 %v306
    %v2098 = vunpack.c.l.b16 %v307
    %v2099 = vunpack.c.h.b16 %v307
    %v2100 = vunpack.c.l.b16 %v308
    %v2101 = vunpack.c.h.b16 %v308
    %v2102 = vunpack.c.l.b16 %v309
    %v2103 = vunpack.c.h.b16 %v309
    %v2104 = vunpack.c.l.b16 %v310
    %v2105 = vunpack.c.h.b16 %v310
    %v2106 = vunpack.c.l.b16 %v311
    %v2107 = vunpack.c.h.b16 %v311
    %v2108 = vunpack.c.l.b16 %v312
    %v2109 = vunpack.c.h.b16 %v312
    %v2110 = vunpack.c.l.b16 %v313
    %v2111 = vunpack.c.h.b16 %v313
    %v2112 = vunpack.c.l.b16 %v314
    %v2113 = vunpack.c.h.b16 %v314
    %v2114 = vunpack.c.l.b16 %v315
    %v2115 = vunpack.c.h.b16 %v315
    %v2116 = vunpack.c.l.b16 %v316
    %v2117 = vunpack.c.h.b16 %v316
    %v2118 = vunpack.c.l.b16 %v317
    %v2119 = vunpack.c.h.b16 %v317
    %v2120 = vunpack.c.l.b16 %v318
    %v2121 = vunpack.c.h.b16 %v318
    %v2122 = vunpack.c.l.b16 %v319
    %v2123 = vunpack.c.h.b16 %v319
    %v2124 = vunpack.c.l.b16 %v320
    %v2125 = vunpack.c.h.b16 %v320
    %v2126 = vunpack.c.l.b16 %v321
    %v2127 = vunpack.c.h.b16 %v321
    %v2128 = vunpack.c.l.b16 %v322
    %v2129 = vunpack.c.h.b16 %v322
    %v2130 = vunpack.c.l.b16 %v323
    %v2131 = vunpack.c.h.b16 %v323
    %v2132 = vunpack.c.l.b16 %v324
    %v2133 = vunpack.c.h.b16 %v324
    %v2134 = vunpack.c.l.b16 %v325
    %v2135 = vunpack.c.h.b16 %v325
    %v2136 = vunpack.c.l.b16 %v326
    %v2137 = vunpack.c.h.b16 %v326
    %v2138 = vunpack.c.l.b16 %v327
    %v2139 = vunpack.c.h.b16 %v327
    %v2140 = vunpack.c.l.b16 %v328
    %v2141 = vunpack.c.h.b16 %v328
    %v2142 = vunpack.c.l.b16 %v329
    %v2143 = vunpack.c.h.b16 %v329
    %v2144 = vunpack.c.l.b16 %v330
    %v2145 = vunpack.c.h.b16 %v330
    %v2146 = vunpack.c.l.b16 %v331
    %v2147 = vunpack.c.h.b16 %v331
    %v2148 = vunpack.c.l.b16 %v332
    %v2149 = vunpack.c.h.b16 %v332
    %v2150 = vunpack.c.l.b16 %v333
    %v2151 = vunpack.c.h.b16 %v333
    %v2152 = vunpack.c.l.b16 %v334
    %v2153 = vunpack.c.h.b16 %v334
    %v2154 = vunpack.c.l.b16 %v335
    %v2155 = vunpack.c.h.b16 %v335
    %v2156 = vunpack.c.l.b16 %v336
    %v2157 = vunpack.c.h.b16 %v336
    %v2158 = vunpack.c.l.b16 %v337
    %v2159 = vunpack.c.h.b16 %v337
    %v2160 = vunpack.c.l.b16 %v338
    %v2161 = vunpack.c.h.b16 %v338
    %v2162 = vunpack.c.l.b16 %v339
    %v2163 = vunpack.c.h.b16 %v339
    %v2164 = vunpack.c.l.b16 %v340
    %v2165 = vunpack.c.h.b16 %v340
    %v2166 = vunpack.c.l.b16 %v341
    %v2167 = vunpack.c.h.b16 %v341
    %v2168 = vunpack.c.l.b16 %v342
    %v2169 = vunpack.c.h.b16 %v342
    %v2170 = vunpack.c.l.b16 %v343
    %v2171 = vunpack.c.h.b16 %v343
    %v2172 = vunpack.c.l.b16 %v344
    %v2173 = vunpack.c.h.b16 %v344
    %v2174 = vunpack.c.l.b16 %v345
    %v2175 = vunpack.c.h.b16 %v345
    %v2176 = vunpack.c.l.b16 %v346
    %v2177 = vunpack.c.h.b16 %v346
    %v2178 = vunpack.c.l.b16 %v347
    %v2179 = vunpack.c.h.b16 %v347
    %v2180 = vunpack.c.l.b16 %v348
    %v2181 = vunpack.c.h.b16 %v348
    %v2182 = vunpack.c.l.b16 %v349
    %v2183 = vunpack.c.h.b16 %v349
    %v2184 = vunpack.c.l.b16 %v350
    %v2185 = vunpack.c.h.b16 %v350
    %v2186 = vunpack.c.l.b16 %v351
    %v2187 = vunpack.c.h.b16 %v351
    %v2188 = vunpack.c.l.b16 %v352
    %v2189 = vunpack.c.h.b16 %v352
    %v2190 = vunpack.c.l.b16 %v353
    %v2191 = vunpack.c.h.b16 %v353
    %v2192 = vunpack.c.l.b16 %v354
    %v2193 = vunpack.c.h.b16 %v354
    %v2194 = vunpack.c.l.b16 %v355
    %v2195 = vunpack.c.h.b16 %v355
    %v2196 = vunpack.c.l.b16 %v356
    %v2197 = vunpack.c.h.b16 %v356
    %v2198 = vunpack.c.l.b16 %v357
    %v2199 = vunpack.c.h.b16 %v357
    %v2200 = vunpack.c.l.b16 %v358
    %v2201 = vunpack.c.h.b16 %v358
    %v2202 = vunpack.c.l.b16 %v359
    %v2203 = vunpack.c.h.b16 %v359
    %v2204 = vunpack.c.l.b16 %v360
    %v2205 = vunpack.c.h.b16 %v360
    %v2206 = vunpack.c.l.b16 %v361
    %v2207 = vunpack.c.h.b16 %v361
    %v2208 = vunpack.c.l.b16 %v362
    %v2209 = vunpack.c.h.b16 %v362
    %v2210 = vunpack.c.l.b16 %v363
    %v2211 = vunpack.c.h.b16 %v363
    %v2212 = vunpack.c.l.b16 %v364
    %v2213 = vunpack.c.h.b16 %v364
    %v2214 = vunpack.c.l.b16 %v365
    %v2215 = vunpack.c.h.b16 %v365
    %v2216 = vunpack.c.l.b16 %v366
    %v2217 = vunpack.c.h.b16 %v366
    %v2218 = vunpack.c.l.b16 %v367
    %v2219 = vunpack.c.h.b16 %v367
    %v2220 = vunpack.c.l.b16 %v368
    %v2221 = vunpack.c.h.b16 %v368
    %v2222 = vunpack.c.l.b16 %v369
    %v2223 = vunpack.c.h.b16 %v369
    %v2224 = vunpack.c.l.b16 %v370
    %v2225 = vunpack.c.h.b16 %v370
    %v2226 = vunpack.c.l.b16 %v371
    %v2227 = vunpack.c.h.b16 %v371
    %v2228 = vunpack.c.l.b16 %v372
    %v2229 = vunpack.c.h.b16 %v372
    %v2230 = vunpack.c.l.b16 %v373
    %v2231 = vunpack.c.h.b16 %v373
    %v2232 = vunpack.c.l.b16 %v374
    %v2233 = vunpack.c.h.b16 %v374
    %v2234 = vunpack.c.l.b16 %v375
    %v2235 = vunpack.c.h.b16 %v375
    %v2236 = vunpack.c.l.b16 %v376
    %v2237 = vunpack.c.h.b16 %v376
    %v2238 = vunpack.c.l.b16 %v377
    %v2239 = vunpack.c.h.b16 %v377
    %v2240 = vunpack.c.l.b16 %v378
    %v2241 = vunpack.c.h.b16 %v378
    %v2242 = vunpack.c.l.b16 %v379
    %v2243 = vunpack.c.h.b16 %v379
    %v2244 = vunpack.c.l.b16 %v380
    %v2245 = vunpack.c.h.b16 %v380
    %v2246 = vunpack.c.l.b16 %v381
    %v2247 = vunpack.c.h.b16 %v381
    %v2248 = vunpack.c.l.b16 %v382
    %v2249 = vunpack.c.h.b16 %v382
    %v2250 = vunpack.c.l.b16 %v383
    %v2251 = vunpack.c.h.b16 %v383
    %v2252 = vunpack.c.l.b16 %v384
    %v2253 = vunpack.c.h.b16 %v384
    %v2254 = vunpack.c.l.b16 %v385
    %v2255 = vunpack.c.h.b16 %v385
    %v2256 = vunpack.c.l.b16 %v386
    %v2257 = vunpack.c.h.b16 %v386
    %v2258 = vunpack.c.l.b16 %v387
    %v2259 = vunpack.c.h.b16 %v387
    %v2260 = vunpack.c.l.b16 %v388
    %v2261 = vunpack.c.h.b16 %v388
    %v2262 = vunpack.c.l.b16 %v389
    %v2263 = vunpack.c.h.b16 %v389
    %v2264 = vunpack.c.l.b16 %v390
    %v2265 = vunpack.c.h.b16 %v390
    %v2266 = vunpack.c.l.b16 %v391
    %v2267 = vunpack.c.h.b16 %v391
    %v2268 = vunpack.c.l.b16 %v392
    %v2269 = vunpack.c.h.b16 %v392
    %v2270 = vunpack.c.l.b16 %v393
    %v2271 = vunpack.c.h.b16 %v393
    %v2272 = vunpack.c.l.b16 %v394
    %v2273 = vunpack.c.h.b16 %v394
    %v2274 = vunpack.c.l.b16 %v395
    %v2275 = vunpack.c.h.b16 %v395
    %v2276 = vunpack.c.l.b16 %v396
    %v2277 = vunpack.c.h.b16 %v396
    %v2278 = vunpack.c.l.b16 %v397
    %v2279 = vunpack.c.h.b16 %v397
    %v2280 = vunpack.c.l.b16 %v398
    %v2281 = vunpack.c.h.b16 %v398
    %v2282 = vunpack.c.l.b16 %v399
    %v2283 = vunpack.c.h.b16 %v399
    %v2284 = vunpack.c.l.b16 %v400
    %v2285 = vunpack.c.h.b16 %v400
    %v2286 = vunpack.c.l.b16 %v401
    %v2287 = vunpack.c.h.b16 %v401
    %v2288 = vunpack.c.l.b16 %v402
    %v2289 = vunpack.c.h.b16 %v402
    %v2290 = vunpack.c.l.b16 %v403
    %v2291 = vunpack.c.h.b16 %v403
    %v2292 = vunpack.c.l.b16 %v404
    %v2293 = vunpack.c.h.b16 %v404
    %v2294 = vunpack.c.l.b16 %v405
    %v2295 = vunpack.c.h.b16 %v405
    %v2296 = vunpack.c.l.b16 %v406
    %v2297 = vunpack.c.h.b16 %v406
    %v2298 = vunpack.c.l.b16 %v407
    %v2299 = vunpack.c.h.b16 %v407
    %v2300 = vunpack.c.l.b16 %v408
    %v2301 = vunpack.c.h.b16 %v408
    %v2302 = vunpack.c.l.b16 %v409
    %v2303 = vunpack.c.h.b16 %v409
    %v2304 = vunpack.c.l.b16 %v410
    %v2305 = vunpack.c.h.b16 %v410
    %v2306 = vunpack.c.l.b16 %v411
    %v2307 = vunpack.c.h.b16 %v411
    %v2308 = vunpack.c.l.b16 %v412
    %v2309 = vunpack.c.h.b16 %v412
    %v2310 = vunpack.c.l.b16 %v413
    %v2311 = vunpack.c.h.b16 %v413
    %v2312 = vunpack.c.l.b16 %v414
    %v2313 = vunpack.c.h.b16 %v414
    %v2314 = vunpack.c.l.b16 %v415
    %v2315 = vunpack.c.h.b16 %v415
    %v2316 = vunpack.c.l.b16 %v416
    %v2317 = vunpack.c.h.b16 %v416
    %v2318 = vunpack.c.l.b16 %v417
    %v2319 = vunpack.c.h.b16 %v417
    %v2320 = vunpack.c.l.b16 %v418
    %v2321 = vunpack.c.h.b16 %v418
    %v2322 = vunpack.c.l.b16 %v419
    %v2323 = vunpack.c.h.b16 %v419
    %v2324 = vunpack.c.l.b16 %v420
    %v2325 = vunpack.c.h.b16 %v420
    %v2326 = vunpack.c.l.b16 %v421
    %v2327 = vunpack.c.h.b16 %v421
    %v2328 = vunpack.c.l.b16 %v422
    %v2329 = vunpack.c.h.b16 %v422
    %v2330 = vunpack.c.l.b16 %v423
    %v2331 = vunpack.c.h.b16 %v423
    %v2332 = vunpack.c.l.b16 %v424
    %v2333 = vunpack.c.h.b16 %v424
    %v2334 = vunpack.c.l.b16 %v425
    %v2335 = vunpack.c.h.b16 %v425
    %v2336 = vunpack.c.l.b16 %v426
    %v2337 = vunpack.c.h.b16 %v426
    %v2338 = vunpack.c.l.b16 %v427
    %v2339 = vunpack.c.h.b16 %v427
    %v2340 = vunpack.c.l.b16 %v428
    %v2341 = vunpack.c.h.b16 %v428
    %v2342 = vunpack.c.l.b16 %v429
    %v2343 = vunpack.c.h.b16 %v429
    %v2344 = vunpack.c.l.b16 %v430
    %v2345 = vunpack.c.h.b16 %v430
    %v2346 = vunpack.c.l.b16 %v431
    %v2347 = vunpack.c.h.b16 %v431
    %v2348 = vunpack.c.l.b16 %v432
    %v2349 = vunpack.c.h.b16 %v432
    %v2350 = vunpack.c.l.b16 %v433
    %v2351 = vunpack.c.h.b16 %v433
    %v2352 = vunpack.c.l.b16 %v434
    %v2353 = vunpack.c.h.b16 %v434
    %v2354 = vunpack.c.l.b16 %v435
    %v2355 = vunpack.c.h.b16 %v435
    %v2356 = vunpack.c.l.b16 %v436
    %v2357 = vunpack.c.h.b16 %v436
    %v2358 = vunpack.c.l.b16 %v437
    %v2359 = vunpack.c.h.b16 %v437
    %v2360 = vunpack.c.l.b16 %v438
    %v2361 = vunpack.c.h.b16 %v438
    %v2362 = vunpack.c.l.b16 %v439
    %v2363 = vunpack.c.h.b16 %v439
    %v2364 = vunpack.c.l.b16 %v440
    %v2365 = vunpack.c.h.b16 %v440
    %v2366 = vunpack.c.l.b16 %v441
    %v2367 = vunpack.c.h.b16 %v441
    %v2368 = vunpack.c.l.b16 %v442
    %v2369 = vunpack.c.h.b16 %v442
    %v2370 = vunpack.c.l.b16 %v443
    %v2371 = vunpack.c.h.b16 %v443
    %v2372 = vunpack.c.l.b16 %v444
    %v2373 = vunpack.c.h.b16 %v444
    %v2374 = vunpack.c.l.b16 %v445
    %v2375 = vunpack.c.h.b16 %v445
    %v2376 = vunpack.c.l.b16 %v446
    %v2377 = vunpack.c.h.b16 %v446
    %v2378 = vunpack.c.l.b16 %v447
    %v2379 = vunpack.c.h.b16 %v447
    %v2380 = vunpack.c.l.b16 %v448
    %v2381 = vunpack.c.h.b16 %v448
    %v2382 = vunpack.c.l.b16 %v449
    %v2383 = vunpack.c.h.b16 %v449
    %v2384 = vunpack.c.l.b16 %v450
    %v2385 = vunpack.c.h.b16 %v450
    %v2386 = vunpack.c.l.b16 %v451
    %v2387 = vunpack.c.h.b16 %v451
    %v2388 = vunpack.c.l.b16 %v452
    %v2389 = vunpack.c.h.b16 %v452
    %v2390 = vunpack.c.l.b16 %v453
    %v2391 = vunpack.c.h.b16 %v453
    %v2392 = vunpack.c.l.b16 %v454
    %v2393 = vunpack.c.h.b16 %v454
    %v2394 = vunpack.c.l.b16 %v455
    %v2395 = vunpack.c.h.b16 %v455
    %v2396 = vunpack.c.l.b16 %v456
    %v2397 = vunpack.c.h.b16 %v456
    %v2398 = vunpack.c.l.b16 %v457
    %v2399 = vunpack.c.h.b16 %v457
    %v2400 = vunpack.c.l.b16 %v458
    %v2401 = vunpack.c.h.b16 %v458
    %v2402 = vunpack.c.l.b16 %v459
    %v2403 = vunpack.c.h.b16 %v459
    %v2404 = vunpack.c.l.b16 %v460
    %v2405 = vunpack.c.h.b16 %v460
    %v2406 = vunpack.c.l.b16 %v461
    %v2407 = vunpack.c.h.b16 %v461
    %v2408 = vunpack.c.l.b16 %v462
    %v2409 = vunpack.c.h.b16 %v462
    %v2410 = vunpack.c.l.b16 %v463
    %v2411 = vunpack.c.h.b16 %v463
    %v2412 = vunpack.c.l.b16 %v464
    %v2413 = vunpack.c.h.b16 %v464
    %v2414 = vunpack.c.l.b16 %v465
    %v2415 = vunpack.c.h.b16 %v465
    %v2416 = vunpack.c.l.b16 %v466
    %v2417 = vunpack.c.h.b16 %v466
    %v2418 = vunpack.c.l.b16 %v467
    %v2419 = vunpack.c.h.b16 %v467
    %v2420 = vunpack.c.l.b16 %v468
    %v2421 = vunpack.c.h.b16 %v468
    %v2422 = vunpack.c.l.b16 %v469
    %v2423 = vunpack.c.h.b16 %v469
    %v2424 = vunpack.c.l.b16 %v470
    %v2425 = vunpack.c.h.b16 %v470
    %v2426 = vunpack.c.l.b16 %v471
    %v2427 = vunpack.c.h.b16 %v471
    %v2428 = vunpack.c.l.b16 %v472
    %v2429 = vunpack.c.h.b16 %v472
    %v2430 = vunpack.c.l.b16 %v473
    %v2431 = vunpack.c.h.b16 %v473
    %v2432 = vunpack.c.l.b16 %v474
    %v2433 = vunpack.c.h.b16 %v474
    %v2434 = vunpack.c.l.b16 %v475
    %v2435 = vunpack.c.h.b16 %v475
    %v2436 = vunpack.c.l.b16 %v476
    %v2437 = vunpack.c.h.b16 %v476
    %v2438 = vunpack.c.l.b16 %v477
    %v2439 = vunpack.c.h.b16 %v477
    %v2440 = vunpack.c.l.b16 %v478
    %v2441 = vunpack.c.h.b16 %v478
    %v2442 = vunpack.c.l.b16 %v479
    %v2443 = vunpack.c.h.b16 %v479
    %v2444 = vunpack.c.l.b16 %v480
    %v2445 = vunpack.c.h.b16 %v480
    %v2446 = vunpack.c.l.b16 %v481
    %v2447 = vunpack.c.h.b16 %v481
    %v2448 = vunpack.c.l.b16 %v482
    %v2449 = vunpack.c.h.b16 %v482
    %v2450 = vunpack.c.l.b16 %v483
    %v2451 = vunpack.c.h.b16 %v483
    %v2452 = vunpack.c.l.b16 %v484
    %v2453 = vunpack.c.h.b16 %v484
    %v2454 = vunpack.c.l.b16 %v485
    %v2455 = vunpack.c.h.b16 %v485
    %v2456 = vunpack.c.l.b16 %v486
    %v2457 = vunpack.c.h.b16 %v486
    %v2458 = vunpack.c.l.b16 %v487
    %v2459 = vunpack.c.h.b16 %v487
    %v2460 = vunpack.c.l.b16 %v488
    %v2461 = vunpack.c.h.b16 %v488
    %v2462 = vunpack.c.l.b16 %v489
    %v2463 = vunpack.c.h.b16 %v489
    %v2464 = vunpack.c.l.b16 %v490
    %v2465 = vunpack.c.h.b16 %v490
    %v2466 = vunpack.c.l.b16 %v491
    %v2467 = vunpack.c.h.b16 %v491
    %v2468 = vunpack.c.l.b16 %v492
    %v2469 = vunpack.c.h.b16 %v492
    %v2470 = vunpack.c.l.b16 %v493
    %v2471 = vunpack.c.h.b16 %v493
    %v2472 = vunpack.c.l.b16 %v494
    %v2473 = vunpack.c.h.b16 %v494
    %v2474 = vunpack.c.l.b16 %v495
    %v2475 = vunpack.c.h.b16 %v495
    %v2476 = vunpack.c.l.b16 %v496
    %v2477 = vunpack.c.h.b16 %v496
    %v2478 = vunpack.c.l.b16 %v497
    %v2479 = vunpack.c.h.b16 %v497
    %v2480 = vunpack.c.l.b16 %v498
    %v2481 = vunpack.c.h.b16 %v498
    %v2482 = vunpack.c.l.b16 %v499
    %v2483 = vunpack.c.h.b16 %v499
    %v2484 = vunpack.c.l.b16 %v500
    %v2485 = vunpack.c.h.b16 %v500
    %v2486 = vunpack.c.l.b16 %v501
    %v2487 = vunpack.c.h.b16 %v501
    %v2488 = vunpack.c.l.b16 %v502
    %v2489 = vunpack.c.h.b16 %v502
    %v2490 = vunpack.c.l.b16 %v503
    %v2491 = vunpack.c.h.b16 %v503
    %v2492 = vunpack.c.l.b16 %v504
    %v2493 = vunpack.c.h.b16 %v504
    %v2494 = vunpack.c.l.b16 %v505
    %v2495 = vunpack.c.h.b16 %v505
    %v2496 = vunpack.c.l.b16 %v506
    %v2497 = vunpack.c.h.b16 %v506
    %v2498 = vunpack.c.l.b16 %v507
    %v2499 = vunpack.c.h.b16 %v507
    %v2500 = vunpack.c.l.b16 %v508
    %v2501 = vunpack.c.h.b16 %v508
    %v2502 = vunpack.c.l.b16 %v509
    %v2503 = vunpack.c.h.b16 %v509
    %v2504 = vunpack.c.l.b16 %v510
    %v2505 = vunpack.c.h.b16 %v510
    %v2506 = vunpack.c.l.b16 %v511
    %v2507 = vunpack.c.h.b16 %v511
    %v2508 = vunpack.c.l.b16 %v512
    %v2509 = vunpack.c.h.b16 %v512
    %v2510 = vunpack.c.l.b16 %v513
    %v2511 = vunpack.c.h.b16 %v513
    %v2512 = vunpack.c.l.b16 %v514
    %v2513 = vunpack.c.h.b16 %v514
    %v2514 = vunpack.c.l.b16 %v515
    %v2515 = vunpack.c.h.b16 %v515
    %v2516 = vunpack.c.l.b16 %v516
    %v2517 = vunpack.c.h.b16 %v516
    %v2518 = vunpack.c.l.b16 %v517
    %v2519 = vunpack.c.h.b16 %v517
    %v2520 = vunpack.c.l.b16 %v518
    %v2521 = vunpack.c.h.b16 %v518
    %v2522 = vunpack.c.l.b16 %v519
    %v2523 = vunpack.c.h.b16 %v519
    %v2524 = vunpack.c.l.b16 %v520
    %v2525 = vunpack.c.h.b16 %v520
    %v2526 = vunpack.c.l.b16 %v521
    %v2527 = vunpack.c.h.b16 %v521
    %v2528 = vunpack.c.l.b16 %v522
    %v2529 = vunpack.c.h.b16 %v522
    %v2530 = vunpack.c.l.b16 %v523
    %v2531 = vunpack.c.h.b16 %v523
    %v2532 = vunpack.c.l.b16 %v524
    %v2533 = vunpack.c.h.b16 %v524
    %v2534 = vunpack.c.l.b16 %v525
    %v2535 = vunpack.c.h.b16 %v525
    %v2536 = vunpack.c.l.b16 %v526
    %v2537 = vunpack.c.h.b16 %v526
    %v2538 = vunpack.c.l.b16 %v527
    %v2539 = vunpack.c.h.b16 %v527
    %v2540 = vunpack.c.l.b16 %v528
    %v2541 = vunpack.c.h.b16 %v528
    %v2542 = vunpack.c.l.b16 %v529
    %v2543 = vunpack.c.h.b16 %v529
    %v2544 = vunpack.c.l.b16 %v530
    %v2545 = vunpack.c.h.b16 %v530
    %v2546 = vunpack.c.l.b16 %v531
    %v2547 = vunpack.c.h.b16 %v531
    %v2548 = vunpack.c.l.b16 %v532
    %v2549 = vunpack.c.h.b16 %v532
    %v2550 = vunpack.c.l.b16 %v533
    %v2551 = vunpack.c.h.b16 %v533
    %v2552 = vunpack.c.l.b16 %v534
    %v2553 = vunpack.c.h.b16 %v534
    %v2554 = vunpack.c.l.b16 %v535
    %v2555 = vunpack.c.h.b16 %v535
    %v2556 = vunpack.c.l.b16 %v536
    %v2557 = vunpack.c.h.b16 %v536
    %v2558 = vunpack.c.l.b16 %v537
    %v2559 = vunpack.c.h.b16 %v537
    %v2560 = vunpack.c.l.b16 %v538
    %v2561 = vunpack.c.h.b16 %v538
    %v2562 = vunpack.c.l.b16 %v539
    %v2563 = vunpack.c.h.b16 %v539
    %v2564 = vunpack.c.l.b16 %v540
    %v2565 = vunpack.c.h.b16 %v540
    %v2566 = vunpack.c.l.b16 %v541
    %v2567 = vunpack.c.h.b16 %v541
    %v2568 = vunpack.c.l.b16 %v542
    %v2569 = vunpack.c.h.b16 %v542
    %v2570 = vunpack.c.l.b16 %v543
    %v2571 = vunpack.c.h.b16 %v543
    %v2572 = vunpack.c.l.b16 %v544
    %v2573 = vunpack.c.h.b16 %v544
    %v2574 = vunpack.c.l.b16 %v545
    %v2575 = vunpack.c.h.b16 %v545
    %v2576 = vunpack.c.l.b16 %v546
    %v2577 = vunpack.c.h.b16 %v546
    %v2578 = vunpack.c.l.b16 %v547
    %v2579 = vunpack.c.h.b16 %v547
    %v2580 = vunpack.c.l.b16 %v548
    %v2581 = vunpack.c.h.b16 %v548
    %v2582 = vunpack.c.l.b16 %v549
    %v2583 = vunpack.c.h.b16 %v549
    %v2584 = vunpack.c.l.b16 %v550
    %v2585 = vunpack.c.h.b16 %v550
    %v2586 = vunpack.c.l.b16 %v551
    %v2587 = vunpack.c.h.b16 %v551
    %v2588 = vunpack.c.l.b16 %v552
    %v2589 = vunpack.c.h.b16 %v552
    %v2590 = vunpack.c.l.b16 %v553
    %v2591 = vunpack.c.h.b16 %v553
    %v2592 = vunpack.c.l.b16 %v554
    %v2593 = vunpack.c.h.b16 %v554
    %v2594 = vunpack.c.l.b16 %v555
    %v2595 = vunpack.c.h.b16 %v555
    %v2596 = vunpack.c.l.b16 %v556
    %v2597 = vunpack.c.h.b16 %v556
    %v2598 = vunpack.c.l.b16 %v557
    %v2599 = vunpack.c.h.b16 %v557
    %v2600 = vunpack.c.l.b16 %v558
    %v2601 = vunpack.c.h.b16 %v558
    %v2602 = vunpack.c.l.b16 %v559
    %v2603 = vunpack.c.h.b16 %v559
    %v2604 = vunpack.c.l.b16 %v560
    %v2605 = vunpack.c.h.b16 %v560
    %v2606 = vunpack.c.l.b16 %v561
    %v2607 = vunpack.c.h.b16 %v561
    %v2608 = vunpack.c.l.b16 %v562
    %v2609 = vunpack.c.h.b16 %v562
    %v2610 = vunpack.c.l.b16 %v563
    %v2611 = vunpack.c.h.b16 %v563
    %v2612 = vunpack.c.l.b16 %v564
    %v2613 = vunpack.c.h.b16 %v564
    %v2614 = vunpack.c.l.b16 %v565
    %v2615 = vunpack.c.h.b16 %v565
    %v2616 = vunpack.c.l.b16 %v566
    %v2617 = vunpack.c.h.b16 %v566
    %v2618 = vunpack.c.l.b16 %v567
    %v2619 = vunpack.c.h.b16 %v567
    %v2620 = vunpack.c.l.b16 %v568
    %v2621 = vunpack.c.h.b16 %v568
    %v2622 = vunpack.c.l.b16 %v569
    %v2623 = vunpack.c.h.b16 %v569
    %v2624 = vunpack.c.l.b16 %v570
    %v2625 = vunpack.c.h.b16 %v570
    %v2626 = vunpack.c.l.b16 %v571
    %v2627 = vunpack.c.h.b16 %v571
    %v2628 = vunpack.c.l.b16 %v572
    %v2629 = vunpack.c.h.b16 %v572
    %v2630 = vunpack.c.l.b16 %v573
    %v2631 = vunpack.c.h.b16 %v573
    %v2632 = vunpack.c.l.b16 %v574
    %v2633 = vunpack.c.h.b16 %v574
    %v2634 = vunpack.c.l.b16 %v575
    %v2635 = vunpack.c.h.b16 %v575
    %v2636 = vunpack.c.l.b16 %v576
    %v2637 = vunpack.c.h.b16 %v576
    %v2638 = vunpack.c.l.b16 %v577
    %v2639 = vunpack.c.h.b16 %v577
    %v2640 = vunpack.c.l.b16 %v578
    %v2641 = vunpack.c.h.b16 %v578
    %v2642 = vunpack.c.l.b16 %v579
    %v2643 = vunpack.c.h.b16 %v579
    %v2644 = vunpack.c.l.b16 %v580
    %v2645 = vunpack.c.h.b16 %v580
    %v2646 = vunpack.c.l.b16 %v581
    %v2647 = vunpack.c.h.b16 %v581
    %v2648 = vunpack.c.l.b16 %v582
    %v2649 = vunpack.c.h.b16 %v582
    %v2650 = vunpack.c.l.b16 %v583
    %v2651 = vunpack.c.h.b16 %v583
    %v2652 = vunpack.c.l.b16 %v584
    %v2653 = vunpack.c.h.b16 %v584
    %v2654 = vunpack.c.l.b16 %v585
    %v2655 = vunpack.c.h.b16 %v585
    %v2656 = vunpack.c.l.b16 %v586
    %v2657 = vunpack.c.h.b16 %v586
    %v2658 = vunpack.c.l.b16 %v587
    %v2659 = vunpack.c.h.b16 %v587
    %v2660 = vunpack.c.l.b16 %v588
    %v2661 = vunpack.c.h.b16 %v588
    %v2662 = vunpack.c.l.b16 %v589
    %v2663 = vunpack.c.h.b16 %v589
    %v2664 = vunpack.c.l.b16 %v590
    %v2665 = vunpack.c.h.b16 %v590
    %v2666 = vunpack.c.l.b16 %v591
    %v2667 = vunpack.c.h.b16 %v591
    %v2668 = vunpack.c.l.b16 %v592
    %v2669 = vunpack.c.h.b16 %v592
    %v2670 = vunpack.c.l.b16 %v593
    %v2671 = vunpack.c.h.b16 %v593
    %v2672 = vunpack.c.l.b16 %v594
    %v2673 = vunpack.c.h.b16 %v594
    %v2674 = vunpack.c.l.b16 %v595
    %v2675 = vunpack.c.h.b16 %v595
    %v2676 = vunpack.c.l.b16 %v596
    %v2677 = vunpack.c.h.b16 %v596
    %v2678 = vunpack.c.l.b16 %v597
    %v2679 = vunpack.c.h.b16 %v597
    %v2680 = vunpack.c.l.b16 %v598
    %v2681 = vunpack.c.h.b16 %v598
    %v2682 = vunpack.c.l.b16 %v599
    %v2683 = vunpack.c.h.b16 %v599
    %v2684 = vunpack.c.l.b16 %v600
    %v2685 = vunpack.c.h.b16 %v600
    %v2686 = vunpack.c.l.b16 %v601
    %v2687 = vunpack.c.h.b16 %v601
    %v2688 = vunpack.c.l.b16 %v602
    %v2689 = vunpack.c.h.b16 %v602
    %v2690 = vunpack.c.l.b16 %v603
    %v2691 = vunpack.c.h.b16 %v603
    %v2692 = vunpack.c.l.b16 %v604
    %v2693 = vunpack.c.h.b16 %v604
    %v2694 = vunpack.c.l.b16 %v605
    %v2695 = vunpack.c.h.b16 %v605
    %v2696 = vunpack.c.l.b16 %v606
    %v2697 = vunpack.c.h.b16 %v606
    %v2698 = vunpack.c.l.b16 %v607
    %v2699 = vunpack.c.h.b16 %v607
    %v2700 = vunpack.c.l.b16 %v608
    %v2701 = vunpack.c.h.b16 %v608
    %v2702 = vunpack.c.l.b16 %v609
    %v2703 = vunpack.c.h.b16 %v609
    %v2704 = vunpack.c.l.b16 %v610
    %v2705 = vunpack.c.h.b16 %v610
    %v2706 = vunpack.c.l.b16 %v611
    %v2707 = vunpack.c.h.b16 %v611
    %v2708 = vunpack.c.l.b16 %v612
    %v2709 = vunpack.c.h.b16 %v612
    %v2710 = vunpack.c.l.b16 %v613
    %v2711 = vunpack.c.h.b16 %v613
    %v2712 = vunpack.c.l.b16 %v614
    %v2713 = vunpack.c.h.b16 %v614
    %v2714 = vunpack.c.l.b16 %v615
    %v2715 = vunpack.c.h.b16 %v615
    %v2716 = vunpack.c.l.b16 %v616
    %v2717 = vunpack.c.h.b16 %v616
    %v2718 = vunpack.c.l.b16 %v617
    %v2719 = vunpack.c.h.b16 %v617
    %v2720 = vunpack.c.l.b16 %v618
    %v2721 = vunpack.c.h.b16 %v618
    %v2722 = vunpack.c.l.b16 %v619
    %v2723 = vunpack.c.h.b16 %v619
    %v2724 = vunpack.c.l.b16 %v620
    %v2725 = vunpack.c.h.b16 %v620
    %v2726 = vunpack.c.l.b16 %v621
    %v2727 = vunpack.c.h.b16 %v621
    %v2728 = vunpack.c.l.b16 %v622
    %v2729 = vunpack.c.h.b16 %v622
    %v2730 = vunpack.c.l.b16 %v623
    %v2731 = vunpack.c.h.b16 %v623
    %v2732 = vunpack.c.l.b16 %v624
    %v2733 = vunpack.c.h.b16 %v624
    %v2734 = vunpack.c.l.b16 %v625
    %v2735 = vunpack.c.h.b16 %v625
    %v2736 = vunpack.c.l.b16 %v626
    %v2737 = vunpack.c.h.b16 %v626
    %v2738 = vunpack.c.l.b16 %v627
    %v2739 = vunpack.c.h.b16 %v627
    %v2740 = vunpack.c.l.b16 %v628
    %v2741 = vunpack.c.h.b16 %v628
    %v2742 = vunpack.c.l.b16 %v629
    %v2743 = vunpack.c.h.b16 %v629
    %v2744 = vunpack.c.l.b16 %v630
    %v2745 = vunpack.c.h.b16 %v630
    %v2746 = vunpack.c.l.b16 %v631
    %v2747 = vunpack.c.h.b16 %v631
    %v2748 = vunpack.c.l.b16 %v632
    %v2749 = vunpack.c.h.b16 %v632
    %v2750 = vunpack.c.l.b16 %v633
    %v2751 = vunpack.c.h.b16 %v633
    %v2752 = vunpack.c.l.b16 %v634
    %v2753 = vunpack.c.h.b16 %v634
    %v2754 = vunpack.c.l.b16 %v635
    %v2755 = vunpack.c.h.b16 %v635
    %v2756 = vunpack.c.l.b16 %v636
    %v2757 = vunpack.c.h.b16 %v636
    %v2758 = vunpack.c.l.b16 %v637
    %v2759 = vunpack.c.h.b16 %v637
    %v2760 = vunpack.c.l.b16 %v638
    %v2761 = vunpack.c.h.b16 %v638
    %v2762 = vunpack.c.l.b16 %v639
    %v2763 = vunpack.c.h.b16 %v639
    %v2764 = vunpack.c.l.b16 %v640
    %v2765 = vunpack.c.h.b16 %v640
    %v2766 = vunpack.c.l.b16 %v641
    %v2767 = vunpack.c.h.b16 %v641
    %v2768 = vunpack.c.l.b16 %v642
    %v2769 = vunpack.c.h.b16 %v642
    %v2770 = vunpack.c.l.b16 %v643
    %v2771 = vunpack.c.h.b16 %v643
    %v2772 = vunpack.c.l.b16 %v644
    %v2773 = vunpack.c.h.b16 %v644
    %v2774 = vunpack.c.l.b16 %v645
    %v2775 = vunpack.c.h.b16 %v645
    %v2776 = vunpack.c.l.b16 %v646
    %v2777 = vunpack.c.h.b16 %v646
    %v2778 = vunpack.c.l.b16 %v647
    %v2779 = vunpack.c.h.b16 %v647
    %v2780 = vunpack.c.l.b16 %v648
    %v2781 = vunpack.c.h.b16 %v648
    %v2782 = vunpack.c.l.b16 %v649
    %v2783 = vunpack.c.h.b16 %v649
    %v2784 = vunpack.c.l.b16 %v650
    %v2785 = vunpack.c.h.b16 %v650
    %v2786 = vunpack.c.l.b16 %v651
    %v2787 = vunpack.c.h.b16 %v651
    %v2788 = vunpack.c.l.b16 %v652
    %v2789 = vunpack.c.h.b16 %v652
    %v2790 = vunpack.c.l.b16 %v653
    %v2791 = vunpack.c.h.b16 %v653
    %v2792 = vunpack.c.l.b16 %v654
    %v2793 = vunpack.c.h.b16 %v654
    %v2794 = vunpack.c.l.b16 %v655
    %v2795 = vunpack.c.h.b16 %v655
    %v2796 = vunpack.c.l.b16 %v656
    %v2797 = vunpack.c.h.b16 %v656
    %v2798 = vunpack.c.l.b16 %v657
    %v2799 = vunpack.c.h.b16 %v657
    %v2800 = vunpack.c.l.b16 %v658
    %v2801 = vunpack.c.h.b16 %v658
    %v2802 = vunpack.c.l.b16 %v659
    %v2803 = vunpack.c.h.b16 %v659
    %v2804 = vunpack.c.l.b16 %v660
    %v2805 = vunpack.c.h.b16 %v660
    %v2806 = vunpack.c.l.b16 %v661
    %v2807 = vunpack.c.h.b16 %v661
    %v2808 = vunpack.c.l.b16 %v662
    %v2809 = vunpack.c.h.b16 %v662
    %v2810 = vunpack.c.l.b16 %v663
    %v2811 = vunpack.c.h.b16 %v663
    %v2812 = vunpack.c.l.b16 %v664
    %v2813 = vunpack.c.h.b16 %v664
    %v2814 = vunpack.c.l.b16 %v665
    %v2815 = vunpack.c.h.b16 %v665
    %v2816 = vunpack.c.l.b16 %v666
    %v2817 = vunpack.c.h.b16 %v666
    %v2818 = vunpack.c.l.b16 %v667
    %v2819 = vunpack.c.h.b16 %v667
    %v2820 = vunpack.c.l.b16 %v668
    %v2821 = vunpack.c.h.b16 %v668
    %v2822 = vunpack.c.l.b16 %v669
    %v2823 = vunpack.c.h.b16 %v669
    %v2824 = vunpack.c.l.b16 %v670
    %v2825 = vunpack.c.h.b16 %v670
    %v2826 = vunpack.c.l.b16 %v671
    %v2827 = vunpack.c.h.b16 %v671
    %v2828 = vunpack.c.l.b16 %v672
    %v2829 = vunpack.c.h.b16 %v672
    %v2830 = vunpack.c.l.b16 %v673
    %v2831 = vunpack.c.h.b16 %v673
    %v2832 = vunpack.c.l.b16 %v674
    %v2833 = vunpack.c.h.b16 %v674
    %v2834 = vunpack.c.l.b16 %v675
    %v2835 = vunpack.c.h.b16 %v675
    %v2836 = vunpack.c.l.b16 %v676
    %v2837 = vunpack.c.h.b16 %v676
    %v2838 = vunpack.c.l.b16 %v677
    %v2839 = vunpack.c.h.b16 %v677
    %v2840 = vunpack.c.l.b16 %v678
    %v2841 = vunpack.c.h.b16 %v678
    %v2842 = vunpack.c.l.b16 %v679
    %v2843 = vunpack.c.h.b16 %v679
    %v2844 = vunpack.c.l.b16 %v680
    %v2845 = vunpack.c.h.b16 %v680
    %v2846 = vunpack.c.l.b16 %v681
    %v2847 = vunpack.c.h.b16 %v681
    %v2848 = vunpack.c.l.b16 %v682
    %v2849 = vunpack.c.h.b16 %v682
    %v2850 = vunpack.c.l.b16 %v683
    %v2851 = vunpack.c.h.b16 %v683
    %v2852 = vunpack.c.l.b16 %v684
    %v2853 = vunpack.c.h.b16 %v684
    %v2854 = vunpack.c.l.b16 %v685
    %v2855 = vunpack.c.h.b16 %v685
    %v2856 = vunpack.c.l.b16 %v686
    %v2857 = vunpack.c.h.b16 %v686
    %v2858 = vunpack.c.l.b16 %v687
    %v2859 = vunpack.c.h.b16 %v687
    %v2860 = vunpack.c.l.b16 %v688
    %v2861 = vunpack.c.h.b16 %v688
    %v2862 = vunpack.c.l.b16 %v689
    %v2863 = vunpack.c.h.b16 %v689
    %v2864 = vunpack.c.l.b16 %v690
    %v2865 = vunpack.c.h.b16 %v690
    %v2866 = vunpack.c.l.b16 %v691
    %v2867 = vunpack.c.h.b16 %v691
    %v2868 = vunpack.c.l.b16 %v692
    %v2869 = vunpack.c.h.b16 %v692
    %v2870 = vunpack.c.l.b16 %v693
    %v2871 = vunpack.c.h.b16 %v693
    %v2872 = vunpack.c.l.b16 %v694
    %v2873 = vunpack.c.h.b16 %v694
    %v2874 = vunpack.c.l.b16 %v695
    %v2875 = vunpack.c.h.b16 %v695
    %v2876 = vunpack.c.l.b16 %v696
    %v2877 = vunpack.c.h.b16 %v696
    %v2878 = vunpack.c.l.b16 %v697
    %v2879 = vunpack.c.h.b16 %v697
    %v2880 = vunpack.c.l.b16 %v698
    %v2881 = vunpack.c.h.b16 %v698
    %v2882 = vunpack.c.l.b16 %v699
    %v2883 = vunpack.c.h.b16 %v699
    %v2884 = vunpack.c.l.b16 %v700
    %v2885 = vunpack.c.h.b16 %v700
    %v2886 = vunpack.c.l.b16 %v701
    %v2887 = vunpack.c.h.b16 %v701
    %v2888 = vunpack.c.l.b16 %v702
    %v2889 = vunpack.c.h.b16 %v702
    %v2890 = vunpack.c.l.b16 %v703
    %v2891 = vunpack.c.h.b16 %v703
    %v2892 = vunpack.c.l.b16 %v704
    %v2893 = vunpack.c.h.b16 %v704
    %v2894 = vunpack.c.l.b16 %v705
    %v2895 = vunpack.c.h.b16 %v705
    %v2896 = vunpack.c.l.b16 %v706
    %v2897 = vunpack.c.h.b16 %v706
    %v2898 = vunpack.c.l.b16 %v707
    %v2899 = vunpack.c.h.b16 %v707
    %v2900 = vunpack.c.l.b16 %v708
    %v2901 = vunpack.c.h.b16 %v708
    %v2902 = vunpack.c.l.b16 %v709
    %v2903 = vunpack.c.h.b16 %v709
    %v2904 = vunpack.c.l.b16 %v710
    %v2905 = vunpack.c.h.b16 %v710
    %v2906 = vunpack.c.l.b16 %v711
    %v2907 = vunpack.c.h.b16 %v711
    %v2908 = vunpack.c.l.b16 %v712
    %v2909 = vunpack.c.h.b16 %v712
    %v2910 = vunpack.c.l.b16 %v713
    %v2911 = vunpack.c.h.b16 %v713
    %v2912 = vpack.c.b16 %v1892, %v1888
    %v2913 = vpack.c.b16 %v1893, %v1889
    %v2914 = vpack.c.b16 %v1894, %v1890
    %v2915 = vpack.c.b16 %v1895, %v1891
    %v2916 = vpack.c.b16 %v1900, %v1896
    %v2917 = vpack.c.b16 %v1901, %v1897
    %v2918 = vpack.c.b16 %v1902, %v1898
    %v2919 = vpack.c.b16 %v1903, %v1899
    %v2920 = vpack.c.b16 %v1908, %v1904
    %v2921 = vpack.c.b16 %v1909, %v1905
    %v2922 = vpack.c.b16 %v1910, %v1906
    %v2923 = vpack.c.b16 %v1911, %v1907
    %v2924 = vpack.c.b16 %v1916, %v1912
    %v2925 = vpack.c.b16 %v1917, %v1913
    %v2926 = vpack.c.b16 %v1918, %v1914
    %v2927 = vpack.c.b16 %v1919, %v1915
    %v2928 = vpack.c.b16 %v1924, %v1920
    %v2929 = vpack.c.b16 %v1925, %v1921
    %v2930 = vpack.c.b16 %v1926, %v1922
    %v2931 = vpack.c.b16 %v1927, %v1923
    %v2932 = vpack.c.b16 %v1932, %v1928
    %v2933 = vpack.c.b16 %v1933, %v1929
    %v2934 = vpack.c.b16 %v1934, %v1930
    %v2935 = vpack.c.b16 %v1935, %v1931
    %v2936 = vpack.c.b16 %v1940, %v1936
    %v2937 = vpack.c.b16 %v1941, %v1937
    %v2938 = vpack.c.b16 %v1942, %v1938
    %v2939 = vpack.c.b16 %v1943, %v1939
    %v2940 = vpack.c.b16 %v1948, %v1944
    %v2941 = vpack.c.b16 %v1949, %v1945
    %v2942 = vpack.c.b16 %v1950, %v1946
    %v2943 = vpack.c.b16 %v1951, %v1947
    %v2944 = vpack.c.b16 %v1956, %v1952
    %v2945 = vpack.c.b16 %v1957, %v1953
    %v2946 = vpack.c.b16 %v1958, %v1954
    %v2947 = vpack.c.b16 %v1959, %v1955
    %v2948 = vpack.c.b16 %v1964, %v1960
    %v2949 = vpack.c.b16 %v1965, %v1961
    %v2950 = vpack.c.b16 %v1966, %v1962
    %v2951 = vpack.c.b16 %v1967, %v1963
    %v2952 = vpack.c.b16 %v1972, %v1968
    %v2953 = vpack.c.b16 %v1973, %v1969
    %v2954 = vpack.c.b16 %v1974, %v1970
    %v2955 = vpack.c.b16 %v1975, %v1971
    %v2956 = vpack.c.b16 %v1980, %v1976
    %v2957 = vpack.c.b16 %v1981, %v1977
    %v2958 = vpack.c.b16 %v1982, %v1978
    %v2959 = vpack.c.b16 %v1983, %v1979
    %v2960 = vpack.c.b16 %v1988, %v1984
    %v2961 = vpack.c.b16 %v1989, %v1985
    %v2962 = vpack.c.b16 %v1990, %v1986
    %v2963 = vpack.c.b16 %v1991, %v1987
    %v2964 = vpack.c.b16 %v1996, %v1992
    %v2965 = vpack.c.b16 %v1997, %v1993
    %v2966 = vpack.c.b16 %v1998, %v1994
    %v2967 = vpack.c.b16 %v1999, %v1995
    %v2968 = vpack.c.b16 %v2004, %v2000
    %v2969 = vpack.c.b16 %v2005, %v2001
    %v2970 = vpack.c.b16 %v2006, %v2002
    %v2971 = vpack.c.b16 %v2007, %v2003
    %v2972 = vpack.c.b16 %v2012, %v2008
    %v2973 = vpack.c.b16 %v2013, %v2009
    %v2974 = vpack.c.b16 %v2014, %v2010
    %v2975 = vpack.c.b16 %v2015, %v2011
    %v2976 = vpack.c.b16 %v2020, %v2016
    %v2977 = vpack.c.b16 %v2021, %v2017
    %v2978 = vpack.c.b16 %v2022, %v2018
    %v2979 = vpack.c.b16 %v2023, %v2019
    %v2980 = vpack.c.b16 %v2028, %v2024
    %v2981 = vpack.c.b16 %v2029, %v2025
    %v2982 = vpack.c.b16 %v2030, %v2026
    %v2983 = vpack.c.b16 %v2031, %v2027
    %v2984 = vpack.c.b16 %v2036, %v2032
    %v2985 = vpack.c.b16 %v2037, %v2033
    %v2986 = vpack.c.b16 %v2038, %v2034
    %v2987 = vpack.c.b16 %v2039, %v2035
    %v2988 = vpack.c.b16 %v2044, %v2040
    %v2989 = vpack.c.b16 %v2045, %v2041
    %v2990 = vpack.c.b16 %v2046, %v2042
    %v2991 = vpack.c.b16 %v2047, %v2043
    %v2992 = vpack.c.b16 %v2052, %v2048
    %v2993 = vpack.c.b16 %v2053, %v2049
    %v2994 = vpack.c.b16 %v2054, %v2050
    %v2995 = vpack.c.b16 %v2055, %v2051
    %v2996 = vpack.c.b16 %v2060, %v2056
    %v2997 = vpack.c.b16 %v2061, %v2057
    %v2998 = vpack.c.b16 %v2062, %v2058
    %v2999 = vpack.c.b16 %v2063, %v2059
    %v3000 = vpack.c.b16 %v2068, %v2064
    %v3001 = vpack.c.b16 %v2069, %v2065
    %v3002 = vpack.c.b16 %v2070, %v2066
    %v3003 = vpack.c.b16 %v2071, %v2067
    %v3004 = vpack.c.b16 %v2076, %v2072
    %v3005 = vpack.c.b16 %v2077, %v2073
    %v3006 = vpack.c.b16 %v2078, %v2074
    %v3007 = vpack.c.b16 %v2079, %v2075
    %v3008 = vpack.c.b16 %v2084, %v2080
    %v3009 = vpack.c.b16 %v2085, %v2081
    %v3010 = vpack.c.b16 %v2086, %v2082
    %v3011 = vpack.c.b16 %v2087, %v2083
    %v3012 = vpack.c.b16 %v2092, %v2088
    %v3013 = vpack.c.b16 %v2093, %v2089
    %v3014 = vpack.c.b16 %v2094, %v2090
    %v3015 = vpack.c.b16 %v2095, %v2091
    %v3016 = vpack.c.b16 %v2100, %v2096
    %v3017 = vpack.c.b16 %v2101, %v2097
    %v3018 = vpack.c.b16 %v2102, %v2098
    %v3019 = vpack.c.b16 %v2103, %v2099
    %v3020 = vpack.c.b16 %v2108, %v2104
    %v3021 = vpack.c.b16 %v2109, %v2105
    %v3022 = vpack.c.b16 %v2110, %v2106
    %v3023 = vpack.c.b16 %v2111, %v2107
    %v3024 = vpack.c.b16 %v2116, %v2112
    %v3025 = vpack.c.b16 %v2117, %v2113
    %v3026 = vpack.c.b16 %v2118, %v2114
    %v3027 = vpack.c.b16 %v2119, %v2115
    %v3028 = vpack.c.b16 %v2124, %v2120
    %v3029 = vpack.c.b16 %v2125, %v2121
    %v3030 = vpack.c.b16 %v2126, %v2122
    %v3031 = vpack.c.b16 %v2127, %v2123
    %v3032 = vpack.c.b16 %v2132, %v2128
    %v3033 = vpack.c.b16 %v2133, %v2129
    %v3034 = vpack.c.b16 %v2134, %v2130
    %v3035 = vpack.c.b16 %v2135, %v2131
    %v3036 = vpack.c.b16 %v2140, %v2136
    %v3037 = vpack.c.b16 %v2141, %v2137
    %v3038 = vpack.c.b16 %v2142, %v2138
    %v3039 = vpack.c.b16 %v2143, %v2139
    %v3040 = vpack.c.b16 %v2148, %v2144
    %v3041 = vpack.c.b16 %v2149, %v2145
    %v3042 = vpack.c.b16 %v2150, %v2146
    %v3043 = vpack.c.b16 %v2151, %v2147
    %v3044 = vpack.c.b16 %v2156, %v2152
    %v3045 = vpack.c.b16 %v2157, %v2153
    %v3046 = vpack.c.b16 %v2158, %v2154
    %v3047 = vpack.c.b16 %v2159, %v2155
    %v3048 = vpack.c.b16 %v2164, %v2160
    %v3049 = vpack.c.b16 %v2165, %v2161
    %v3050 = vpack.c.b16 %v2166, %v2162
    %v3051 = vpack.c.b16 %v2167, %v2163
    %v3052 = vpack.c.b16 %v2172, %v2168
    %v3053 = vpack.c.b16 %v2173, %v2169
    %v3054 = vpack.c.b16 %v2174, %v2170
    %v3055 = vpack.c.b16 %v2175, %v2171
    %v3056 = vpack.c.b16 %v2180, %v2176
    %v3057 = vpack.c.b16 %v2181, %v2177
    %v3058 = vpack.c.b16 %v2182, %v2178
    %v3059 = vpack.c.b16 %v2183, %v2179
    %v3060 = vpack.c.b16 %v2188, %v2184
    %v3061 = vpack.c.b16 %v2189, %v2185
    %v3062 = vpack.c.b16 %v2190, %v2186
    %v3063 = vpack.c.b16 %v2191, %v2187
    %v3064 = vpack.c.b16 %v2196, %v2192
    %v3065 = vpack.c.b16 %v2197, %v2193
    %v3066 = vpack.c.b16 %v2198, %v2194
    %v3067 = vpack.c.b16 %v2199, %v2195
    %v3068 = vpack.c.b16 %v2204, %v2200
    %v3069 = vpack.c.b16 %v2205, %v2201
    %v3070 = vpack.c.b16 %v2206, %v2202
    %v3071 = vpack.c.b16 %v2207, %v2203
    %v3072 = vpack.c.b16 %v2212, %v2208
    %v3073 = vpack.c.b16 %v2213, %v2209
    %v3074 = vpack.c.b16 %v2214, %v2210
    %v3075 = vpack.c.b16 %v2215, %v2211
    %v3076 = vpack.c.b16 %v2220, %v2216
    %v3077 = vpack.c.b16 %v2221, %v2217
    %v3078 = vpack.c.b16 %v2222, %v2218
    %v3079 = vpack.c.b16 %v2223, %v2219
    %v3080 = vpack.c.b16 %v2228, %v2224
    %v3081 = vpack.c.b16 %v2229, %v2225
    %v3082 = vpack.c.b16 %v2230, %v2226
    %v3083 = vpack.c.b16 %v2231, %v2227
    %v3084 = vpack.c.b16 %v2236, %v2232
    %v3085 = vpack.c.b16 %v2237, %v2233
    %v3086 = vpack.c.b16 %v2238, %v2234
    %v3087 = vpack.c.b16 %v2239, %v2235
    %v3088 = vpack.c.b16 %v2244, %v2240
    %v3089 = vpack.c.b16 %v2245, %v2241
    %v3090 = vpack.c.b16 %v2246, %v2242
    %v3091 = vpack.c.b16 %v2247, %v2243
    %v3092 = vpack.c.b16 %v2252, %v2248
    %v3093 = vpack.c.b16 %v2253, %v2249
    %v3094 = vpack.c.b16 %v2254, %v2250
    %v3095 = vpack.c.b16 %v2255, %v2251
    %v3096 = vpack.c.b16 %v2260, %v2256
    %v3097 = vpack.c.b16 %v2261, %v2257
    %v3098 = vpack.c.b16 %v2262, %v2258
    %v3099 = vpack.c.b16 %v2263, %v2259
    %v3100 = vpack.c.b16 %v2268, %v2264
    %v3101 = vpack.c.b16 %v2269, %v2265
    %v3102 = vpack.c.b16 %v2270, %v2266
    %v3103 = vpack.c.b16 %v2271, %v2267
    %v3104 = vpack.c.b16 %v2276, %v2272
    %v3105 = vpack.c.b16 %v2277, %v2273
    %v3106 = vpack.c.b16 %v2278, %v2274
    %v3107 = vpack.c.b16 %v2279, %v2275
    %v3108 = vpack.c.b16 %v2284, %v2280
    %v3109 = vpack.c.b16 %v2285, %v2281
    %v3110 = vpack.c.b16 %v2286, %v2282
    %v3111 = vpack.c.b16 %v2287, %v2283
    %v3112 = vpack.c.b16 %v2292, %v2288
    %v3113 = vpack.c.b16 %v2293, %v2289
    %v3114 = vpack.c.b16 %v2294, %v2290
    %v3115 = vpack.c.b16 %v2295, %v2291
    %v3116 = vpack.c.b16 %v2300, %v2296
    %v3117 = vpack.c.b16 %v2301, %v2297
    %v3118 = vpack.c.b16 %v2302, %v2298
    %v3119 = vpack.c.b16 %v2303, %v2299
    %v3120 = vpack.c.b16 %v2308, %v2304
    %v3121 = vpack.c.b16 %v2309, %v2305
    %v3122 = vpack.c.b16 %v2310, %v2306
    %v3123 = vpack.c.b16 %v2311, %v2307
    %v3124 = vpack.c.b16 %v2316, %v2312
    %v3125 = vpack.c.b16 %v2317, %v2313
    %v3126 = vpack.c.b16 %v2318, %v2314
    %v3127 = vpack.c.b16 %v2319, %v2315
    %v3128 = vpack.c.b16 %v2324, %v2320
    %v3129 = vpack.c.b16 %v2325, %v2321
    %v3130 = vpack.c.b16 %v2326, %v2322
    %v3131 = vpack.c.b16 %v2327, %v2323
    %v3132 = vpack.c.b16 %v2332, %v2328
    %v3133 = vpack.c.b16 %v2333, %v2329
    %v3134 = vpack.c.b16 %v2334, %v2330
    %v3135 = vpack.c.b16 %v2335, %v2331
    %v3136 = vpack.c.b16 %v2340, %v2336
    %v3137 = vpack.c.b16 %v2341, %v2337
    %v3138 = vpack.c.b16 %v2342, %v2338
    %v3139 = vpack.c.b16 %v2343, %v2339
    %v3140 = vpack.c.b16 %v2348, %v2344
    %v3141 = vpack.c.b16 %v2349, %v2345
    %v3142 = vpack.c.b16 %v2350, %v2346
    %v3143 = vpack.c.b16 %v2351, %v2347
    %v3144 = vpack.c.b16 %v2356, %v2352
    %v3145 = vpack.c.b16 %v2357, %v2353
    %v3146 = vpack.c.b16 %v2358, %v2354
    %v3147 = vpack.c.b16 %v2359, %v2355
    %v3148 = vpack.c.b16 %v2364, %v2360
    %v3149 = vpack.c.b16 %v2365, %v2361
    %v3150 = vpack.c.b16 %v2366, %v2362
    %v3151 = vpack.c.b16 %v2367, %v2363
    %v3152 = vpack.c.b16 %v2372, %v2368
    %v3153 = vpack.c.b16 %v2373, %v2369
    %v3154 = vpack.c.b16 %v2374, %v2370
    %v3155 = vpack.c.b16 %v2375, %v2371
    %v3156 = vpack.c.b16 %v2380, %v2376
    %v3157 = vpack.c.b16 %v2381, %v2377
    %v3158 = vpack.c.b16 %v2382, %v2378
    %v3159 = vpack.c.b16 %v2383, %v2379
    %v3160 = vpack.c.b16 %v2388, %v2384
    %v3161 = vpack.c.b16 %v2389, %v2385
    %v3162 = vpack.c.b16 %v2390, %v2386
    %v3163 = vpack.c.b16 %v2391, %v2387
    %v3164 = vpack.c.b16 %v2396, %v2392
    %v3165 = vpack.c.b16 %v2397, %v2393
    %v3166 = vpack.c.b16 %v2398, %v2394
    %v3167 = vpack.c.b16 %v2399, %v2395
    %v3168 = vpack.c.b16 %v2404, %v2400
    %v3169 = vpack.c.b16 %v2405, %v2401
    %v3170 = vpack.c.b16 %v2406, %v2402
    %v3171 = vpack.c.b16 %v2407, %v2403
    %v3172 = vpack.c.b16 %v2412, %v2408
    %v3173 = vpack.c.b16 %v2413, %v2409
    %v3174 = vpack.c.b16 %v2414, %v2410
    %v3175 = vpack.c.b16 %v2415, %v2411
    %v3176 = vpack.c.b16 %v2420, %v2416
    %v3177 = vpack.c.b16 %v2421, %v2417
    %v3178 = vpack.c.b16 %v2422, %v2418
    %v3179 = vpack.c.b16 %v2423, %v2419
    %v3180 = vpack.c.b16 %v2428, %v2424
    %v3181 = vpack.c.b16 %v2429, %v2425
    %v3182 = vpack.c.b16 %v2430, %v2426
    %v3183 = vpack.c.b16 %v2431, %v2427
    %v3184 = vpack.c.b16 %v2436, %v2432
    %v3185 = vpack.c.b16 %v2437, %v2433
    %v3186 = vpack.c.b16 %v2438, %v2434
    %v3187 = vpack.c.b16 %v2439, %v2435
    %v3188 = vpack.c.b16 %v2444, %v2440
    %v3189 = vpack.c.b16 %v2445, %v2441
    %v3190 = vpack.c.b16 %v2446, %v2442
    %v3191 = vpack.c.b16 %v2447, %v2443
    %v3192 = vpack.c.b16 %v2452, %v2448
    %v3193 = vpack.c.b16 %v2453, %v2449
    %v3194 = vpack.c.b16 %v2454, %v2450
    %v3195 = vpack.c.b16 %v2455, %v2451
    %v3196 = vpack.c.b16 %v2460, %v2456
    %v3197 = vpack.c.b16 %v2461, %v2457
    %v3198 = vpack.c.b16 %v2462, %v2458
    %v3199 = vpack.c.b16 %v2463, %v2459
    %v3200 = vpack.c.b16 %v2468, %v2464
    %v3201 = vpack.c.b16 %v2469, %v2465
    %v3202 = vpack.c.b16 %v2470, %v2466
    %v3203 = vpack.c.b16 %v2471, %v2467
    %v3204 = vpack.c.b16 %v2476, %v2472
    %v3205 = vpack.c.b16 %v2477, %v2473
    %v3206 = vpack.c.b16 %v2478, %v2474
    %v3207 = vpack.c.b16 %v2479, %v2475
    %v3208 = vpack.c.b16 %v2484, %v2480
    %v3209 = vpack.c.b16 %v2485, %v2481
    %v3210 = vpack.c.b16 %v2486, %v2482
    %v3211 = vpack.c.b16 %v2487, %v2483
    %v3212 = vpack.c.b16 %v2492, %v2488
    %v3213 = vpack.c.b16 %v2493, %v2489
    %v3214 = vpack.c.b16 %v2494, %v2490
    %v3215 = vpack.c.b16 %v2495, %v2491
    %v3216 = vpack.c.b16 %v2500, %v2496
    %v3217 = vpack.c.b16 %v2501, %v2497
    %v3218 = vpack.c.b16 %v2502, %v2498
    %v3219 = vpack.c.b16 %v2503, %v2499
    %v3220 = vpack.c.b16 %v2508, %v2504
    %v3221 = vpack.c.b16 %v2509, %v2505
    %v3222 = vpack.c.b16 %v2510, %v2506
    %v3223 = vpack.c.b16 %v2511, %v2507
    %v3224 = vpack.c.b16 %v2516, %v2512
    %v3225 = vpack.c.b16 %v2517, %v2513
    %v3226 = vpack.c.b16 %v2518, %v2514
    %v3227 = vpack.c.b16 %v2519, %v2515
    %v3228 = vpack.c.b16 %v2524, %v2520
    %v3229 = vpack.c.b16 %v2525, %v2521
    %v3230 = vpack.c.b16 %v2526, %v2522
    %v3231 = vpack.c.b16 %v2527, %v2523
    %v3232 = vpack.c.b16 %v2532, %v2528
    %v3233 = vpack.c.b16 %v2533, %v2529
    %v3234 = vpack.c.b16 %v2534, %v2530
    %v3235 = vpack.c.b16 %v2535, %v2531
    %v3236 = vpack.c.b16 %v2540, %v2536
    %v3237 = vpack.c.b16 %v2541, %v2537
    %v3238 = vpack.c.b16 %v2542, %v2538
    %v3239 = vpack.c.b16 %v2543, %v2539
    %v3240 = vpack.c.b16 %v2548, %v2544
    %v3241 = vpack.c.b16 %v2549, %v2545
    %v3242 = vpack.c.b16 %v2550, %v2546
    %v3243 = vpack.c.b16 %v2551, %v2547
    %v3244 = vpack.c.b16 %v2556, %v2552
    %v3245 = vpack.c.b16 %v2557, %v2553
    %v3246 = vpack.c.b16 %v2558, %v2554
    %v3247 = vpack.c.b16 %v2559, %v2555
    %v3248 = vpack.c.b16 %v2564, %v2560
    %v3249 = vpack.c.b16 %v2565, %v2561
    %v3250 = vpack.c.b16 %v2566, %v2562
    %v3251 = vpack.c.b16 %v2567, %v2563
    %v3252 = vpack.c.b16 %v2572, %v2568
    %v3253 = vpack.c.b16 %v2573, %v2569
    %v3254 = vpack.c.b16 %v2574, %v2570
    %v3255 = vpack.c.b16 %v2575, %v2571
    %v3256 = vpack.c.b16 %v2580, %v2576
    %v3257 = vpack.c.b16 %v2581, %v2577
    %v3258 = vpack.c.b16 %v2582, %v2578
    %v3259 = vpack.c.b16 %v2583, %v2579
    %v3260 = vpack.c.b16 %v2588, %v2584
    %v3261 = vpack.c.b16 %v2589, %v2585
    %v3262 = vpack.c.b16 %v2590, %v2586
    %v3263 = vpack.c.b16 %v2591, %v2587
    %v3264 = vpack.c.b16 %v2596, %v2592
    %v3265 = vpack.c.b16 %v2597, %v2593
    %v3266 = vpack.c.b16 %v2598, %v2594
    %v3267 = vpack.c.b16 %v2599, %v2595
    %v3268 = vpack.c.b16 %v2604, %v2600
    %v3269 = vpack.c.b16 %v2605, %v2601
    %v3270 = vpack.c.b16 %v2606, %v2602
    %v3271 = vpack.c.b16 %v2607, %v2603
    %v3272 = vpack.c.b16 %v2612, %v2608
    %v3273 = vpack.c.b16 %v2613, %v2609
    %v3274 = vpack.c.b16 %v2614, %v2610
    %v3275 = vpack.c.b16 %v2615, %v2611
    %v3276 = vpack.c.b16 %v2620, %v2616
    %v3277 = vpack.c.b16 %v2621, %v2617
    %v3278 = vpack.c.b16 %v2622, %v2618
    %v3279 = vpack.c.b16 %v2623, %v2619
    %v3280 = vpack.c.b16 %v2628, %v2624
    %v3281 = vpack.c.b16 %v2629, %v2625
    %v3282 = vpack.c.b16 %v2630, %v2626
    %v3283 = vpack.c.b16 %v2631, %v2627
    %v3284 = vpack.c.b16 %v2636, %v2632
    %v3285 = vpack.c.b16 %v2637, %v2633
    %v3286 = vpack.c.b16 %v2638, %v2634
    %v3287 = vpack.c.b16 %v2639, %v2635
    %v3288 = vpack.c.b16 %v2644, %v2640
    %v3289 = vpack.c.b16 %v2645, %v2641
    %v3290 = vpack.c.b16 %v2646, %v2642
    %v3291 = vpack.c.b16 %v2647, %v2643
    %v3292 = vpack.c.b16 %v2652, %v2648
    %v3293 = vpack.c.b16 %v2653, %v2649
    %v3294 = vpack.c.b16 %v2654, %v2650
    %v3295 = vpack.c.b16 %v2655, %v2651
    %v3296 = vpack.c.b16 %v2660, %v2656
    %v3297 = vpack.c.b16 %v2661, %v2657
    %v3298 = vpack.c.b16 %v2662, %v2658
    %v3299 = vpack.c.b16 %v2663, %v2659
    %v3300 = vpack.c.b16 %v2668, %v2664
    %v3301 = vpack.c.b16 %v2669, %v2665
    %v3302 = vpack.c.b16 %v2670, %v2666
    %v3303 = vpack.c.b16 %v2671, %v2667
    %v3304 = vpack.c.b16 %v2676, %v2672
    %v3305 = vpack.c.b16 %v2677, %v2673
    %v3306 = vpack.c.b16 %v2678, %v2674
    %v3307 = vpack.c.b16 %v2679, %v2675
    %v3308 = vpack.c.b16 %v2684, %v2680
    %v3309 = vpack.c.b16 %v2685, %v2681
    %v3310 = vpack.c.b16 %v2686, %v2682
    %v3311 = vpack.c.b16 %v2687, %v2683
    %v3312 = vpack.c.b16 %v2692, %v2688
    %v3313 = vpack.c.b16 %v2693, %v2689
    %v3314 = vpack.c.b16 %v2694, %v2690
    %v3315 = vpack.c.b16 %v2695, %v2691
    %v3316 = vpack.c.b16 %v2700, %v2696
    %v3317 = vpack.c.b16 %v2701, %v2697
    %v3318 = vpack.c.b16 %v2702, %v2698
    %v3319 = vpack.c.b16 %v2703, %v2699
    %v3320 = vpack.c.b16 %v2708, %v2704
    %v3321 = vpack.c.b16 %v2709, %v2705
    %v3322 = vpack.c.b16 %v2710, %v2706
    %v3323 = vpack.c.b16 %v2711, %v2707
    %v3324 = vpack.c.b16 %v2716, %v2712
    %v3325 = vpack.c.b16 %v2717, %v2713
    %v3326 = vpack.c.b16 %v2718, %v2714
    %v3327 = vpack.c.b16 %v2719, %v2715
    %v3328 = vpack.c.b16 %v2724, %v2720
    %v3329 = vpack.c.b16 %v2725, %v2721
    %v3330 = vpack.c.b16 %v2726, %v2722
    %v3331 = vpack.c.b16 %v2727, %v2723
    %v3332 = vpack.c.b16 %v2732, %v2728
    %v3333 = vpack.c.b16 %v2733, %v2729
    %v3334 = vpack.c.b16 %v2734, %v2730
    %v3335 = vpack.c.b16 %v2735, %v2731
    %v3336 = vpack.c.b16 %v2740, %v2736
    %v3337 = vpack.c.b16 %v2741, %v2737
    %v3338 = vpack.c.b16 %v2742, %v2738
    %v3339 = vpack.c.b16 %v2743, %v2739
    %v3340 = vpack.c.b16 %v2748, %v2744
    %v3341 = vpack.c.b16 %v2749, %v2745
    %v3342 = vpack.c.b16 %v2750, %v2746
    %v3343 = vpack.c.b16 %v2751, %v2747
    %v3344 = vpack.c.b16 %v2756, %v2752
    %v3345 = vpack.c.b16 %v2757, %v2753
    %v3346 = vpack.c.b16 %v2758, %v2754
    %v3347 = vpack.c.b16 %v2759, %v2755
    %v3348 = vpack.c.b16 %v2764, %v2760
    %v3349 = vpack.c.b16 %v2765, %v2761
    %v3350 = vpack.c.b16 %v2766, %v2762
    %v3351 = vpack.c.b16 %v2767, %v2763
    %v3352 = vpack.c.b16 %v2772, %v2768
    %v3353 = vpack.c.b16 %v2773, %v2769
    %v3354 = vpack.c.b16 %v2774, %v2770
    %v3355 = vpack.c.b16 %v2775, %v2771
    %v3356 = vpack.c.b16 %v2780, %v2776
    %v3357 = vpack.c.b16 %v2781, %v2777
    %v3358 = vpack.c.b16 %v2782, %v2778
    %v3359 = vpack.c.b16 %v2783, %v2779
    %v3360 = vpack.c.b16 %v2788, %v2784
    %v3361 = vpack.c.b16 %v2789, %v2785
    %v3362 = vpack.c.b16 %v2790, %v2786
    %v3363 = vpack.c.b16 %v2791, %v2787
    %v3364 = vpack.c.b16 %v2796, %v2792
    %v3365 = vpack.c.b16 %v2797, %v2793
    %v3366 = vpack.c.b16 %v2798, %v2794
    %v3367 = vpack.c.b16 %v2799, %v2795
    %v3368 = vpack.c.b16 %v2804, %v2800
    %v3369 = vpack.c.b16 %v2805, %v2801
    %v3370 = vpack.c.b16 %v2806, %v2802
    %v3371 = vpack.c.b16 %v2807, %v2803
    %v3372 = vpack.c.b16 %v2812, %v2808
    %v3373 = vpack.c.b16 %v2813, %v2809
    %v3374 = vpack.c.b16 %v2814, %v2810
    %v3375 = vpack.c.b16 %v2815, %v2811
    %v3376 = vpack.c.b16 %v2820, %v2816
    %v3377 = vpack.c.b16 %v2821, %v2817
    %v3378 = vpack.c.b16 %v2822, %v2818
    %v3379 = vpack.c.b16 %v2823, %v2819
    %v3380 = vpack.c.b16 %v2828, %v2824
    %v3381 = vpack.c.b16 %v2829, %v2825
    %v3382 = vpack.c.b16 %v2830, %v2826
    %v3383 = vpack.c.b16 %v2831, %v2827
    %v3384 = vpack.c.b16 %v2836, %v2832
    %v3385 = vpack.c.b16 %v2837, %v2833
    %v3386 = vpack.c.b16 %v2838, %v2834
    %v3387 = vpack.c.b16 %v2839, %v2835
    %v3388 = vpack.c.b16 %v2844, %v2840
    %v3389 = vpack.c.b16 %v2845, %v2841
    %v3390 = vpack.c.b16 %v2846, %v2842
    %v3391 = vpack.c.b16 %v2847, %v2843
    %v3392 = vpack.c.b16 %v2852, %v2848
    %v3393 = vpack.c.b16 %v2853, %v2849
    %v3394 = vpack.c.b16 %v2854, %v2850
    %v3395 = vpack.c.b16 %v2855, %v2851
    %v3396 = vpack.c.b16 %v2860, %v2856
    %v3397 = vpack.c.b16 %v2861, %v2857
    %v3398 = vpack.c.b16 %v2862, %v2858
    %v3399 = vpack.c.b16 %v2863, %v2859
    %v3400 = vpack.c.b16 %v2868, %v2864
    %v3401 = vpack.c.b16 %v2869, %v2865
    %v3402 = vpack.c.b16 %v2870, %v2866
    %v3403 = vpack.c.b16 %v2871, %v2867
    %v3404 = vpack.c.b16 %v2876, %v2872
    %v3405 = vpack.c.b16 %v2877, %v2873
    %v3406 = vpack.c.b16 %v2878, %v2874
    %v3407 = vpack.c.b16 %v2879, %v2875
    %v3408 = vpack.c.b16 %v2884, %v2880
    %v3409 = vpack.c.b16 %v2885, %v2881
    %v3410 = vpack.c.b16 %v2886, %v2882
    %v3411 = vpack.c.b16 %v2887, %v2883
    %v3412 = vpack.c.b16 %v2892, %v2888
    %v3413 = vpack.c.b16 %v2893, %v2889
    %v3414 = vpack.c.b16 %v2894, %v2890
    %v3415 = vpack.c.b16 %v2895, %v2891
    %v3416 = vpack.c.b16 %v2900, %v2896
    %v3417 = vpack.c.b16 %v2901, %v2897
    %v3418 = vpack.c.b16 %v2902, %v2898
    %v3419 = vpack.c.b16 %v2903, %v2899
    %v3420 = vpack.c.b16 %v2908, %v2904
    %v3421 = vpack.c.b16 %v2909, %v2905
    %v3422 = vpack.c.b16 %v2910, %v2906
    %v3423 = vpack.c.b16 %v2911, %v2907
    %3936 = vmatprep.subr.bf16.mxu0 %v2913
    %3937 = vmatpush1.bf16.msra.mxu0 %v2912
    %3938 = vmatprep.subr.bf16.mxu0 %v2917
    %3939 = vmatpush1.bf16.msra.mxu0 %v2916
    %3940 = vmatprep.subr.bf16.mxu0 %v2921
    %3941 = vmatpush1.bf16.msra.mxu0 %v2920
    %3942 = vmatprep.subr.bf16.mxu0 %v2925
    %3943 = vmatpush1.bf16.msra.mxu0 %v2924
    %3944 = vmatprep.subr.bf16.mxu0 %v2929
    %3945 = vmatpush1.bf16.msra.mxu0 %v2928
    %3946 = vmatprep.subr.bf16.mxu0 %v2933
    %3947 = vmatpush1.bf16.msra.mxu0 %v2932
    %3948 = vmatprep.subr.bf16.mxu0 %v2937
    %3949 = vmatpush1.bf16.msra.mxu0 %v2936
    %3950 = vmatprep.subr.bf16.mxu0 %v2941
    %3951 = vmatpush1.bf16.msra.mxu0 %v2940
    %3952 = vmatprep.subr.bf16.mxu0 %v2945
    %3953 = vmatpush1.bf16.msra.mxu0 %v2944
    %3954 = vmatprep.subr.bf16.mxu0 %v2949
    %3955 = vmatpush1.bf16.msra.mxu0 %v2948
    %3956 = vmatprep.subr.bf16.mxu0 %v2953
    %3957 = vmatpush1.bf16.msra.mxu0 %v2952
    %3958 = vmatprep.subr.bf16.mxu0 %v2957
    %3959 = vmatpush1.bf16.msra.mxu0 %v2956
    %3960 = vmatprep.subr.bf16.mxu0 %v2961
    %3961 = vmatpush1.bf16.msra.mxu0 %v2960
    %3962 = vmatprep.subr.bf16.mxu0 %v2965
    %3963 = vmatpush1.bf16.msra.mxu0 %v2964
    %3964 = vmatprep.subr.bf16.mxu0 %v2969
    %3965 = vmatpush1.bf16.msra.mxu0 %v2968
    %3966 = vmatprep.subr.bf16.mxu0 %v2973
    %3967 = vmatpush1.bf16.msra.mxu0 %v2972
    %3968 = vmatprep.mubr.bf16.mxu0 %v1121
    %3969 = vmatmul.mubr.bf16.gmra.mrb[0].mxu0 %v1120
    %v3970 = vpop.f32.mrb[0].mxu0
    %v3971 = vadd.f32 %v719, %v3970
    %v3972 = vpop.f32.mrb[0].mxu0
    %v3973 = vadd.f32 %v723, %v3972
    %v3974 = vpop.f32.mrb[0].mxu0
    %v3975 = vadd.f32 %v719, %v3974
    %v3976 = vpop.f32.mrb[0].mxu0
    %v3977 = vadd.f32 %v723, %v3976
    %3978 = vmatprep.mubr.bf16.mxu0 %v1137
    %3979 = vmatmul.mubr.bf16.gmra.mrb[0].mxu0 %v1136
    %v3980 = vpop.f32.mrb[0].mxu0
    %v3981 = vadd.f32 %v719, %v3980
    %v3982 = vpop.f32.mrb[0].mxu0
    %v3983 = vadd.f32 %v723, %v3982
    %v3984 = vpop.f32.mrb[0].mxu0
    %v3985 = vadd.f32 %v719, %v3984
    %v3986 = vpop.f32.mrb[0].mxu0
    %v3987 = vadd.f32 %v723, %v3986
    %3988 = vmatprep.mubr.bf16.mxu0 %v1153
    %3989 = vmatmul.mubr.bf16.gmra.mrb[0].mxu0 %v1152
    %v3990 = vpop.f32.mrb[0].mxu0
    %v3991 = vadd.f32 %v719, %v3990
    %v3992 = vpop.f32.mrb[0].mxu0
    %v3993 = vadd.f32 %v723, %v3992
    %v3994 = vpop.f32.mrb[0].mxu0
    %v3995 = vadd.f32 %v719, %v3994
    %v3996 = vpop.f32.mrb[0].mxu0
    %v3997 = vadd.f32 %v723, %v3996
    %3998 = vmatprep.mubr.bf16.mxu0 %v1169
    %3999 = vmatmul.mubr.bf16.gmra.mrb[0].mxu0 %v1168
    %v4000 = vpop.f32.mrb[0].mxu0
    %v4001 = vadd.f32 %v719, %v4000
    %v4002 = vpop.f32.mrb[0].mxu0
    %v4003 = vadd.f32 %v723, %v4002
    %v4004 = vpop.f32.mrb[0].mxu0
    %v4005 = vadd.f32 %v719, %v4004
    %v4006 = vpop.f32.mrb[0].mxu0
    %v4007 = vadd.f32 %v723, %v4006
    %4008 = vmatprep.mubr.bf16.mxu0 %v1185
    %4009 = vmatmul.mubr.bf16.gmra.mrb[0].mxu0 %v1184
    %v4010 = vpop.f32.mrb[0].mxu0
    %v4011 = vadd.f32 %v719, %v4010
    %v4012 = vpop.f32.mrb[0].mxu0
    %v4013 = vadd.f32 %v723, %v4012
    %v4014 = vpop.f32.mrb[0].mxu0
    %v4015 = vadd.f32 %v719, %v4014
    %v4016 = vpop.f32.mrb[0].mxu0
    %v4017 = vadd.f32 %v723, %v4016
    %4018 = vmatprep.mubr.bf16.mxu0 %v1201
    %4019 = vmatmul.mubr.bf16.gmra.mrb[0].mxu0 %v1200
    %v4020 = vpop.f32.mrb[0].mxu0
    %v4021 = vadd.f32 %v719, %v4020
    %v4022 = vpop.f32.mrb[0].mxu0
    %v4023 = vadd.f32 %v723, %v4022
    %v4024 = vpop.f32.mrb[0].mxu0
    %v4025 = vadd.f32 %v719, %v4024
    %v4026 = vpop.f32.mrb[0].mxu0
    %v4027 = vadd.f32 %v723, %v4026
    %4028 = vmatprep.mubr.bf16.mxu0 %v1217
    %4029 = vmatmul.mubr.bf16.gmra.mrb[0].mxu0 %v1216
    %v4030 = vpop.f32.mrb[0].mxu0
    %v4031 = vadd.f32 %v719, %v4030
    %v4032 = vpop.f32.mrb[0].mxu0
    %v4033 = vadd.f32 %v723, %v4032
    %v4034 = vpop.f32.mrb[0].mxu0
    %v4035 = vadd.f32 %v719, %v4034
    %v4036 = vpop.f32.mrb[0].mxu0
    %v4037 = vadd.f32 %v723, %v4036
    %4038 = vmatprep.mubr.bf16.mxu0 %v1233
    %4039 = vmatmul.mubr.bf16.gmra.mrb[0].mxu0 %v1232
    %v4040 = vpop.f32.mrb[0].mxu0
    %v4041 = vadd.f32 %v719, %v4040
    %v4042 = vpop.f32.mrb[0].mxu0
    %v4043 = vadd.f32 %v723, %v4042
    %v4044 = vpop.f32.mrb[0].mxu0
    %v4045 = vadd.f32 %v719, %v4044
    %v4046 = vpop.f32.mrb[0].mxu0
    %v4047 = vadd.f32 %v723, %v4046
    %4048 = vdwg.mxu0
    %4049 = vmatprep.subr.bf16.mxu0 %v2977
    %4050 = vmatpush1.bf16.msra.mxu0 %v2976
    %4051 = vmatprep.subr.bf16.mxu0 %v2981
    %4052 = vmatpush1.bf16.msra.mxu0 %v2980
    %4053 = vmatprep.subr.bf16.mxu0 %v2985
    %4054 = vmatpush1.bf16.msra.mxu0 %v2984
    %4055 = vmatprep.subr.bf16.mxu0 %v2989
    %4056 = vmatpush1.bf16.msra.mxu0 %v2988
    %4057 = vmatprep.subr.bf16.mxu0 %v2993
    %4058 = vmatpush1.bf16.msra.mxu0 %v2992
    %4059 = vmatprep.subr.bf16.mxu0 %v2997
    %4060 = vmatpush1.bf16.msra.mxu0 %v2996
    %4061 = vmatprep.subr.bf16.mxu0 %v3001
    %4062 = vmatpush1.bf16.msra.mxu0 %v3000
    %4063 = vmatprep.subr.bf16.mxu0 %v3005
    %4064 = vmatpush1.bf16.msra.mxu0 %v3004
    %4065 = vmatprep.subr.bf16.mxu0 %v3009
    %4066 = vmatpush1.bf16.msra.mxu0 %v3008
    %4067 = vmatprep.subr.bf16.mxu0 %v3013
    %4068 = vmatpush1.bf16.msra.mxu0 %v3012
    %4069 = vmatprep.subr.bf16.mxu0 %v3017
    %4070 = vmatpush1.bf16.msra.mxu0 %v3016
    %4071 = vmatprep.subr.bf16.mxu0 %v3021
    %4072 = vmatpush1.bf16.msra.mxu0 %v3020
    %4073 = vmatprep.subr.bf16.mxu0 %v3025
    %4074 = vmatpush1.bf16.msra.mxu0 %v3024
    %4075 = vmatprep.subr.bf16.mxu0 %v3029
    %4076 = vmatpush1.bf16.msra.mxu0 %v3028
    %4077 = vmatprep.subr.bf16.mxu0 %v3033
    %4078 = vmatpush1.bf16.msra.mxu0 %v3032
    %4079 = vmatprep.subr.bf16.mxu0 %v3037
    %4080 = vmatpush1.bf16.msra.mxu0 %v3036
    %4081 = vmatprep.mubr.bf16.mxu0 %v1123
    %4082 = vmatmul.mubr.bf16.gmra.mrb[0].mxu0 %v1122
    %v4083 = vpop.f32.mrb[0].mxu0
    %v4084 = vadd.f32 %v3971, %v4083
    %v4085 = vpop.f32.mrb[0].mxu0
    %v4086 = vadd.f32 %v3973, %v4085
    %v4087 = vpop.f32.mrb[0].mxu0
    %v4088 = vadd.f32 %v3975, %v4087
    %v4089 = vpop.f32.mrb[0].mxu0
    %v4090 = vadd.f32 %v3977, %v4089
    %4091 = vmatprep.mubr.bf16.mxu0 %v1139
    %4092 = vmatmul.mubr.bf16.gmra.mrb[0].mxu0 %v1138
    %v4093 = vpop.f32.mrb[0].mxu0
    %v4094 = vadd.f32 %v3981, %v4093
    %v4095 = vpop.f32.mrb[0].mxu0
    %v4096 = vadd.f32 %v3983, %v4095
    %v4097 = vpop.f32.mrb[0].mxu0
    %v4098 = vadd.f32 %v3985, %v4097
    %v4099 = vpop.f32.mrb[0].mxu0
    %v4100 = vadd.f32 %v3987, %v4099
    %4101 = vmatprep.mubr.bf16.mxu0 %v1155
    %4102 = vmatmul.mubr.bf16.gmra.mrb[0].mxu0 %v1154
    %v4103 = vpop.f32.mrb[0].mxu0
    %v4104 = vadd.f32 %v3991, %v4103
    %v4105 = vpop.f32.mrb[0].mxu0
    %v4106 = vadd.f32 %v3993, %v4105
    %v4107 = vpop.f32.mrb[0].mxu0
    %v4108 = vadd.f32 %v3995, %v4107
    %v4109 = vpop.f32.mrb[0].mxu0
    %v4110 = vadd.f32 %v3997, %v4109
    %4111 = vmatprep.mubr.bf16.mxu0 %v1171
    %4112 = vmatmul.mubr.bf16.gmra.mrb[0].mxu0 %v1170
    %v4113 = vpop.f32.mrb[0].mxu0
    %v4114 = vadd.f32 %v4001, %v4113
    %v4115 = vpop.f32.mrb[0].mxu0
    %v4116 = vadd.f32 %v4003, %v4115
    %v4117 = vpop.f32.mrb[0].mxu0
    %v4118 = vadd.f32 %v4005, %v4117
    %v4119 = vpop.f32.mrb[0].mxu0
    %v4120 = vadd.f32 %v4007, %v4119
    %4121 = vmatprep.mubr.bf16.mxu0 %v1187
    %4122 = vmatmul.mubr.bf16.gmra.mrb[0].mxu0 %v1186
    %v4123 = vpop.f32.mrb[0].mxu0
    %v4124 = vadd.f32 %v4011, %v4123
    %v4125 = vpop.f32.mrb[0].mxu0
    %v4126 = vadd.f32 %v4013, %v4125
    %v4127 = vpop.f32.mrb[0].mxu0
    %v4128 = vadd.f32 %v4015, %v4127
    %v4129 = vpop.f32.mrb[0].mxu0
    %v4130 = vadd.f32 %v4017, %v4129
    %4131 = vmatprep.mubr.bf16.mxu0 %v1203
    %4132 = vmatmul.mubr.bf16.gmra.mrb[0].mxu0 %v1202
    %v4133 = vpop.f32.mrb[0].mxu0
    %v4134 = vadd.f32 %v4021, %v4133
    %v4135 = vpop.f32.mrb[0].mxu0
    %v4136 = vadd.f32 %v4023, %v4135
    %v4137 = vpop.f32.mrb[0].mxu0
    %v4138 = vadd.f32 %v4025, %v4137
    %v4139 = vpop.f32.mrb[0].mxu0
    %v4140 = vadd.f32 %v4027, %v4139
    %4141 = vmatprep.mubr.bf16.mxu0 %v1219
    %4142 = vmatmul.mubr.bf16.gmra.mrb[0].mxu0 %v1218
    %v4143 = vpop.f32.mrb[0].mxu0
    %v4144 = vadd.f32 %v4031, %v4143
    %v4145 = vpop.f32.mrb[0].mxu0
    %v4146 = vadd.f32 %v4033, %v4145
    %v4147 = vpop.f32.mrb[0].mxu0
    %v4148 = vadd.f32 %v4035, %v4147
    %v4149 = vpop.f32.mrb[0].mxu0
    %v4150 = vadd.f32 %v4037, %v4149
    %4151 = vmatprep.mubr.bf16.mxu0 %v1235
    %4152 = vmatmul.mubr.bf16.gmra.mrb[0].mxu0 %v1234
    %v4153 = vpop.f32.mrb[0].mxu0
    %v4154 = vadd.f32 %v4041, %v4153
    %v4155 = vpop.f32.mrb[0].mxu0
    %v4156 = vadd.f32 %v4043, %v4155
    %v4157 = vpop.f32.mrb[0].mxu0
    %v4158 = vadd.f32 %v4045, %v4157
    %v4159 = vpop.f32.mrb[0].mxu0
    %v4160 = vadd.f32 %v4047, %v4159
    %4161 = vdwg.mxu0
    %4162 = vmatprep.subr.bf16.mxu0 %v3041
    %4163 = vmatpush1.bf16.msra.mxu0 %v3040
    %4164 = vmatprep.subr.bf16.mxu0 %v3045
    %4165 = vmatpush1.bf16.msra.mxu0 %v3044
    %4166 = vmatprep.subr.bf16.mxu0 %v3049
    %4167 = vmatpush1.bf16.msra.mxu0 %v3048
    %4168 = vmatprep.subr.bf16.mxu0 %v3053
    %4169 = vmatpush1.bf16.msra.mxu0 %v3052
    %4170 = vmatprep.subr.bf16.mxu0 %v3057
    %4171 = vmatpush1.bf16.msra.mxu0 %v3056
    %4172 = vmatprep.subr.bf16.mxu0 %v3061
    %4173 = vmatpush1.bf16.msra.mxu0 %v3060
    %4174 = vmatprep.subr.bf16.mxu0 %v3065
    %4175 = vmatpush1.bf16.msra.mxu0 %v3064
    %4176 = vmatprep.subr.bf16.mxu0 %v3069
    %4177 = vmatpush1.bf16.msra.mxu0 %v3068
    %4178 = vmatprep.subr.bf16.mxu0 %v3073
    %4179 = vmatpush1.bf16.msra.mxu0 %v3072
    %4180 = vmatprep.subr.bf16.mxu0 %v3077
    %4181 = vmatpush1.bf16.msra.mxu0 %v3076
    %4182 = vmatprep.subr.bf16.mxu0 %v3081
    %4183 = vmatpush1.bf16.msra.mxu0 %v3080
    %4184 = vmatprep.subr.bf16.mxu0 %v3085
    %4185 = vmatpush1.bf16.msra.mxu0 %v3084
    %4186 = vmatprep.subr.bf16.mxu0 %v3089
    %4187 = vmatpush1.bf16.msra.mxu0 %v3088
    %4188 = vmatprep.subr.bf16.mxu0 %v3093
    %4189 = vmatpush1.bf16.msra.mxu0 %v3092
    %4190 = vmatprep.subr.bf16.mxu0 %v3097
    %4191 = vmatpush1.bf16.msra.mxu0 %v3096
    %4192 = vmatprep.subr.bf16.mxu0 %v3101
    %4193 = vmatpush1.bf16.msra.mxu0 %v3100
    %4194 = vmatprep.mubr.bf16.mxu0 %v1125
    %4195 = vmatmul.mubr.bf16.gmra.mrb[0].mxu0 %v1124
    %v4196 = vpop.f32.mrb[0].mxu0
    %v4197 = vadd.f32 %v4084, %v4196
    %v4198 = vpop.f32.mrb[0].mxu0
    %v4199 = vadd.f32 %v4086, %v4198
    %v4200 = vpop.f32.mrb[0].mxu0
    %v4201 = vadd.f32 %v4088, %v4200
    %v4202 = vpop.f32.mrb[0].mxu0
    %v4203 = vadd.f32 %v4090, %v4202
    %4204 = vmatprep.mubr.bf16.mxu0 %v1141
    %4205 = vmatmul.mubr.bf16.gmra.mrb[0].mxu0 %v1140
    %v4206 = vpop.f32.mrb[0].mxu0
    %v4207 = vadd.f32 %v4094, %v4206
    %v4208 = vpop.f32.mrb[0].mxu0
    %v4209 = vadd.f32 %v4096, %v4208
    %v4210 = vpop.f32.mrb[0].mxu0
    %v4211 = vadd.f32 %v4098, %v4210
    %v4212 = vpop.f32.mrb[0].mxu0
    %v4213 = vadd.f32 %v4100, %v4212
    %4214 = vmatprep.mubr.bf16.mxu0 %v1157
    %4215 = vmatmul.mubr.bf16.gmra.mrb[0].mxu0 %v1156
    %v4216 = vpop.f32.mrb[0].mxu0
    %v4217 = vadd.f32 %v4104, %v4216
    %v4218 = vpop.f32.mrb[0].mxu0
    %v4219 = vadd.f32 %v4106, %v4218
    %v4220 = vpop.f32.mrb[0].mxu0
    %v4221 = vadd.f32 %v4108, %v4220
    %v4222 = vpop.f32.mrb[0].mxu0
    %v4223 = vadd.f32 %v4110, %v4222
    %4224 = vmatprep.mubr.bf16.mxu0 %v1173
    %4225 = vmatmul.mubr.bf16.gmra.mrb[0].mxu0 %v1172
    %v4226 = vpop.f32.mrb[0].mxu0
    %v4227 = vadd.f32 %v4114, %v4226
    %v4228 = vpop.f32.mrb[0].mxu0
    %v4229 = vadd.f32 %v4116, %v4228
    %v4230 = vpop.f32.mrb[0].mxu0
    %v4231 = vadd.f32 %v4118, %v4230
    %v4232 = vpop.f32.mrb[0].mxu0
    %v4233 = vadd.f32 %v4120, %v4232
    %4234 = vmatprep.mubr.bf16.mxu0 %v1189
    %4235 = vmatmul.mubr.bf16.gmra.mrb[0].mxu0 %v1188
    %v4236 = vpop.f32.mrb[0].mxu0
    %v4237 = vadd.f32 %v4124, %v4236
    %v4238 = vpop.f32.mrb[0].mxu0
    %v4239 = vadd.f32 %v4126, %v4238
    %v4240 = vpop.f32.mrb[0].mxu0
    %v4241 = vadd.f32 %v4128, %v4240
    %v4242 = vpop.f32.mrb[0].mxu0
    %v4243 = vadd.f32 %v4130, %v4242
    %4244 = vmatprep.mubr.bf16.mxu0 %v1205
    %4245 = vmatmul.mubr.bf16.gmra.mrb[0].mxu0 %v1204
    %v4246 = vpop.f32.mrb[0].mxu0
    %v4247 = vadd.f32 %v4134, %v4246
    %v4248 = vpop.f32.mrb[0].mxu0
    %v4249 = vadd.f32 %v4136, %v4248
    %v4250 = vpop.f32.mrb[0].mxu0
    %v4251 = vadd.f32 %v4138, %v4250
    %v4252 = vpop.f32.mrb[0].mxu0
    %v4253 = vadd.f32 %v4140, %v4252
    %4254 = vmatprep.mubr.bf16.mxu0 %v1221
    %4255 = vmatmul.mubr.bf16.gmra.mrb[0].mxu0 %v1220
    %v4256 = vpop.f32.mrb[0].mxu0
    %v4257 = vadd.f32 %v4144, %v4256
    %v4258 = vpop.f32.mrb[0].mxu0
    %v4259 = vadd.f32 %v4146, %v4258
    %v4260 = vpop.f32.mrb[0].mxu0
    %v4261 = vadd.f32 %v4148, %v4260
    %v4262 = vpop.f32.mrb[0].mxu0
    %v4263 = vadd.f32 %v4150, %v4262
    %4264 = vmatprep.mubr.bf16.mxu0 %v1237
    %4265 = vmatmul.mubr.bf16.gmra.mrb[0].mxu0 %v1236
    %v4266 = vpop.f32.mrb[0].mxu0
    %v4267 = vadd.f32 %v4154, %v4266
    %v4268 = vpop.f32.mrb[0].mxu0
    %v4269 = vadd.f32 %v4156, %v4268
    %v4270 = vpop.f32.mrb[0].mxu0
    %v4271 = vadd.f32 %v4158, %v4270
    %v4272 = vpop.f32.mrb[0].mxu0
    %v4273 = vadd.f32 %v4160, %v4272
    %4274 = vdwg.mxu0
    %4275 = vmatprep.subr.bf16.mxu0 %v3105
    %4276 = vmatpush1.bf16.msra.mxu0 %v3104
    %4277 = vmatprep.subr.bf16.mxu0 %v3109
    %4278 = vmatpush1.bf16.msra.mxu0 %v3108
    %4279 = vmatprep.subr.bf16.mxu0 %v3113
    %4280 = vmatpush1.bf16.msra.mxu0 %v3112
    %4281 = vmatprep.subr.bf16.mxu0 %v3117
    %4282 = vmatpush1.bf16.msra.mxu0 %v3116
    %4283 = vmatprep.subr.bf16.mxu0 %v3121
    %4284 = vmatpush1.bf16.msra.mxu0 %v3120
    %4285 = vmatprep.subr.bf16.mxu0 %v3125
    %4286 = vmatpush1.bf16.msra.mxu0 %v3124
    %4287 = vmatprep.subr.bf16.mxu0 %v3129
    %4288 = vmatpush1.bf16.msra.mxu0 %v3128
    %4289 = vmatprep.subr.bf16.mxu0 %v3133
    %4290 = vmatpush1.bf16.msra.mxu0 %v3132
    %4291 = vmatprep.subr.bf16.mxu0 %v3137
    %4292 = vmatpush1.bf16.msra.mxu0 %v3136
    %4293 = vmatprep.subr.bf16.mxu0 %v3141
    %4294 = vmatpush1.bf16.msra.mxu0 %v3140
    %4295 = vmatprep.subr.bf16.mxu0 %v3145
    %4296 = vmatpush1.bf16.msra.mxu0 %v3144
    %4297 = vmatprep.subr.bf16.mxu0 %v3149
    %4298 = vmatpush1.bf16.msra.mxu0 %v3148
    %4299 = vmatprep.subr.bf16.mxu0 %v3153
    %4300 = vmatpush1.bf16.msra.mxu0 %v3152
    %4301 = vmatprep.subr.bf16.mxu0 %v3157
    %4302 = vmatpush1.bf16.msra.mxu0 %v3156
    %4303 = vmatprep.subr.bf16.mxu0 %v3161
    %4304 = vmatpush1.bf16.msra.mxu0 %v3160
    %4305 = vmatprep.subr.bf16.mxu0 %v3165
    %4306 = vmatpush1.bf16.msra.mxu0 %v3164
    %4307 = vmatprep.mubr.bf16.mxu0 %v1127
    %4308 = vmatmul.mubr.bf16.gmra.mrb[0].mxu0 %v1126
    %v4309 = vpop.f32.mrb[0].mxu0
    %v4310 = vadd.f32 %v4197, %v4309
    %v4311 = vpop.f32.mrb[0].mxu0
    %v4312 = vadd.f32 %v4199, %v4311
    %v4313 = vpop.f32.mrb[0].mxu0
    %v4314 = vadd.f32 %v4201, %v4313
    %v4315 = vpop.f32.mrb[0].mxu0
    %v4316 = vadd.f32 %v4203, %v4315
    %4317 = vmatprep.mubr.bf16.mxu0 %v1143
    %4318 = vmatmul.mubr.bf16.gmra.mrb[0].mxu0 %v1142
    %v4319 = vpop.f32.mrb[0].mxu0
    %v4320 = vadd.f32 %v4207, %v4319
    %v4321 = vpop.f32.mrb[0].mxu0
    %v4322 = vadd.f32 %v4209, %v4321
    %v4323 = vpop.f32.mrb[0].mxu0
    %v4324 = vadd.f32 %v4211, %v4323
    %v4325 = vpop.f32.mrb[0].mxu0
    %v4326 = vadd.f32 %v4213, %v4325
    %4327 = vmatprep.mubr.bf16.mxu0 %v1159
    %4328 = vmatmul.mubr.bf16.gmra.mrb[0].mxu0 %v1158
    %v4329 = vpop.f32.mrb[0].mxu0
    %v4330 = vadd.f32 %v4217, %v4329
    %v4331 = vpop.f32.mrb[0].mxu0
    %v4332 = vadd.f32 %v4219, %v4331
    %v4333 = vpop.f32.mrb[0].mxu0
    %v4334 = vadd.f32 %v4221, %v4333
    %v4335 = vpop.f32.mrb[0].mxu0
    %v4336 = vadd.f32 %v4223, %v4335
    %4337 = vmatprep.mubr.bf16.mxu0 %v1175
    %4338 = vmatmul.mubr.bf16.gmra.mrb[0].mxu0 %v1174
    %v4339 = vpop.f32.mrb[0].mxu0
    %v4340 = vadd.f32 %v4227, %v4339
    %v4341 = vpop.f32.mrb[0].mxu0
    %v4342 = vadd.f32 %v4229, %v4341
    %v4343 = vpop.f32.mrb[0].mxu0
    %v4344 = vadd.f32 %v4231, %v4343
    %v4345 = vpop.f32.mrb[0].mxu0
    %v4346 = vadd.f32 %v4233, %v4345
    %4347 = vmatprep.mubr.bf16.mxu0 %v1191
    %4348 = vmatmul.mubr.bf16.gmra.mrb[0].mxu0 %v1190
    %v4349 = vpop.f32.mrb[0].mxu0
    %v4350 = vadd.f32 %v4237, %v4349
    %v4351 = vpop.f32.mrb[0].mxu0
    %v4352 = vadd.f32 %v4239, %v4351
    %v4353 = vpop.f32.mrb[0].mxu0
    %v4354 = vadd.f32 %v4241, %v4353
    %v4355 = vpop.f32.mrb[0].mxu0
    %v4356 = vadd.f32 %v4243, %v4355
    %4357 = vmatprep.mubr.bf16.mxu0 %v1207
    %4358 = vmatmul.mubr.bf16.gmra.mrb[0].mxu0 %v1206
    %v4359 = vpop.f32.mrb[0].mxu0
    %v4360 = vadd.f32 %v4247, %v4359
    %v4361 = vpop.f32.mrb[0].mxu0
    %v4362 = vadd.f32 %v4249, %v4361
    %v4363 = vpop.f32.mrb[0].mxu0
    %v4364 = vadd.f32 %v4251, %v4363
    %v4365 = vpop.f32.mrb[0].mxu0
    %v4366 = vadd.f32 %v4253, %v4365
    %4367 = vmatprep.mubr.bf16.mxu0 %v1223
    %4368 = vmatmul.mubr.bf16.gmra.mrb[0].mxu0 %v1222
    %v4369 = vpop.f32.mrb[0].mxu0
    %v4370 = vadd.f32 %v4257, %v4369
    %v4371 = vpop.f32.mrb[0].mxu0
    %v4372 = vadd.f32 %v4259, %v4371
    %v4373 = vpop.f32.mrb[0].mxu0
    %v4374 = vadd.f32 %v4261, %v4373
    %v4375 = vpop.f32.mrb[0].mxu0
    %v4376 = vadd.f32 %v4263, %v4375
    %4377 = vmatprep.mubr.bf16.mxu0 %v1239
    %4378 = vmatmul.mubr.bf16.gmra.mrb[0].mxu0 %v1238
    %v4379 = vpop.f32.mrb[0].mxu0
    %v4380 = vadd.f32 %v4267, %v4379
    %v4381 = vpop.f32.mrb[0].mxu0
    %v4382 = vadd.f32 %v4269, %v4381
    %v4383 = vpop.f32.mrb[0].mxu0
    %v4384 = vadd.f32 %v4271, %v4383
    %v4385 = vpop.f32.mrb[0].mxu0
    %v4386 = vadd.f32 %v4273, %v4385
    %4387 = vdwg.mxu0
    %4388 = vmatprep.subr.bf16.mxu0 %v3169
    %4389 = vmatpush1.bf16.msra.mxu0 %v3168
    %4390 = vmatprep.subr.bf16.mxu0 %v3173
    %4391 = vmatpush1.bf16.msra.mxu0 %v3172
    %4392 = vmatprep.subr.bf16.mxu0 %v3177
    %4393 = vmatpush1.bf16.msra.mxu0 %v3176
    %4394 = vmatprep.subr.bf16.mxu0 %v3181
    %4395 = vmatpush1.bf16.msra.mxu0 %v3180
    %4396 = vmatprep.subr.bf16.mxu0 %v3185
    %4397 = vmatpush1.bf16.msra.mxu0 %v3184
    %4398 = vmatprep.subr.bf16.mxu0 %v3189
    %4399 = vmatpush1.bf16.msra.mxu0 %v3188
    %4400 = vmatprep.subr.bf16.mxu0 %v3193
    %4401 = vmatpush1.bf16.msra.mxu0 %v3192
    %4402 = vmatprep.subr.bf16.mxu0 %v3197
    %4403 = vmatpush1.bf16.msra.mxu0 %v3196
    %4404 = vmatprep.subr.bf16.mxu0 %v3201
    %4405 = vmatpush1.bf16.msra.mxu0 %v3200
    %4406 = vmatprep.subr.bf16.mxu0 %v3205
    %4407 = vmatpush1.bf16.msra.mxu0 %v3204
    %4408 = vmatprep.subr.bf16.mxu0 %v3209
    %4409 = vmatpush1.bf16.msra.mxu0 %v3208
    %4410 = vmatprep.subr.bf16.mxu0 %v3213
    %4411 = vmatpush1.bf16.msra.mxu0 %v3212
    %4412 = vmatprep.subr.bf16.mxu0 %v3217
    %4413 = vmatpush1.bf16.msra.mxu0 %v3216
    %4414 = vmatprep.subr.bf16.mxu0 %v3221
    %4415 = vmatpush1.bf16.msra.mxu0 %v3220
    %4416 = vmatprep.subr.bf16.mxu0 %v3225
    %4417 = vmatpush1.bf16.msra.mxu0 %v3224
    %4418 = vmatprep.subr.bf16.mxu0 %v3229
    %4419 = vmatpush1.bf16.msra.mxu0 %v3228
    %4420 = vmatprep.mubr.bf16.mxu0 %v1129
    %4421 = vmatmul.mubr.bf16.gmra.mrb[0].mxu0 %v1128
    %v4422 = vpop.f32.mrb[0].mxu0
    %v4423 = vadd.f32 %v4310, %v4422
    %v4424 = vpop.f32.mrb[0].mxu0
    %v4425 = vadd.f32 %v4312, %v4424
    %v4426 = vpop.f32.mrb[0].mxu0
    %v4427 = vadd.f32 %v4314, %v4426
    %v4428 = vpop.f32.mrb[0].mxu0
    %v4429 = vadd.f32 %v4316, %v4428
    %4430 = vmatprep.mubr.bf16.mxu0 %v1145
    %4431 = vmatmul.mubr.bf16.gmra.mrb[0].mxu0 %v1144
    %v4432 = vpop.f32.mrb[0].mxu0
    %v4433 = vadd.f32 %v4320, %v4432
    %v4434 = vpop.f32.mrb[0].mxu0
    %v4435 = vadd.f32 %v4322, %v4434
    %v4436 = vpop.f32.mrb[0].mxu0
    %v4437 = vadd.f32 %v4324, %v4436
    %v4438 = vpop.f32.mrb[0].mxu0
    %v4439 = vadd.f32 %v4326, %v4438
    %4440 = vmatprep.mubr.bf16.mxu0 %v1161
    %4441 = vmatmul.mubr.bf16.gmra.mrb[0].mxu0 %v1160
    %v4442 = vpop.f32.mrb[0].mxu0
    %v4443 = vadd.f32 %v4330, %v4442
    %v4444 = vpop.f32.mrb[0].mxu0
    %v4445 = vadd.f32 %v4332, %v4444
    %v4446 = vpop.f32.mrb[0].mxu0
    %v4447 = vadd.f32 %v4334, %v4446
    %v4448 = vpop.f32.mrb[0].mxu0
    %v4449 = vadd.f32 %v4336, %v4448
    %4450 = vmatprep.mubr.bf16.mxu0 %v1177
    %4451 = vmatmul.mubr.bf16.gmra.mrb[0].mxu0 %v1176
    %v4452 = vpop.f32.mrb[0].mxu0
    %v4453 = vadd.f32 %v4340, %v4452
    %v4454 = vpop.f32.mrb[0].mxu0
    %v4455 = vadd.f32 %v4342, %v4454
    %v4456 = vpop.f32.mrb[0].mxu0
    %v4457 = vadd.f32 %v4344, %v4456
    %v4458 = vpop.f32.mrb[0].mxu0
    %v4459 = vadd.f32 %v4346, %v4458
    %4460 = vmatprep.mubr.bf16.mxu0 %v1193
    %4461 = vmatmul.mubr.bf16.gmra.mrb[0].mxu0 %v1192
    %v4462 = vpop.f32.mrb[0].mxu0
    %v4463 = vadd.f32 %v4350, %v4462
    %v4464 = vpop.f32.mrb[0].mxu0
    %v4465 = vadd.f32 %v4352, %v4464
    %v4466 = vpop.f32.mrb[0].mxu0
    %v4467 = vadd.f32 %v4354, %v4466
    %v4468 = vpop.f32.mrb[0].mxu0
    %v4469 = vadd.f32 %v4356, %v4468
    %4470 = vmatprep.mubr.bf16.mxu0 %v1209
    %4471 = vmatmul.mubr.bf16.gmra.mrb[0].mxu0 %v1208
    %v4472 = vpop.f32.mrb[0].mxu0
    %v4473 = vadd.f32 %v4360, %v4472
    %v4474 = vpop.f32.mrb[0].mxu0
    %v4475 = vadd.f32 %v4362, %v4474
    %v4476 = vpop.f32.mrb[0].mxu0
    %v4477 = vadd.f32 %v4364, %v4476
    %v4478 = vpop.f32.mrb[0].mxu0
    %v4479 = vadd.f32 %v4366, %v4478
    %4480 = vmatprep.mubr.bf16.mxu0 %v1225
    %4481 = vmatmul.mubr.bf16.gmra.mrb[0].mxu0 %v1224
    %v4482 = vpop.f32.mrb[0].mxu0
    %v4483 = vadd.f32 %v4370, %v4482
    %v4484 = vpop.f32.mrb[0].mxu0
    %v4485 = vadd.f32 %v4372, %v4484
    %v4486 = vpop.f32.mrb[0].mxu0
    %v4487 = vadd.f32 %v4374, %v4486
    %v4488 = vpop.f32.mrb[0].mxu0
    %v4489 = vadd.f32 %v4376, %v4488
    %4490 = vmatprep.mubr.bf16.mxu0 %v1241
    %4491 = vmatmul.mubr.bf16.gmra.mrb[0].mxu0 %v1240
    %v4492 = vpop.f32.mrb[0].mxu0
    %v4493 = vadd.f32 %v4380, %v4492
    %v4494 = vpop.f32.mrb[0].mxu0
    %v4495 = vadd.f32 %v4382, %v4494
    %v4496 = vpop.f32.mrb[0].mxu0
    %v4497 = vadd.f32 %v4384, %v4496
    %v4498 = vpop.f32.mrb[0].mxu0
    %v4499 = vadd.f32 %v4386, %v4498
    %4500 = vdwg.mxu0
    %4501 = vmatprep.subr.bf16.mxu0 %v3233
    %4502 = vmatpush1.bf16.msra.mxu0 %v3232
    %4503 = vmatprep.subr.bf16.mxu0 %v3237
    %4504 = vmatpush1.bf16.msra.mxu0 %v3236
    %4505 = vmatprep.subr.bf16.mxu0 %v3241
    %4506 = vmatpush1.bf16.msra.mxu0 %v3240
    %4507 = vmatprep.subr.bf16.mxu0 %v3245
    %4508 = vmatpush1.bf16.msra.mxu0 %v3244
    %4509 = vmatprep.subr.bf16.mxu0 %v3249
    %4510 = vmatpush1.bf16.msra.mxu0 %v3248
    %4511 = vmatprep.subr.bf16.mxu0 %v3253
    %4512 = vmatpush1.bf16.msra.mxu0 %v3252
    %4513 = vmatprep.subr.bf16.mxu0 %v3257
    %4514 = vmatpush1.bf16.msra.mxu0 %v3256
    %4515 = vmatprep.subr.bf16.mxu0 %v3261
    %4516 = vmatpush1.bf16.msra.mxu0 %v3260
    %4517 = vmatprep.subr.bf16.mxu0 %v3265
    %4518 = vmatpush1.bf16.msra.mxu0 %v3264
    %4519 = vmatprep.subr.bf16.mxu0 %v3269
    %4520 = vmatpush1.bf16.msra.mxu0 %v3268
    %4521 = vmatprep.subr.bf16.mxu0 %v3273
    %4522 = vmatpush1.bf16.msra.mxu0 %v3272
    %4523 = vmatprep.subr.bf16.mxu0 %v3277
    %4524 = vmatpush1.bf16.msra.mxu0 %v3276
    %4525 = vmatprep.subr.bf16.mxu0 %v3281
    %4526 = vmatpush1.bf16.msra.mxu0 %v3280
    %4527 = vmatprep.subr.bf16.mxu0 %v3285
    %4528 = vmatpush1.bf16.msra.mxu0 %v3284
    %4529 = vmatprep.subr.bf16.mxu0 %v3289
    %4530 = vmatpush1.bf16.msra.mxu0 %v3288
    %4531 = vmatprep.subr.bf16.mxu0 %v3293
    %4532 = vmatpush1.bf16.msra.mxu0 %v3292
    %4533 = vmatprep.mubr.bf16.mxu0 %v1131
    %4534 = vmatmul.mubr.bf16.gmra.mrb[0].mxu0 %v1130
    %v4535 = vpop.f32.mrb[0].mxu0
    %v4536 = vadd.f32 %v4423, %v4535
    %v4537 = vpop.f32.mrb[0].mxu0
    %v4538 = vadd.f32 %v4425, %v4537
    %v4539 = vpop.f32.mrb[0].mxu0
    %v4540 = vadd.f32 %v4427, %v4539
    %v4541 = vpop.f32.mrb[0].mxu0
    %v4542 = vadd.f32 %v4429, %v4541
    %4543 = vmatprep.mubr.bf16.mxu0 %v1147
    %4544 = vmatmul.mubr.bf16.gmra.mrb[0].mxu0 %v1146
    %v4545 = vpop.f32.mrb[0].mxu0
    %v4546 = vadd.f32 %v4433, %v4545
    %v4547 = vpop.f32.mrb[0].mxu0
    %v4548 = vadd.f32 %v4435, %v4547
    %v4549 = vpop.f32.mrb[0].mxu0
    %v4550 = vadd.f32 %v4437, %v4549
    %v4551 = vpop.f32.mrb[0].mxu0
    %v4552 = vadd.f32 %v4439, %v4551
    %4553 = vmatprep.mubr.bf16.mxu0 %v1163
    %4554 = vmatmul.mubr.bf16.gmra.mrb[0].mxu0 %v1162
    %v4555 = vpop.f32.mrb[0].mxu0
    %v4556 = vadd.f32 %v4443, %v4555
    %v4557 = vpop.f32.mrb[0].mxu0
    %v4558 = vadd.f32 %v4445, %v4557
    %v4559 = vpop.f32.mrb[0].mxu0
    %v4560 = vadd.f32 %v4447, %v4559
    %v4561 = vpop.f32.mrb[0].mxu0
    %v4562 = vadd.f32 %v4449, %v4561
    %4563 = vmatprep.mubr.bf16.mxu0 %v1179
    %4564 = vmatmul.mubr.bf16.gmra.mrb[0].mxu0 %v1178
    %v4565 = vpop.f32.mrb[0].mxu0
    %v4566 = vadd.f32 %v4453, %v4565
    %v4567 = vpop.f32.mrb[0].mxu0
    %v4568 = vadd.f32 %v4455, %v4567
    %v4569 = vpop.f32.mrb[0].mxu0
    %v4570 = vadd.f32 %v4457, %v4569
    %v4571 = vpop.f32.mrb[0].mxu0
    %v4572 = vadd.f32 %v4459, %v4571
    %4573 = vmatprep.mubr.bf16.mxu0 %v1195
    %4574 = vmatmul.mubr.bf16.gmra.mrb[0].mxu0 %v1194
    %v4575 = vpop.f32.mrb[0].mxu0
    %v4576 = vadd.f32 %v4463, %v4575
    %v4577 = vpop.f32.mrb[0].mxu0
    %v4578 = vadd.f32 %v4465, %v4577
    %v4579 = vpop.f32.mrb[0].mxu0
    %v4580 = vadd.f32 %v4467, %v4579
    %v4581 = vpop.f32.mrb[0].mxu0
    %v4582 = vadd.f32 %v4469, %v4581
    %4583 = vmatprep.mubr.bf16.mxu0 %v1211
    %4584 = vmatmul.mubr.bf16.gmra.mrb[0].mxu0 %v1210
    %v4585 = vpop.f32.mrb[0].mxu0
    %v4586 = vadd.f32 %v4473, %v4585
    %v4587 = vpop.f32.mrb[0].mxu0
    %v4588 = vadd.f32 %v4475, %v4587
    %v4589 = vpop.f32.mrb[0].mxu0
    %v4590 = vadd.f32 %v4477, %v4589
    %v4591 = vpop.f32.mrb[0].mxu0
    %v4592 = vadd.f32 %v4479, %v4591
    %4593 = vmatprep.mubr.bf16.mxu0 %v1227
    %4594 = vmatmul.mubr.bf16.gmra.mrb[0].mxu0 %v1226
    %v4595 = vpop.f32.mrb[0].mxu0
    %v4596 = vadd.f32 %v4483, %v4595
    %v4597 = vpop.f32.mrb[0].mxu0
    %v4598 = vadd.f32 %v4485, %v4597
    %v4599 = vpop.f32.mrb[0].mxu0
    %v4600 = vadd.f32 %v4487, %v4599
    %v4601 = vpop.f32.mrb[0].mxu0
    %v4602 = vadd.f32 %v4489, %v4601
    %4603 = vmatprep.mubr.bf16.mxu0 %v1243
    %4604 = vmatmul.mubr.bf16.gmra.mrb[0].mxu0 %v1242
    %v4605 = vpop.f32.mrb[0].mxu0
    %v4606 = vadd.f32 %v4493, %v4605
    %v4607 = vpop.f32.mrb[0].mxu0
    %v4608 = vadd.f32 %v4495, %v4607
    %v4609 = vpop.f32.mrb[0].mxu0
    %v4610 = vadd.f32 %v4497, %v4609
    %v4611 = vpop.f32.mrb[0].mxu0
    %v4612 = vadd.f32 %v4499, %v4611
    %4613 = vdwg.mxu0
    %4614 = vmatprep.subr.bf16.mxu0 %v3297
    %4615 = vmatpush1.bf16.msra.mxu0 %v3296
    %4616 = vmatprep.subr.bf16.mxu0 %v3301
    %4617 = vmatpush1.bf16.msra.mxu0 %v3300
    %4618 = vmatprep.subr.bf16.mxu0 %v3305
    %4619 = vmatpush1.bf16.msra.mxu0 %v3304
    %4620 = vmatprep.subr.bf16.mxu0 %v3309
    %4621 = vmatpush1.bf16.msra.mxu0 %v3308
    %4622 = vmatprep.subr.bf16.mxu0 %v3313
    %4623 = vmatpush1.bf16.msra.mxu0 %v3312
    %4624 = vmatprep.subr.bf16.mxu0 %v3317
    %4625 = vmatpush1.bf16.msra.mxu0 %v3316
    %4626 = vmatprep.subr.bf16.mxu0 %v3321
    %4627 = vmatpush1.bf16.msra.mxu0 %v3320
    %4628 = vmatprep.subr.bf16.mxu0 %v3325
    %4629 = vmatpush1.bf16.msra.mxu0 %v3324
    %4630 = vmatprep.subr.bf16.mxu0 %v3329
    %4631 = vmatpush1.bf16.msra.mxu0 %v3328
    %4632 = vmatprep.subr.bf16.mxu0 %v3333
    %4633 = vmatpush1.bf16.msra.mxu0 %v3332
    %4634 = vmatprep.subr.bf16.mxu0 %v3337
    %4635 = vmatpush1.bf16.msra.mxu0 %v3336
    %4636 = vmatprep.subr.bf16.mxu0 %v3341
    %4637 = vmatpush1.bf16.msra.mxu0 %v3340
    %4638 = vmatprep.subr.bf16.mxu0 %v3345
    %4639 = vmatpush1.bf16.msra.mxu0 %v3344
    %4640 = vmatprep.subr.bf16.mxu0 %v3349
    %4641 = vmatpush1.bf16.msra.mxu0 %v3348
    %4642 = vmatprep.subr.bf16.mxu0 %v3353
    %4643 = vmatpush1.bf16.msra.mxu0 %v3352
    %4644 = vmatprep.subr.bf16.mxu0 %v3357
    %4645 = vmatpush1.bf16.msra.mxu0 %v3356
    %4646 = vmatprep.mubr.bf16.mxu0 %v1133
    %4647 = vmatmul.mubr.bf16.gmra.mrb[0].mxu0 %v1132
    %v4648 = vpop.f32.mrb[0].mxu0
    %v4649 = vadd.f32 %v4536, %v4648
    %v4650 = vpop.f32.mrb[0].mxu0
    %v4651 = vadd.f32 %v4538, %v4650
    %v4652 = vpop.f32.mrb[0].mxu0
    %v4653 = vadd.f32 %v4540, %v4652
    %v4654 = vpop.f32.mrb[0].mxu0
    %v4655 = vadd.f32 %v4542, %v4654
    %4656 = vmatprep.mubr.bf16.mxu0 %v1149
    %4657 = vmatmul.mubr.bf16.gmra.mrb[0].mxu0 %v1148
    %v4658 = vpop.f32.mrb[0].mxu0
    %v4659 = vadd.f32 %v4546, %v4658
    %v4660 = vpop.f32.mrb[0].mxu0
    %v4661 = vadd.f32 %v4548, %v4660
    %v4662 = vpop.f32.mrb[0].mxu0
    %v4663 = vadd.f32 %v4550, %v4662
    %v4664 = vpop.f32.mrb[0].mxu0
    %v4665 = vadd.f32 %v4552, %v4664
    %4666 = vmatprep.mubr.bf16.mxu0 %v1165
    %4667 = vmatmul.mubr.bf16.gmra.mrb[0].mxu0 %v1164
    %v4668 = vpop.f32.mrb[0].mxu0
    %v4669 = vadd.f32 %v4556, %v4668
    %v4670 = vpop.f32.mrb[0].mxu0
    %v4671 = vadd.f32 %v4558, %v4670
    %v4672 = vpop.f32.mrb[0].mxu0
    %v4673 = vadd.f32 %v4560, %v4672
    %v4674 = vpop.f32.mrb[0].mxu0
    %v4675 = vadd.f32 %v4562, %v4674
    %4676 = vmatprep.mubr.bf16.mxu0 %v1181
    %4677 = vmatmul.mubr.bf16.gmra.mrb[0].mxu0 %v1180
    %v4678 = vpop.f32.mrb[0].mxu0
    %v4679 = vadd.f32 %v4566, %v4678
    %v4680 = vpop.f32.mrb[0].mxu0
    %v4681 = vadd.f32 %v4568, %v4680
    %v4682 = vpop.f32.mrb[0].mxu0
    %v4683 = vadd.f32 %v4570, %v4682
    %v4684 = vpop.f32.mrb[0].mxu0
    %v4685 = vadd.f32 %v4572, %v4684
    %4686 = vmatprep.mubr.bf16.mxu0 %v1197
    %4687 = vmatmul.mubr.bf16.gmra.mrb[0].mxu0 %v1196
    %v4688 = vpop.f32.mrb[0].mxu0
    %v4689 = vadd.f32 %v4576, %v4688
    %v4690 = vpop.f32.mrb[0].mxu0
    %v4691 = vadd.f32 %v4578, %v4690
    %v4692 = vpop.f32.mrb[0].mxu0
    %v4693 = vadd.f32 %v4580, %v4692
    %v4694 = vpop.f32.mrb[0].mxu0
    %v4695 = vadd.f32 %v4582, %v4694
    %4696 = vmatprep.mubr.bf16.mxu0 %v1213
    %4697 = vmatmul.mubr.bf16.gmra.mrb[0].mxu0 %v1212
    %v4698 = vpop.f32.mrb[0].mxu0
    %v4699 = vadd.f32 %v4586, %v4698
    %v4700 = vpop.f32.mrb[0].mxu0
    %v4701 = vadd.f32 %v4588, %v4700
    %v4702 = vpop.f32.mrb[0].mxu0
    %v4703 = vadd.f32 %v4590, %v4702
    %v4704 = vpop.f32.mrb[0].mxu0
    %v4705 = vadd.f32 %v4592, %v4704
    %4706 = vmatprep.mubr.bf16.mxu0 %v1229
    %4707 = vmatmul.mubr.bf16.gmra.mrb[0].mxu0 %v1228
    %v4708 = vpop.f32.mrb[0].mxu0
    %v4709 = vadd.f32 %v4596, %v4708
    %v4710 = vpop.f32.mrb[0].mxu0
    %v4711 = vadd.f32 %v4598, %v4710
    %v4712 = vpop.f32.mrb[0].mxu0
    %v4713 = vadd.f32 %v4600, %v4712
    %v4714 = vpop.f32.mrb[0].mxu0
    %v4715 = vadd.f32 %v4602, %v4714
    %4716 = vmatprep.mubr.bf16.mxu0 %v1245
    %4717 = vmatmul.mubr.bf16.gmra.mrb[0].mxu0 %v1244
    %v4718 = vpop.f32.mrb[0].mxu0
    %v4719 = vadd.f32 %v4606, %v4718
    %v4720 = vpop.f32.mrb[0].mxu0
    %v4721 = vadd.f32 %v4608, %v4720
    %v4722 = vpop.f32.mrb[0].mxu0
    %v4723 = vadd.f32 %v4610, %v4722
    %v4724 = vpop.f32.mrb[0].mxu0
    %v4725 = vadd.f32 %v4612, %v4724
    %4726 = vdwg.mxu0
    %4727 = vmatprep.subr.bf16.mxu0 %v3361
    %4728 = vmatpush1.bf16.msra.mxu0 %v3360
    %4729 = vmatprep.subr.bf16.mxu0 %v3365
    %4730 = vmatpush1.bf16.msra.mxu0 %v3364
    %4731 = vmatprep.subr.bf16.mxu0 %v3369
    %4732 = vmatpush1.bf16.msra.mxu0 %v3368
    %4733 = vmatprep.subr.bf16.mxu0 %v3373
    %4734 = vmatpush1.bf16.msra.mxu0 %v3372
    %4735 = vmatprep.subr.bf16.mxu0 %v3377
    %4736 = vmatpush1.bf16.msra.mxu0 %v3376
    %4737 = vmatprep.subr.bf16.mxu0 %v3381
    %4738 = vmatpush1.bf16.msra.mxu0 %v3380
    %4739 = vmatprep.subr.bf16.mxu0 %v3385
    %4740 = vmatpush1.bf16.msra.mxu0 %v3384
    %4741 = vmatprep.subr.bf16.mxu0 %v3389
    %4742 = vmatpush1.bf16.msra.mxu0 %v3388
    %4743 = vmatprep.subr.bf16.mxu0 %v3393
    %4744 = vmatpush1.bf16.msra.mxu0 %v3392
    %4745 = vmatprep.subr.bf16.mxu0 %v3397
    %4746 = vmatpush1.bf16.msra.mxu0 %v3396
    %4747 = vmatprep.subr.bf16.mxu0 %v3401
    %4748 = vmatpush1.bf16.msra.mxu0 %v3400
    %4749 = vmatprep.subr.bf16.mxu0 %v3405
    %4750 = vmatpush1.bf16.msra.mxu0 %v3404
    %4751 = vmatprep.subr.bf16.mxu0 %v3409
    %4752 = vmatpush1.bf16.msra.mxu0 %v3408
    %4753 = vmatprep.subr.bf16.mxu0 %v3413
    %4754 = vmatpush1.bf16.msra.mxu0 %v3412
    %4755 = vmatprep.subr.bf16.mxu0 %v3417
    %4756 = vmatpush1.bf16.msra.mxu0 %v3416
    %4757 = vmatprep.subr.bf16.mxu0 %v3421
    %4758 = vmatpush1.bf16.msra.mxu0 %v3420
    %4759 = vmatprep.mubr.bf16.mxu0 %v1135
    %4760 = vmatmul.mubr.bf16.gmra.mrb[0].mxu0 %v1134
    %v4761 = vpop.f32.mrb[0].mxu0
    %v4762 = vadd.f32 %v4649, %v4761
    %v4763 = vpop.f32.mrb[0].mxu0
    %v4764 = vadd.f32 %v4651, %v4763
    %v4765 = vpop.f32.mrb[0].mxu0
    %v4766 = vadd.f32 %v4653, %v4765
    %v4767 = vpop.f32.mrb[0].mxu0
    %v4768 = vadd.f32 %v4655, %v4767
    %4769 = vmatprep.mubr.bf16.mxu0 %v1151
    %4770 = vmatmul.mubr.bf16.gmra.mrb[0].mxu0 %v1150
    %v4771 = vpop.f32.mrb[0].mxu0
    %v4772 = vadd.f32 %v4659, %v4771
    %v4773 = vpop.f32.mrb[0].mxu0
    %v4774 = vadd.f32 %v4661, %v4773
    %v4775 = vpop.f32.mrb[0].mxu0
    %v4776 = vadd.f32 %v4663, %v4775
    %v4777 = vpop.f32.mrb[0].mxu0
    %v4778 = vadd.f32 %v4665, %v4777
    %4779 = vmatprep.mubr.bf16.mxu0 %v1167
    %4780 = vmatmul.mubr.bf16.gmra.mrb[0].mxu0 %v1166
    %v4781 = vpop.f32.mrb[0].mxu0
    %v4782 = vadd.f32 %v4669, %v4781
    %v4783 = vpop.f32.mrb[0].mxu0
    %v4784 = vadd.f32 %v4671, %v4783
    %v4785 = vpop.f32.mrb[0].mxu0
    %v4786 = vadd.f32 %v4673, %v4785
    %v4787 = vpop.f32.mrb[0].mxu0
    %v4788 = vadd.f32 %v4675, %v4787
    %4789 = vmatprep.mubr.bf16.mxu0 %v1183
    %4790 = vmatmul.mubr.bf16.gmra.mrb[0].mxu0 %v1182
    %v4791 = vpop.f32.mrb[0].mxu0
    %v4792 = vadd.f32 %v4679, %v4791
    %v4793 = vpop.f32.mrb[0].mxu0
    %v4794 = vadd.f32 %v4681, %v4793
    %v4795 = vpop.f32.mrb[0].mxu0
    %v4796 = vadd.f32 %v4683, %v4795
    %v4797 = vpop.f32.mrb[0].mxu0
    %v4798 = vadd.f32 %v4685, %v4797
    %4799 = vmatprep.mubr.bf16.mxu0 %v1199
    %4800 = vmatmul.mubr.bf16.gmra.mrb[0].mxu0 %v1198
    %v4801 = vpop.f32.mrb[0].mxu0
    %v4802 = vadd.f32 %v4689, %v4801
    %v4803 = vpop.f32.mrb[0].mxu0
    %v4804 = vadd.f32 %v4691, %v4803
    %v4805 = vpop.f32.mrb[0].mxu0
    %v4806 = vadd.f32 %v4693, %v4805
    %v4807 = vpop.f32.mrb[0].mxu0
    %v4808 = vadd.f32 %v4695, %v4807
    %4809 = vmatprep.mubr.bf16.mxu0 %v1215
    %4810 = vmatmul.mubr.bf16.gmra.mrb[0].mxu0 %v1214
    %v4811 = vpop.f32.mrb[0].mxu0
    %v4812 = vadd.f32 %v4699, %v4811
    %v4813 = vpop.f32.mrb[0].mxu0
    %v4814 = vadd.f32 %v4701, %v4813
    %v4815 = vpop.f32.mrb[0].mxu0
    %v4816 = vadd.f32 %v4703, %v4815
    %v4817 = vpop.f32.mrb[0].mxu0
    %v4818 = vadd.f32 %v4705, %v4817
    %4819 = vmatprep.mubr.bf16.mxu0 %v1231
    %4820 = vmatmul.mubr.bf16.gmra.mrb[0].mxu0 %v1230
    %v4821 = vpop.f32.mrb[0].mxu0
    %v4822 = vadd.f32 %v4709, %v4821
    %v4823 = vpop.f32.mrb[0].mxu0
    %v4824 = vadd.f32 %v4711, %v4823
    %v4825 = vpop.f32.mrb[0].mxu0
    %v4826 = vadd.f32 %v4713, %v4825
    %v4827 = vpop.f32.mrb[0].mxu0
    %v4828 = vadd.f32 %v4715, %v4827
    %4829 = vmatprep.mubr.bf16.mxu0 %v1247
    %4830 = vmatmul.mubr.bf16.gmra.mrb[0].mxu0 %v1246
    %v4831 = vpop.f32.mrb[0].mxu0
    %v4832 = vadd.f32 %v4719, %v4831
    %v4833 = vpop.f32.mrb[0].mxu0
    %v4834 = vadd.f32 %v4721, %v4833
    %v4835 = vpop.f32.mrb[0].mxu0
    %v4836 = vadd.f32 %v4723, %v4835
    %v4837 = vpop.f32.mrb[0].mxu0
    %v4838 = vadd.f32 %v4725, %v4837
    %4839 = vdwg.mxu0
    %4840 = vmatprep.subr.bf16.mxu0 %v2915
    %4841 = vmatpush1.bf16.msra.mxu0 %v2914
    %4842 = vmatprep.subr.bf16.mxu0 %v2919
    %4843 = vmatpush1.bf16.msra.mxu0 %v2918
    %4844 = vmatprep.subr.bf16.mxu0 %v2923
    %4845 = vmatpush1.bf16.msra.mxu0 %v2922
    %4846 = vmatprep.subr.bf16.mxu0 %v2927
    %4847 = vmatpush1.bf16.msra.mxu0 %v2926
    %4848 = vmatprep.subr.bf16.mxu0 %v2931
    %4849 = vmatpush1.bf16.msra.mxu0 %v2930
    %4850 = vmatprep.subr.bf16.mxu0 %v2935
    %4851 = vmatpush1.bf16.msra.mxu0 %v2934
    %4852 = vmatprep.subr.bf16.mxu0 %v2939
    %4853 = vmatpush1.bf16.msra.mxu0 %v2938
    %4854 = vmatprep.subr.bf16.mxu0 %v2943
    %4855 = vmatpush1.bf16.msra.mxu0 %v2942
    %4856 = vmatprep.subr.bf16.mxu0 %v2947
    %4857 = vmatpush1.bf16.msra.mxu0 %v2946
    %4858 = vmatprep.subr.bf16.mxu0 %v2951
    %4859 = vmatpush1.bf16.msra.mxu0 %v2950
    %4860 = vmatprep.subr.bf16.mxu0 %v2955
    %4861 = vmatpush1.bf16.msra.mxu0 %v2954
    %4862 = vmatprep.subr.bf16.mxu0 %v2959
    %4863 = vmatpush1.bf16.msra.mxu0 %v2958
    %4864 = vmatprep.subr.bf16.mxu0 %v2963
    %4865 = vmatpush1.bf16.msra.mxu0 %v2962
    %4866 = vmatprep.subr.bf16.mxu0 %v2967
    %4867 = vmatpush1.bf16.msra.mxu0 %v2966
    %4868 = vmatprep.subr.bf16.mxu0 %v2971
    %4869 = vmatpush1.bf16.msra.mxu0 %v2970
    %4870 = vmatprep.subr.bf16.mxu0 %v2975
    %4871 = vmatpush1.bf16.msra.mxu0 %v2974
    %4872 = vmatprep.mubr.bf16.mxu0 %v1121
    %4873 = vmatmul.mubr.bf16.gmra.mrb[0].mxu0 %v1120
    %v4874 = vpop.f32.mrb[0].mxu0
    %v4875 = vadd.f32 %v727, %v4874
    %v4876 = vpop.f32.mrb[0].mxu0
    %v4877 = vadd.f32 %v731, %v4876
    %v4878 = vpop.f32.mrb[0].mxu0
    %v4879 = vadd.f32 %v727, %v4878
    %v4880 = vpop.f32.mrb[0].mxu0
    %v4881 = vadd.f32 %v731, %v4880
    %4882 = vmatprep.mubr.bf16.mxu0 %v1137
    %4883 = vmatmul.mubr.bf16.gmra.mrb[0].mxu0 %v1136
    %v4884 = vpop.f32.mrb[0].mxu0
    %v4885 = vadd.f32 %v727, %v4884
    %v4886 = vpop.f32.mrb[0].mxu0
    %v4887 = vadd.f32 %v731, %v4886
    %v4888 = vpop.f32.mrb[0].mxu0
    %v4889 = vadd.f32 %v727, %v4888
    %v4890 = vpop.f32.mrb[0].mxu0
    %v4891 = vadd.f32 %v731, %v4890
    %4892 = vmatprep.mubr.bf16.mxu0 %v1153
    %4893 = vmatmul.mubr.bf16.gmra.mrb[0].mxu0 %v1152
    %v4894 = vpop.f32.mrb[0].mxu0
    %v4895 = vadd.f32 %v727, %v4894
    %v4896 = vpop.f32.mrb[0].mxu0
    %v4897 = vadd.f32 %v731, %v4896
    %v4898 = vpop.f32.mrb[0].mxu0
    %v4899 = vadd.f32 %v727, %v4898
    %v4900 = vpop.f32.mrb[0].mxu0
    %v4901 = vadd.f32 %v731, %v4900
    %4902 = vmatprep.mubr.bf16.mxu0 %v1169
    %4903 = vmatmul.mubr.bf16.gmra.mrb[0].mxu0 %v1168
    %v4904 = vpop.f32.mrb[0].mxu0
    %v4905 = vadd.f32 %v727, %v4904
    %v4906 = vpop.f32.mrb[0].mxu0
    %v4907 = vadd.f32 %v731, %v4906
    %v4908 = vpop.f32.mrb[0].mxu0
    %v4909 = vadd.f32 %v727, %v4908
    %v4910 = vpop.f32.mrb[0].mxu0
    %v4911 = vadd.f32 %v731, %v4910
    %4912 = vmatprep.mubr.bf16.mxu0 %v1185
    %4913 = vmatmul.mubr.bf16.gmra.mrb[0].mxu0 %v1184
    %v4914 = vpop.f32.mrb[0].mxu0
    %v4915 = vadd.f32 %v727, %v4914
    %v4916 = vpop.f32.mrb[0].mxu0
    %v4917 = vadd.f32 %v731, %v4916
    %v4918 = vpop.f32.mrb[0].mxu0
    %v4919 = vadd.f32 %v727, %v4918
    %v4920 = vpop.f32.mrb[0].mxu0
    %v4921 = vadd.f32 %v731, %v4920
    %4922 = vmatprep.mubr.bf16.mxu0 %v1201
    %4923 = vmatmul.mubr.bf16.gmra.mrb[0].mxu0 %v1200
    %v4924 = vpop.f32.mrb[0].mxu0
    %v4925 = vadd.f32 %v727, %v4924
    %v4926 = vpop.f32.mrb[0].mxu0
    %v4927 = vadd.f32 %v731, %v4926
    %v4928 = vpop.f32.mrb[0].mxu0
    %v4929 = vadd.f32 %v727, %v4928
    %v4930 = vpop.f32.mrb[0].mxu0
    %v4931 = vadd.f32 %v731, %v4930
    %4932 = vmatprep.mubr.bf16.mxu0 %v1217
    %4933 = vmatmul.mubr.bf16.gmra.mrb[0].mxu0 %v1216
    %v4934 = vpop.f32.mrb[0].mxu0
    %v4935 = vadd.f32 %v727, %v4934
    %v4936 = vpop.f32.mrb[0].mxu0
    %v4937 = vadd.f32 %v731, %v4936
    %v4938 = vpop.f32.mrb[0].mxu0
    %v4939 = vadd.f32 %v727, %v4938
    %v4940 = vpop.f32.mrb[0].mxu0
    %v4941 = vadd.f32 %v731, %v4940
    %4942 = vmatprep.mubr.bf16.mxu0 %v1233
    %4943 = vmatmul.mubr.bf16.gmra.mrb[0].mxu0 %v1232
    %v4944 = vpop.f32.mrb[0].mxu0
    %v4945 = vadd.f32 %v727, %v4944
    %v4946 = vpop.f32.mrb[0].mxu0
    %v4947 = vadd.f32 %v731, %v4946
    %v4948 = vpop.f32.mrb[0].mxu0
    %v4949 = vadd.f32 %v727, %v4948
    %v4950 = vpop.f32.mrb[0].mxu0
    %v4951 = vadd.f32 %v731, %v4950
    %4952 = vdwg.mxu0
    %4953 = vmatprep.subr.bf16.mxu0 %v2979
    %4954 = vmatpush1.bf16.msra.mxu0 %v2978
    %4955 = vmatprep.subr.bf16.mxu0 %v2983
    %4956 = vmatpush1.bf16.msra.mxu0 %v2982
    %4957 = vmatprep.subr.bf16.mxu0 %v2987
    %4958 = vmatpush1.bf16.msra.mxu0 %v2986
    %4959 = vmatprep.subr.bf16.mxu0 %v2991
    %4960 = vmatpush1.bf16.msra.mxu0 %v2990
    %4961 = vmatprep.subr.bf16.mxu0 %v2995
    %4962 = vmatpush1.bf16.msra.mxu0 %v2994
    %4963 = vmatprep.subr.bf16.mxu0 %v2999
    %4964 = vmatpush1.bf16.msra.mxu0 %v2998
    %4965 = vmatprep.subr.bf16.mxu0 %v3003
    %4966 = vmatpush1.bf16.msra.mxu0 %v3002
    %4967 = vmatprep.subr.bf16.mxu0 %v3007
    %4968 = vmatpush1.bf16.msra.mxu0 %v3006
    %4969 = vmatprep.subr.bf16.mxu0 %v3011
    %4970 = vmatpush1.bf16.msra.mxu0 %v3010
    %4971 = vmatprep.subr.bf16.mxu0 %v3015
    %4972 = vmatpush1.bf16.msra.mxu0 %v3014
    %4973 = vmatprep.subr.bf16.mxu0 %v3019
    %4974 = vmatpush1.bf16.msra.mxu0 %v3018
    %4975 = vmatprep.subr.bf16.mxu0 %v3023
    %4976 = vmatpush1.bf16.msra.mxu0 %v3022
    %4977 = vmatprep.subr.bf16.mxu0 %v3027
    %4978 = vmatpush1.bf16.msra.mxu0 %v3026
    %4979 = vmatprep.subr.bf16.mxu0 %v3031
    %4980 = vmatpush1.bf16.msra.mxu0 %v3030
    %4981 = vmatprep.subr.bf16.mxu0 %v3035
    %4982 = vmatpush1.bf16.msra.mxu0 %v3034
    %4983 = vmatprep.subr.bf16.mxu0 %v3039
    %4984 = vmatpush1.bf16.msra.mxu0 %v3038
    %4985 = vmatprep.mubr.bf16.mxu0 %v1123
    %4986 = vmatmul.mubr.bf16.gmra.mrb[0].mxu0 %v1122
    %v4987 = vpop.f32.mrb[0].mxu0
    %v4988 = vadd.f32 %v4875, %v4987
    %v4989 = vpop.f32.mrb[0].mxu0
    %v4990 = vadd.f32 %v4877, %v4989
    %v4991 = vpop.f32.mrb[0].mxu0
    %v4992 = vadd.f32 %v4879, %v4991
    %v4993 = vpop.f32.mrb[0].mxu0
    %v4994 = vadd.f32 %v4881, %v4993
    %4995 = vmatprep.mubr.bf16.mxu0 %v1139
    %4996 = vmatmul.mubr.bf16.gmra.mrb[0].mxu0 %v1138
    %v4997 = vpop.f32.mrb[0].mxu0
    %v4998 = vadd.f32 %v4885, %v4997
    %v4999 = vpop.f32.mrb[0].mxu0
    %v5000 = vadd.f32 %v4887, %v4999
    %v5001 = vpop.f32.mrb[0].mxu0
    %v5002 = vadd.f32 %v4889, %v5001
    %v5003 = vpop.f32.mrb[0].mxu0
    %v5004 = vadd.f32 %v4891, %v5003
    %5005 = vmatprep.mubr.bf16.mxu0 %v1155
    %5006 = vmatmul.mubr.bf16.gmra.mrb[0].mxu0 %v1154
    %v5007 = vpop.f32.mrb[0].mxu0
    %v5008 = vadd.f32 %v4895, %v5007
    %v5009 = vpop.f32.mrb[0].mxu0
    %v5010 = vadd.f32 %v4897, %v5009
    %v5011 = vpop.f32.mrb[0].mxu0
    %v5012 = vadd.f32 %v4899, %v5011
    %v5013 = vpop.f32.mrb[0].mxu0
    %v5014 = vadd.f32 %v4901, %v5013
    %5015 = vmatprep.mubr.bf16.mxu0 %v1171
    %5016 = vmatmul.mubr.bf16.gmra.mrb[0].mxu0 %v1170
    %v5017 = vpop.f32.mrb[0].mxu0
    %v5018 = vadd.f32 %v4905, %v5017
    %v5019 = vpop.f32.mrb[0].mxu0
    %v5020 = vadd.f32 %v4907, %v5019
    %v5021 = vpop.f32.mrb[0].mxu0
    %v5022 = vadd.f32 %v4909, %v5021
    %v5023 = vpop.f32.mrb[0].mxu0
    %v5024 = vadd.f32 %v4911, %v5023
    %5025 = vmatprep.mubr.bf16.mxu0 %v1187
    %5026 = vmatmul.mubr.bf16.gmra.mrb[0].mxu0 %v1186
    %v5027 = vpop.f32.mrb[0].mxu0
    %v5028 = vadd.f32 %v4915, %v5027
    %v5029 = vpop.f32.mrb[0].mxu0
    %v5030 = vadd.f32 %v4917, %v5029
    %v5031 = vpop.f32.mrb[0].mxu0
    %v5032 = vadd.f32 %v4919, %v5031
    %v5033 = vpop.f32.mrb[0].mxu0
    %v5034 = vadd.f32 %v4921, %v5033
    %5035 = vmatprep.mubr.bf16.mxu0 %v1203
    %5036 = vmatmul.mubr.bf16.gmra.mrb[0].mxu0 %v1202
    %v5037 = vpop.f32.mrb[0].mxu0
    %v5038 = vadd.f32 %v4925, %v5037
    %v5039 = vpop.f32.mrb[0].mxu0
    %v5040 = vadd.f32 %v4927, %v5039
    %v5041 = vpop.f32.mrb[0].mxu0
    %v5042 = vadd.f32 %v4929, %v5041
    %v5043 = vpop.f32.mrb[0].mxu0
    %v5044 = vadd.f32 %v4931, %v5043
    %5045 = vmatprep.mubr.bf16.mxu0 %v1219
    %5046 = vmatmul.mubr.bf16.gmra.mrb[0].mxu0 %v1218
    %v5047 = vpop.f32.mrb[0].mxu0
    %v5048 = vadd.f32 %v4935, %v5047
    %v5049 = vpop.f32.mrb[0].mxu0
    %v5050 = vadd.f32 %v4937, %v5049
    %v5051 = vpop.f32.mrb[0].mxu0
    %v5052 = vadd.f32 %v4939, %v5051
    %v5053 = vpop.f32.mrb[0].mxu0
    %v5054 = vadd.f32 %v4941, %v5053
    %5055 = vmatprep.mubr.bf16.mxu0 %v1235
    %5056 = vmatmul.mubr.bf16.gmra.mrb[0].mxu0 %v1234
    %v5057 = vpop.f32.mrb[0].mxu0
    %v5058 = vadd.f32 %v4945, %v5057
    %v5059 = vpop.f32.mrb[0].mxu0
    %v5060 = vadd.f32 %v4947, %v5059
    %v5061 = vpop.f32.mrb[0].mxu0
    %v5062 = vadd.f32 %v4949, %v5061
    %v5063 = vpop.f32.mrb[0].mxu0
    %v5064 = vadd.f32 %v4951, %v5063
    %5065 = vdwg.mxu0
    %5066 = vmatprep.subr.bf16.mxu0 %v3043
    %5067 = vmatpush1.bf16.msra.mxu0 %v3042
    %5068 = vmatprep.subr.bf16.mxu0 %v3047
    %5069 = vmatpush1.bf16.msra.mxu0 %v3046
    %5070 = vmatprep.subr.bf16.mxu0 %v3051
    %5071 = vmatpush1.bf16.msra.mxu0 %v3050
    %5072 = vmatprep.subr.bf16.mxu0 %v3055
    %5073 = vmatpush1.bf16.msra.mxu0 %v3054
    %5074 = vmatprep.subr.bf16.mxu0 %v3059
    %5075 = vmatpush1.bf16.msra.mxu0 %v3058
    %5076 = vmatprep.subr.bf16.mxu0 %v3063
    %5077 = vmatpush1.bf16.msra.mxu0 %v3062
    %5078 = vmatprep.subr.bf16.mxu0 %v3067
    %5079 = vmatpush1.bf16.msra.mxu0 %v3066
    %5080 = vmatprep.subr.bf16.mxu0 %v3071
    %5081 = vmatpush1.bf16.msra.mxu0 %v3070
    %5082 = vmatprep.subr.bf16.mxu0 %v3075
    %5083 = vmatpush1.bf16.msra.mxu0 %v3074
    %5084 = vmatprep.subr.bf16.mxu0 %v3079
    %5085 = vmatpush1.bf16.msra.mxu0 %v3078
    %5086 = vmatprep.subr.bf16.mxu0 %v3083
    %5087 = vmatpush1.bf16.msra.mxu0 %v3082
    %5088 = vmatprep.subr.bf16.mxu0 %v3087
    %5089 = vmatpush1.bf16.msra.mxu0 %v3086
    %5090 = vmatprep.subr.bf16.mxu0 %v3091
    %5091 = vmatpush1.bf16.msra.mxu0 %v3090
    %5092 = vmatprep.subr.bf16.mxu0 %v3095
    %5093 = vmatpush1.bf16.msra.mxu0 %v3094
    %5094 = vmatprep.subr.bf16.mxu0 %v3099
    %5095 = vmatpush1.bf16.msra.mxu0 %v3098
    %5096 = vmatprep.subr.bf16.mxu0 %v3103
    %5097 = vmatpush1.bf16.msra.mxu0 %v3102
    %5098 = vmatprep.mubr.bf16.mxu0 %v1125
    %5099 = vmatmul.mubr.bf16.gmra.mrb[0].mxu0 %v1124
    %v5100 = vpop.f32.mrb[0].mxu0
    %v5101 = vadd.f32 %v4988, %v5100
    %v5102 = vpop.f32.mrb[0].mxu0
    %v5103 = vadd.f32 %v4990, %v5102
    %v5104 = vpop.f32.mrb[0].mxu0
    %v5105 = vadd.f32 %v4992, %v5104
    %v5106 = vpop.f32.mrb[0].mxu0
    %v5107 = vadd.f32 %v4994, %v5106
    %5108 = vmatprep.mubr.bf16.mxu0 %v1141
    %5109 = vmatmul.mubr.bf16.gmra.mrb[0].mxu0 %v1140
    %v5110 = vpop.f32.mrb[0].mxu0
    %v5111 = vadd.f32 %v4998, %v5110
    %v5112 = vpop.f32.mrb[0].mxu0
    %v5113 = vadd.f32 %v5000, %v5112
    %v5114 = vpop.f32.mrb[0].mxu0
    %v5115 = vadd.f32 %v5002, %v5114
    %v5116 = vpop.f32.mrb[0].mxu0
    %v5117 = vadd.f32 %v5004, %v5116
    %5118 = vmatprep.mubr.bf16.mxu0 %v1157
    %5119 = vmatmul.mubr.bf16.gmra.mrb[0].mxu0 %v1156
    %v5120 = vpop.f32.mrb[0].mxu0
    %v5121 = vadd.f32 %v5008, %v5120
    %v5122 = vpop.f32.mrb[0].mxu0
    %v5123 = vadd.f32 %v5010, %v5122
    %v5124 = vpop.f32.mrb[0].mxu0
    %v5125 = vadd.f32 %v5012, %v5124
    %v5126 = vpop.f32.mrb[0].mxu0
    %v5127 = vadd.f32 %v5014, %v5126
    %5128 = vmatprep.mubr.bf16.mxu0 %v1173
    %5129 = vmatmul.mubr.bf16.gmra.mrb[0].mxu0 %v1172
    %v5130 = vpop.f32.mrb[0].mxu0
    %v5131 = vadd.f32 %v5018, %v5130
    %v5132 = vpop.f32.mrb[0].mxu0
    %v5133 = vadd.f32 %v5020, %v5132
    %v5134 = vpop.f32.mrb[0].mxu0
    %v5135 = vadd.f32 %v5022, %v5134
    %v5136 = vpop.f32.mrb[0].mxu0
    %v5137 = vadd.f32 %v5024, %v5136
    %5138 = vmatprep.mubr.bf16.mxu0 %v1189
    %5139 = vmatmul.mubr.bf16.gmra.mrb[0].mxu0 %v1188
    %v5140 = vpop.f32.mrb[0].mxu0
    %v5141 = vadd.f32 %v5028, %v5140
    %v5142 = vpop.f32.mrb[0].mxu0
    %v5143 = vadd.f32 %v5030, %v5142
    %v5144 = vpop.f32.mrb[0].mxu0
    %v5145 = vadd.f32 %v5032, %v5144
    %v5146 = vpop.f32.mrb[0].mxu0
    %v5147 = vadd.f32 %v5034, %v5146
    %5148 = vmatprep.mubr.bf16.mxu0 %v1205
    %5149 = vmatmul.mubr.bf16.gmra.mrb[0].mxu0 %v1204
    %v5150 = vpop.f32.mrb[0].mxu0
    %v5151 = vadd.f32 %v5038, %v5150
    %v5152 = vpop.f32.mrb[0].mxu0
    %v5153 = vadd.f32 %v5040, %v5152
    %v5154 = vpop.f32.mrb[0].mxu0
    %v5155 = vadd.f32 %v5042, %v5154
    %v5156 = vpop.f32.mrb[0].mxu0
    %v5157 = vadd.f32 %v5044, %v5156
    %5158 = vmatprep.mubr.bf16.mxu0 %v1221
    %5159 = vmatmul.mubr.bf16.gmra.mrb[0].mxu0 %v1220
    %v5160 = vpop.f32.mrb[0].mxu0
    %v5161 = vadd.f32 %v5048, %v5160
    %v5162 = vpop.f32.mrb[0].mxu0
    %v5163 = vadd.f32 %v5050, %v5162
    %v5164 = vpop.f32.mrb[0].mxu0
    %v5165 = vadd.f32 %v5052, %v5164
    %v5166 = vpop.f32.mrb[0].mxu0
    %v5167 = vadd.f32 %v5054, %v5166
    %5168 = vmatprep.mubr.bf16.mxu0 %v1237
    %5169 = vmatmul.mubr.bf16.gmra.mrb[0].mxu0 %v1236
    %v5170 = vpop.f32.mrb[0].mxu0
    %v5171 = vadd.f32 %v5058, %v5170
    %v5172 = vpop.f32.mrb[0].mxu0
    %v5173 = vadd.f32 %v5060, %v5172
    %v5174 = vpop.f32.mrb[0].mxu0
    %v5175 = vadd.f32 %v5062, %v5174
    %v5176 = vpop.f32.mrb[0].mxu0
    %v5177 = vadd.f32 %v5064, %v5176
    %5178 = vdwg.mxu0
    %5179 = vmatprep.subr.bf16.mxu0 %v3107
    %5180 = vmatpush1.bf16.msra.mxu0 %v3106
    %5181 = vmatprep.subr.bf16.mxu0 %v3111
    %5182 = vmatpush1.bf16.msra.mxu0 %v3110
    %5183 = vmatprep.subr.bf16.mxu0 %v3115
    %5184 = vmatpush1.bf16.msra.mxu0 %v3114
    %5185 = vmatprep.subr.bf16.mxu0 %v3119
    %5186 = vmatpush1.bf16.msra.mxu0 %v3118
    %5187 = vmatprep.subr.bf16.mxu0 %v3123
    %5188 = vmatpush1.bf16.msra.mxu0 %v3122
    %5189 = vmatprep.subr.bf16.mxu0 %v3127
    %5190 = vmatpush1.bf16.msra.mxu0 %v3126
    %5191 = vmatprep.subr.bf16.mxu0 %v3131
    %5192 = vmatpush1.bf16.msra.mxu0 %v3130
    %5193 = vmatprep.subr.bf16.mxu0 %v3135
    %5194 = vmatpush1.bf16.msra.mxu0 %v3134
    %5195 = vmatprep.subr.bf16.mxu0 %v3139
    %5196 = vmatpush1.bf16.msra.mxu0 %v3138
    %5197 = vmatprep.subr.bf16.mxu0 %v3143
    %5198 = vmatpush1.bf16.msra.mxu0 %v3142
    %5199 = vmatprep.subr.bf16.mxu0 %v3147
    %5200 = vmatpush1.bf16.msra.mxu0 %v3146
    %5201 = vmatprep.subr.bf16.mxu0 %v3151
    %5202 = vmatpush1.bf16.msra.mxu0 %v3150
    %5203 = vmatprep.subr.bf16.mxu0 %v3155
    %5204 = vmatpush1.bf16.msra.mxu0 %v3154
    %5205 = vmatprep.subr.bf16.mxu0 %v3159
    %5206 = vmatpush1.bf16.msra.mxu0 %v3158
    %5207 = vmatprep.subr.bf16.mxu0 %v3163
    %5208 = vmatpush1.bf16.msra.mxu0 %v3162
    %5209 = vmatprep.subr.bf16.mxu0 %v3167
    %5210 = vmatpush1.bf16.msra.mxu0 %v3166
    %5211 = vmatprep.mubr.bf16.mxu0 %v1127
    %5212 = vmatmul.mubr.bf16.gmra.mrb[0].mxu0 %v1126
    %v5213 = vpop.f32.mrb[0].mxu0
    %v5214 = vadd.f32 %v5101, %v5213
    %v5215 = vpop.f32.mrb[0].mxu0
    %v5216 = vadd.f32 %v5103, %v5215
    %v5217 = vpop.f32.mrb[0].mxu0
    %v5218 = vadd.f32 %v5105, %v5217
    %v5219 = vpop.f32.mrb[0].mxu0
    %v5220 = vadd.f32 %v5107, %v5219
    %5221 = vmatprep.mubr.bf16.mxu0 %v1143
    %5222 = vmatmul.mubr.bf16.gmra.mrb[0].mxu0 %v1142
    %v5223 = vpop.f32.mrb[0].mxu0
    %v5224 = vadd.f32 %v5111, %v5223
    %v5225 = vpop.f32.mrb[0].mxu0
    %v5226 = vadd.f32 %v5113, %v5225
    %v5227 = vpop.f32.mrb[0].mxu0
    %v5228 = vadd.f32 %v5115, %v5227
    %v5229 = vpop.f32.mrb[0].mxu0
    %v5230 = vadd.f32 %v5117, %v5229
    %5231 = vmatprep.mubr.bf16.mxu0 %v1159
    %5232 = vmatmul.mubr.bf16.gmra.mrb[0].mxu0 %v1158
    %v5233 = vpop.f32.mrb[0].mxu0
    %v5234 = vadd.f32 %v5121, %v5233
    %v5235 = vpop.f32.mrb[0].mxu0
    %v5236 = vadd.f32 %v5123, %v5235
    %v5237 = vpop.f32.mrb[0].mxu0
    %v5238 = vadd.f32 %v5125, %v5237
    %v5239 = vpop.f32.mrb[0].mxu0
    %v5240 = vadd.f32 %v5127, %v5239
    %5241 = vmatprep.mubr.bf16.mxu0 %v1175
    %5242 = vmatmul.mubr.bf16.gmra.mrb[0].mxu0 %v1174
    %v5243 = vpop.f32.mrb[0].mxu0
    %v5244 = vadd.f32 %v5131, %v5243
    %v5245 = vpop.f32.mrb[0].mxu0
    %v5246 = vadd.f32 %v5133, %v5245
    %v5247 = vpop.f32.mrb[0].mxu0
    %v5248 = vadd.f32 %v5135, %v5247
    %v5249 = vpop.f32.mrb[0].mxu0
    %v5250 = vadd.f32 %v5137, %v5249
    %5251 = vmatprep.mubr.bf16.mxu0 %v1191
    %5252 = vmatmul.mubr.bf16.gmra.mrb[0].mxu0 %v1190
    %v5253 = vpop.f32.mrb[0].mxu0
    %v5254 = vadd.f32 %v5141, %v5253
    %v5255 = vpop.f32.mrb[0].mxu0
    %v5256 = vadd.f32 %v5143, %v5255
    %v5257 = vpop.f32.mrb[0].mxu0
    %v5258 = vadd.f32 %v5145, %v5257
    %v5259 = vpop.f32.mrb[0].mxu0
    %v5260 = vadd.f32 %v5147, %v5259
    %5261 = vmatprep.mubr.bf16.mxu0 %v1207
    %5262 = vmatmul.mubr.bf16.gmra.mrb[0].mxu0 %v1206
    %v5263 = vpop.f32.mrb[0].mxu0
    %v5264 = vadd.f32 %v5151, %v5263
    %v5265 = vpop.f32.mrb[0].mxu0
    %v5266 = vadd.f32 %v5153, %v5265
    %v5267 = vpop.f32.mrb[0].mxu0
    %v5268 = vadd.f32 %v5155, %v5267
    %v5269 = vpop.f32.mrb[0].mxu0
    %v5270 = vadd.f32 %v5157, %v5269
    %5271 = vmatprep.mubr.bf16.mxu0 %v1223
    %5272 = vmatmul.mubr.bf16.gmra.mrb[0].mxu0 %v1222
    %v5273 = vpop.f32.mrb[0].mxu0
    %v5274 = vadd.f32 %v5161, %v5273
    %v5275 = vpop.f32.mrb[0].mxu0
    %v5276 = vadd.f32 %v5163, %v5275
    %v5277 = vpop.f32.mrb[0].mxu0
    %v5278 = vadd.f32 %v5165, %v5277
    %v5279 = vpop.f32.mrb[0].mxu0
    %v5280 = vadd.f32 %v5167, %v5279
    %5281 = vmatprep.mubr.bf16.mxu0 %v1239
    %5282 = vmatmul.mubr.bf16.gmra.mrb[0].mxu0 %v1238
    %v5283 = vpop.f32.mrb[0].mxu0
    %v5284 = vadd.f32 %v5171, %v5283
    %v5285 = vpop.f32.mrb[0].mxu0
    %v5286 = vadd.f32 %v5173, %v5285
    %v5287 = vpop.f32.mrb[0].mxu0
    %v5288 = vadd.f32 %v5175, %v5287
    %v5289 = vpop.f32.mrb[0].mxu0
    %v5290 = vadd.f32 %v5177, %v5289
    %5291 = vdwg.mxu0
    %5292 = vmatprep.subr.bf16.mxu0 %v3171
    %5293 = vmatpush1.bf16.msra.mxu0 %v3170
    %5294 = vmatprep.subr.bf16.mxu0 %v3175
    %5295 = vmatpush1.bf16.msra.mxu0 %v3174
    %5296 = vmatprep.subr.bf16.mxu0 %v3179
    %5297 = vmatpush1.bf16.msra.mxu0 %v3178
    %5298 = vmatprep.subr.bf16.mxu0 %v3183
    %5299 = vmatpush1.bf16.msra.mxu0 %v3182
    %5300 = vmatprep.subr.bf16.mxu0 %v3187
    %5301 = vmatpush1.bf16.msra.mxu0 %v3186
    %5302 = vmatprep.subr.bf16.mxu0 %v3191
    %5303 = vmatpush1.bf16.msra.mxu0 %v3190
    %5304 = vmatprep.subr.bf16.mxu0 %v3195
    %5305 = vmatpush1.bf16.msra.mxu0 %v3194
    %5306 = vmatprep.subr.bf16.mxu0 %v3199
    %5307 = vmatpush1.bf16.msra.mxu0 %v3198
    %5308 = vmatprep.subr.bf16.mxu0 %v3203
    %5309 = vmatpush1.bf16.msra.mxu0 %v3202
    %5310 = vmatprep.subr.bf16.mxu0 %v3207
    %5311 = vmatpush1.bf16.msra.mxu0 %v3206
    %5312 = vmatprep.subr.bf16.mxu0 %v3211
    %5313 = vmatpush1.bf16.msra.mxu0 %v3210
    %5314 = vmatprep.subr.bf16.mxu0 %v3215
    %5315 = vmatpush1.bf16.msra.mxu0 %v3214
    %5316 = vmatprep.subr.bf16.mxu0 %v3219
    %5317 = vmatpush1.bf16.msra.mxu0 %v3218
    %5318 = vmatprep.subr.bf16.mxu0 %v3223
    %5319 = vmatpush1.bf16.msra.mxu0 %v3222
    %5320 = vmatprep.subr.bf16.mxu0 %v3227
    %5321 = vmatpush1.bf16.msra.mxu0 %v3226
    %5322 = vmatprep.subr.bf16.mxu0 %v3231
    %5323 = vmatpush1.bf16.msra.mxu0 %v3230
    %5324 = vmatprep.mubr.bf16.mxu0 %v1129
    %5325 = vmatmul.mubr.bf16.gmra.mrb[0].mxu0 %v1128
    %v5326 = vpop.f32.mrb[0].mxu0
    %v5327 = vadd.f32 %v5214, %v5326
    %v5328 = vpop.f32.mrb[0].mxu0
    %v5329 = vadd.f32 %v5216, %v5328
    %v5330 = vpop.f32.mrb[0].mxu0
    %v5331 = vadd.f32 %v5218, %v5330
    %v5332 = vpop.f32.mrb[0].mxu0
    %v5333 = vadd.f32 %v5220, %v5332
    %5334 = vmatprep.mubr.bf16.mxu0 %v1145
    %5335 = vmatmul.mubr.bf16.gmra.mrb[0].mxu0 %v1144
    %v5336 = vpop.f32.mrb[0].mxu0
    %v5337 = vadd.f32 %v5224, %v5336
    %v5338 = vpop.f32.mrb[0].mxu0
    %v5339 = vadd.f32 %v5226, %v5338
    %v5340 = vpop.f32.mrb[0].mxu0
    %v5341 = vadd.f32 %v5228, %v5340
    %v5342 = vpop.f32.mrb[0].mxu0
    %v5343 = vadd.f32 %v5230, %v5342
    %5344 = vmatprep.mubr.bf16.mxu0 %v1161
    %5345 = vmatmul.mubr.bf16.gmra.mrb[0].mxu0 %v1160
    %v5346 = vpop.f32.mrb[0].mxu0
    %v5347 = vadd.f32 %v5234, %v5346
    %v5348 = vpop.f32.mrb[0].mxu0
    %v5349 = vadd.f32 %v5236, %v5348
    %v5350 = vpop.f32.mrb[0].mxu0
    %v5351 = vadd.f32 %v5238, %v5350
    %v5352 = vpop.f32.mrb[0].mxu0
    %v5353 = vadd.f32 %v5240, %v5352
    %5354 = vmatprep.mubr.bf16.mxu0 %v1177
    %5355 = vmatmul.mubr.bf16.gmra.mrb[0].mxu0 %v1176
    %v5356 = vpop.f32.mrb[0].mxu0
    %v5357 = vadd.f32 %v5244, %v5356
    %v5358 = vpop.f32.mrb[0].mxu0
    %v5359 = vadd.f32 %v5246, %v5358
    %v5360 = vpop.f32.mrb[0].mxu0
    %v5361 = vadd.f32 %v5248, %v5360
    %v5362 = vpop.f32.mrb[0].mxu0
    %v5363 = vadd.f32 %v5250, %v5362
    %5364 = vmatprep.mubr.bf16.mxu0 %v1193
    %5365 = vmatmul.mubr.bf16.gmra.mrb[0].mxu0 %v1192
    %v5366 = vpop.f32.mrb[0].mxu0
    %v5367 = vadd.f32 %v5254, %v5366
    %v5368 = vpop.f32.mrb[0].mxu0
    %v5369 = vadd.f32 %v5256, %v5368
    %v5370 = vpop.f32.mrb[0].mxu0
    %v5371 = vadd.f32 %v5258, %v5370
    %v5372 = vpop.f32.mrb[0].mxu0
    %v5373 = vadd.f32 %v5260, %v5372
    %5374 = vmatprep.mubr.bf16.mxu0 %v1209
    %5375 = vmatmul.mubr.bf16.gmra.mrb[0].mxu0 %v1208
    %v5376 = vpop.f32.mrb[0].mxu0
    %v5377 = vadd.f32 %v5264, %v5376
    %v5378 = vpop.f32.mrb[0].mxu0
    %v5379 = vadd.f32 %v5266, %v5378
    %v5380 = vpop.f32.mrb[0].mxu0
    %v5381 = vadd.f32 %v5268, %v5380
    %v5382 = vpop.f32.mrb[0].mxu0
    %v5383 = vadd.f32 %v5270, %v5382
    %5384 = vmatprep.mubr.bf16.mxu0 %v1225
    %5385 = vmatmul.mubr.bf16.gmra.mrb[0].mxu0 %v1224
    %v5386 = vpop.f32.mrb[0].mxu0
    %v5387 = vadd.f32 %v5274, %v5386
    %v5388 = vpop.f32.mrb[0].mxu0
    %v5389 = vadd.f32 %v5276, %v5388
    %v5390 = vpop.f32.mrb[0].mxu0
    %v5391 = vadd.f32 %v5278, %v5390
    %v5392 = vpop.f32.mrb[0].mxu0
    %v5393 = vadd.f32 %v5280, %v5392
    %5394 = vmatprep.mubr.bf16.mxu0 %v1241
    %5395 = vmatmul.mubr.bf16.gmra.mrb[0].mxu0 %v1240
    %v5396 = vpop.f32.mrb[0].mxu0
    %v5397 = vadd.f32 %v5284, %v5396
    %v5398 = vpop.f32.mrb[0].mxu0
    %v5399 = vadd.f32 %v5286, %v5398
    %v5400 = vpop.f32.mrb[0].mxu0
    %v5401 = vadd.f32 %v5288, %v5400
    %v5402 = vpop.f32.mrb[0].mxu0
    %v5403 = vadd.f32 %v5290, %v5402
    %5404 = vdwg.mxu0
    %5405 = vmatprep.subr.bf16.mxu0 %v3235
    %5406 = vmatpush1.bf16.msra.mxu0 %v3234
    %5407 = vmatprep.subr.bf16.mxu0 %v3239
    %5408 = vmatpush1.bf16.msra.mxu0 %v3238
    %5409 = vmatprep.subr.bf16.mxu0 %v3243
    %5410 = vmatpush1.bf16.msra.mxu0 %v3242
    %5411 = vmatprep.subr.bf16.mxu0 %v3247
    %5412 = vmatpush1.bf16.msra.mxu0 %v3246
    %5413 = vmatprep.subr.bf16.mxu0 %v3251
    %5414 = vmatpush1.bf16.msra.mxu0 %v3250
    %5415 = vmatprep.subr.bf16.mxu0 %v3255
    %5416 = vmatpush1.bf16.msra.mxu0 %v3254
    %5417 = vmatprep.subr.bf16.mxu0 %v3259
    %5418 = vmatpush1.bf16.msra.mxu0 %v3258
    %5419 = vmatprep.subr.bf16.mxu0 %v3263
    %5420 = vmatpush1.bf16.msra.mxu0 %v3262
    %5421 = vmatprep.subr.bf16.mxu0 %v3267
    %5422 = vmatpush1.bf16.msra.mxu0 %v3266
    %5423 = vmatprep.subr.bf16.mxu0 %v3271
    %5424 = vmatpush1.bf16.msra.mxu0 %v3270
    %5425 = vmatprep.subr.bf16.mxu0 %v3275
    %5426 = vmatpush1.bf16.msra.mxu0 %v3274
    %5427 = vmatprep.subr.bf16.mxu0 %v3279
    %5428 = vmatpush1.bf16.msra.mxu0 %v3278
    %5429 = vmatprep.subr.bf16.mxu0 %v3283
    %5430 = vmatpush1.bf16.msra.mxu0 %v3282
    %5431 = vmatprep.subr.bf16.mxu0 %v3287
    %5432 = vmatpush1.bf16.msra.mxu0 %v3286
    %5433 = vmatprep.subr.bf16.mxu0 %v3291
    %5434 = vmatpush1.bf16.msra.mxu0 %v3290
    %5435 = vmatprep.subr.bf16.mxu0 %v3295
    %5436 = vmatpush1.bf16.msra.mxu0 %v3294
    %5437 = vmatprep.mubr.bf16.mxu0 %v1131
    %5438 = vmatmul.mubr.bf16.gmra.mrb[0].mxu0 %v1130
    %v5439 = vpop.f32.mrb[0].mxu0
    %v5440 = vadd.f32 %v5327, %v5439
    %v5441 = vpop.f32.mrb[0].mxu0
    %v5442 = vadd.f32 %v5329, %v5441
    %v5443 = vpop.f32.mrb[0].mxu0
    %v5444 = vadd.f32 %v5331, %v5443
    %v5445 = vpop.f32.mrb[0].mxu0
    %v5446 = vadd.f32 %v5333, %v5445
    %5447 = vmatprep.mubr.bf16.mxu0 %v1147
    %5448 = vmatmul.mubr.bf16.gmra.mrb[0].mxu0 %v1146
    %v5449 = vpop.f32.mrb[0].mxu0
    %v5450 = vadd.f32 %v5337, %v5449
    %v5451 = vpop.f32.mrb[0].mxu0
    %v5452 = vadd.f32 %v5339, %v5451
    %v5453 = vpop.f32.mrb[0].mxu0
    %v5454 = vadd.f32 %v5341, %v5453
    %v5455 = vpop.f32.mrb[0].mxu0
    %v5456 = vadd.f32 %v5343, %v5455
    %5457 = vmatprep.mubr.bf16.mxu0 %v1163
    %5458 = vmatmul.mubr.bf16.gmra.mrb[0].mxu0 %v1162
    %v5459 = vpop.f32.mrb[0].mxu0
    %v5460 = vadd.f32 %v5347, %v5459
    %v5461 = vpop.f32.mrb[0].mxu0
    %v5462 = vadd.f32 %v5349, %v5461
    %v5463 = vpop.f32.mrb[0].mxu0
    %v5464 = vadd.f32 %v5351, %v5463
    %v5465 = vpop.f32.mrb[0].mxu0
    %v5466 = vadd.f32 %v5353, %v5465
    %5467 = vmatprep.mubr.bf16.mxu0 %v1179
    %5468 = vmatmul.mubr.bf16.gmra.mrb[0].mxu0 %v1178
    %v5469 = vpop.f32.mrb[0].mxu0
    %v5470 = vadd.f32 %v5357, %v5469
    %v5471 = vpop.f32.mrb[0].mxu0
    %v5472 = vadd.f32 %v5359, %v5471
    %v5473 = vpop.f32.mrb[0].mxu0
    %v5474 = vadd.f32 %v5361, %v5473
    %v5475 = vpop.f32.mrb[0].mxu0
    %v5476 = vadd.f32 %v5363, %v5475
    %5477 = vmatprep.mubr.bf16.mxu0 %v1195
    %5478 = vmatmul.mubr.bf16.gmra.mrb[0].mxu0 %v1194
    %v5479 = vpop.f32.mrb[0].mxu0
    %v5480 = vadd.f32 %v5367, %v5479
    %v5481 = vpop.f32.mrb[0].mxu0
    %v5482 = vadd.f32 %v5369, %v5481
    %v5483 = vpop.f32.mrb[0].mxu0
    %v5484 = vadd.f32 %v5371, %v5483
    %v5485 = vpop.f32.mrb[0].mxu0
    %v5486 = vadd.f32 %v5373, %v5485
    %5487 = vmatprep.mubr.bf16.mxu0 %v1211
    %5488 = vmatmul.mubr.bf16.gmra.mrb[0].mxu0 %v1210
    %v5489 = vpop.f32.mrb[0].mxu0
    %v5490 = vadd.f32 %v5377, %v5489
    %v5491 = vpop.f32.mrb[0].mxu0
    %v5492 = vadd.f32 %v5379, %v5491
    %v5493 = vpop.f32.mrb[0].mxu0
    %v5494 = vadd.f32 %v5381, %v5493
    %v5495 = vpop.f32.mrb[0].mxu0
    %v5496 = vadd.f32 %v5383, %v5495
    %5497 = vmatprep.mubr.bf16.mxu0 %v1227
    %5498 = vmatmul.mubr.bf16.gmra.mrb[0].mxu0 %v1226
    %v5499 = vpop.f32.mrb[0].mxu0
    %v5500 = vadd.f32 %v5387, %v5499
    %v5501 = vpop.f32.mrb[0].mxu0
    %v5502 = vadd.f32 %v5389, %v5501
    %v5503 = vpop.f32.mrb[0].mxu0
    %v5504 = vadd.f32 %v5391, %v5503
    %v5505 = vpop.f32.mrb[0].mxu0
    %v5506 = vadd.f32 %v5393, %v5505
    %5507 = vmatprep.mubr.bf16.mxu0 %v1243
    %5508 = vmatmul.mubr.bf16.gmra.mrb[0].mxu0 %v1242
    %v5509 = vpop.f32.mrb[0].mxu0
    %v5510 = vadd.f32 %v5397, %v5509
    %v5511 = vpop.f32.mrb[0].mxu0
    %v5512 = vadd.f32 %v5399, %v5511
    %v5513 = vpop.f32.mrb[0].mxu0
    %v5514 = vadd.f32 %v5401, %v5513
    %v5515 = vpop.f32.mrb[0].mxu0
    %v5516 = vadd.f32 %v5403, %v5515
    %5517 = vdwg.mxu0
    %5518 = vmatprep.subr.bf16.mxu0 %v3299
    %5519 = vmatpush1.bf16.msra.mxu0 %v3298
    %5520 = vmatprep.subr.bf16.mxu0 %v3303
    %5521 = vmatpush1.bf16.msra.mxu0 %v3302
    %5522 = vmatprep.subr.bf16.mxu0 %v3307
    %5523 = vmatpush1.bf16.msra.mxu0 %v3306
    %5524 = vmatprep.subr.bf16.mxu0 %v3311
    %5525 = vmatpush1.bf16.msra.mxu0 %v3310
    %5526 = vmatprep.subr.bf16.mxu0 %v3315
    %5527 = vmatpush1.bf16.msra.mxu0 %v3314
    %5528 = vmatprep.subr.bf16.mxu0 %v3319
    %5529 = vmatpush1.bf16.msra.mxu0 %v3318
    %5530 = vmatprep.subr.bf16.mxu0 %v3323
    %5531 = vmatpush1.bf16.msra.mxu0 %v3322
    %5532 = vmatprep.subr.bf16.mxu0 %v3327
    %5533 = vmatpush1.bf16.msra.mxu0 %v3326
    %5534 = vmatprep.subr.bf16.mxu0 %v3331
    %5535 = vmatpush1.bf16.msra.mxu0 %v3330
    %5536 = vmatprep.subr.bf16.mxu0 %v3335
    %5537 = vmatpush1.bf16.msra.mxu0 %v3334
    %5538 = vmatprep.subr.bf16.mxu0 %v3339
    %5539 = vmatpush1.bf16.msra.mxu0 %v3338
    %5540 = vmatprep.subr.bf16.mxu0 %v3343
    %5541 = vmatpush1.bf16.msra.mxu0 %v3342
    %5542 = vmatprep.subr.bf16.mxu0 %v3347
    %5543 = vmatpush1.bf16.msra.mxu0 %v3346
    %5544 = vmatprep.subr.bf16.mxu0 %v3351
    %5545 = vmatpush1.bf16.msra.mxu0 %v3350
    %5546 = vmatprep.subr.bf16.mxu0 %v3355
    %5547 = vmatpush1.bf16.msra.mxu0 %v3354
    %5548 = vmatprep.subr.bf16.mxu0 %v3359
    %5549 = vmatpush1.bf16.msra.mxu0 %v3358
    %5550 = vmatprep.mubr.bf16.mxu0 %v1133
    %5551 = vmatmul.mubr.bf16.gmra.mrb[0].mxu0 %v1132
    %v5552 = vpop.f32.mrb[0].mxu0
    %v5553 = vadd.f32 %v5440, %v5552
    %v5554 = vpop.f32.mrb[0].mxu0
    %v5555 = vadd.f32 %v5442, %v5554
    %v5556 = vpop.f32.mrb[0].mxu0
    %v5557 = vadd.f32 %v5444, %v5556
    %v5558 = vpop.f32.mrb[0].mxu0
    %v5559 = vadd.f32 %v5446, %v5558
    %5560 = vmatprep.mubr.bf16.mxu0 %v1149
    %5561 = vmatmul.mubr.bf16.gmra.mrb[0].mxu0 %v1148
    %v5562 = vpop.f32.mrb[0].mxu0
    %v5563 = vadd.f32 %v5450, %v5562
    %v5564 = vpop.f32.mrb[0].mxu0
    %v5565 = vadd.f32 %v5452, %v5564
    %v5566 = vpop.f32.mrb[0].mxu0
    %v5567 = vadd.f32 %v5454, %v5566
    %v5568 = vpop.f32.mrb[0].mxu0
    %v5569 = vadd.f32 %v5456, %v5568
    %5570 = vmatprep.mubr.bf16.mxu0 %v1165
    %5571 = vmatmul.mubr.bf16.gmra.mrb[0].mxu0 %v1164
    %v5572 = vpop.f32.mrb[0].mxu0
    %v5573 = vadd.f32 %v5460, %v5572
    %v5574 = vpop.f32.mrb[0].mxu0
    %v5575 = vadd.f32 %v5462, %v5574
    %v5576 = vpop.f32.mrb[0].mxu0
    %v5577 = vadd.f32 %v5464, %v5576
    %v5578 = vpop.f32.mrb[0].mxu0
    %v5579 = vadd.f32 %v5466, %v5578
    %5580 = vmatprep.mubr.bf16.mxu0 %v1181
    %5581 = vmatmul.mubr.bf16.gmra.mrb[0].mxu0 %v1180
    %v5582 = vpop.f32.mrb[0].mxu0
    %v5583 = vadd.f32 %v5470, %v5582
    %v5584 = vpop.f32.mrb[0].mxu0
    %v5585 = vadd.f32 %v5472, %v5584
    %v5586 = vpop.f32.mrb[0].mxu0
    %v5587 = vadd.f32 %v5474, %v5586
    %v5588 = vpop.f32.mrb[0].mxu0
    %v5589 = vadd.f32 %v5476, %v5588
    %5590 = vmatprep.mubr.bf16.mxu0 %v1197
    %5591 = vmatmul.mubr.bf16.gmra.mrb[0].mxu0 %v1196
    %v5592 = vpop.f32.mrb[0].mxu0
    %v5593 = vadd.f32 %v5480, %v5592
    %v5594 = vpop.f32.mrb[0].mxu0
    %v5595 = vadd.f32 %v5482, %v5594
    %v5596 = vpop.f32.mrb[0].mxu0
    %v5597 = vadd.f32 %v5484, %v5596
    %v5598 = vpop.f32.mrb[0].mxu0
    %v5599 = vadd.f32 %v5486, %v5598
    %5600 = vmatprep.mubr.bf16.mxu0 %v1213
    %5601 = vmatmul.mubr.bf16.gmra.mrb[0].mxu0 %v1212
    %v5602 = vpop.f32.mrb[0].mxu0
    %v5603 = vadd.f32 %v5490, %v5602
    %v5604 = vpop.f32.mrb[0].mxu0
    %v5605 = vadd.f32 %v5492, %v5604
    %v5606 = vpop.f32.mrb[0].mxu0
    %v5607 = vadd.f32 %v5494, %v5606
    %v5608 = vpop.f32.mrb[0].mxu0
    %v5609 = vadd.f32 %v5496, %v5608
    %5610 = vmatprep.mubr.bf16.mxu0 %v1229
    %5611 = vmatmul.mubr.bf16.gmra.mrb[0].mxu0 %v1228
    %v5612 = vpop.f32.mrb[0].mxu0
    %v5613 = vadd.f32 %v5500, %v5612
    %v5614 = vpop.f32.mrb[0].mxu0
    %v5615 = vadd.f32 %v5502, %v5614
    %v5616 = vpop.f32.mrb[0].mxu0
    %v5617 = vadd.f32 %v5504, %v5616
    %v5618 = vpop.f32.mrb[0].mxu0
    %v5619 = vadd.f32 %v5506, %v5618
    %5620 = vmatprep.mubr.bf16.mxu0 %v1245
    %5621 = vmatmul.mubr.bf16.gmra.mrb[0].mxu0 %v1244
    %v5622 = vpop.f32.mrb[0].mxu0
    %v5623 = vadd.f32 %v5510, %v5622
    %v5624 = vpop.f32.mrb[0].mxu0
    %v5625 = vadd.f32 %v5512, %v5624
    %v5626 = vpop.f32.mrb[0].mxu0
    %v5627 = vadd.f32 %v5514, %v5626
    %v5628 = vpop.f32.mrb[0].mxu0
    %v5629 = vadd.f32 %v5516, %v5628
    %5630 = vdwg.mxu0
    %5631 = vmatprep.subr.bf16.mxu0 %v3363
    %5632 = vmatpush1.bf16.msra.mxu0 %v3362
    %5633 = vmatprep.subr.bf16.mxu0 %v3367
    %5634 = vmatpush1.bf16.msra.mxu0 %v3366
    %5635 = vmatprep.subr.bf16.mxu0 %v3371
    %5636 = vmatpush1.bf16.msra.mxu0 %v3370
    %5637 = vmatprep.subr.bf16.mxu0 %v3375
    %5638 = vmatpush1.bf16.msra.mxu0 %v3374
    %5639 = vmatprep.subr.bf16.mxu0 %v3379
    %5640 = vmatpush1.bf16.msra.mxu0 %v3378
    %5641 = vmatprep.subr.bf16.mxu0 %v3383
    %5642 = vmatpush1.bf16.msra.mxu0 %v3382
    %5643 = vmatprep.subr.bf16.mxu0 %v3387
    %5644 = vmatpush1.bf16.msra.mxu0 %v3386
    %5645 = vmatprep.subr.bf16.mxu0 %v3391
    %5646 = vmatpush1.bf16.msra.mxu0 %v3390
    %5647 = vmatprep.subr.bf16.mxu0 %v3395
    %5648 = vmatpush1.bf16.msra.mxu0 %v3394
    %5649 = vmatprep.subr.bf16.mxu0 %v3399
    %5650 = vmatpush1.bf16.msra.mxu0 %v3398
    %5651 = vmatprep.subr.bf16.mxu0 %v3403
    %5652 = vmatpush1.bf16.msra.mxu0 %v3402
    %5653 = vmatprep.subr.bf16.mxu0 %v3407
    %5654 = vmatpush1.bf16.msra.mxu0 %v3406
    %5655 = vmatprep.subr.bf16.mxu0 %v3411
    %5656 = vmatpush1.bf16.msra.mxu0 %v3410
    %5657 = vmatprep.subr.bf16.mxu0 %v3415
    %5658 = vmatpush1.bf16.msra.mxu0 %v3414
    %5659 = vmatprep.subr.bf16.mxu0 %v3419
    %5660 = vmatpush1.bf16.msra.mxu0 %v3418
    %5661 = vmatprep.subr.bf16.mxu0 %v3423
    %5662 = vmatpush1.bf16.msra.mxu0 %v3422
    %5663 = vmatprep.mubr.bf16.mxu0 %v1135
    %5664 = vmatmul.mubr.bf16.gmra.mrb[0].mxu0 %v1134
    %v5665 = vpop.f32.mrb[0].mxu0
    %v5666 = vadd.f32 %v5553, %v5665
    %v5667 = vpop.f32.mrb[0].mxu0
    %v5668 = vadd.f32 %v5555, %v5667
    %v5669 = vpop.f32.mrb[0].mxu0
    %v5670 = vadd.f32 %v5557, %v5669
    %v5671 = vpop.f32.mrb[0].mxu0
    %v5672 = vadd.f32 %v5559, %v5671
    %5673 = vmatprep.mubr.bf16.mxu0 %v1151
    %5674 = vmatmul.mubr.bf16.gmra.mrb[0].mxu0 %v1150
    %v5675 = vpop.f32.mrb[0].mxu0
    %v5676 = vadd.f32 %v5563, %v5675
    %v5677 = vpop.f32.mrb[0].mxu0
    %v5678 = vadd.f32 %v5565, %v5677
    %v5679 = vpop.f32.mrb[0].mxu0
    %v5680 = vadd.f32 %v5567, %v5679
    %v5681 = vpop.f32.mrb[0].mxu0
    %v5682 = vadd.f32 %v5569, %v5681
    %5683 = vmatprep.mubr.bf16.mxu0 %v1167
    %5684 = vmatmul.mubr.bf16.gmra.mrb[0].mxu0 %v1166
    %v5685 = vpop.f32.mrb[0].mxu0
    %v5686 = vadd.f32 %v5573, %v5685
    %v5687 = vpop.f32.mrb[0].mxu0
    %v5688 = vadd.f32 %v5575, %v5687
    %v5689 = vpop.f32.mrb[0].mxu0
    %v5690 = vadd.f32 %v5577, %v5689
    %v5691 = vpop.f32.mrb[0].mxu0
    %v5692 = vadd.f32 %v5579, %v5691
    %5693 = vmatprep.mubr.bf16.mxu0 %v1183
    %5694 = vmatmul.mubr.bf16.gmra.mrb[0].mxu0 %v1182
    %v5695 = vpop.f32.mrb[0].mxu0
    %v5696 = vadd.f32 %v5583, %v5695
    %v5697 = vpop.f32.mrb[0].mxu0
    %v5698 = vadd.f32 %v5585, %v5697
    %v5699 = vpop.f32.mrb[0].mxu0
    %v5700 = vadd.f32 %v5587, %v5699
    %v5701 = vpop.f32.mrb[0].mxu0
    %v5702 = vadd.f32 %v5589, %v5701
    %5703 = vmatprep.mubr.bf16.mxu0 %v1199
    %5704 = vmatmul.mubr.bf16.gmra.mrb[0].mxu0 %v1198
    %v5705 = vpop.f32.mrb[0].mxu0
    %v5706 = vadd.f32 %v5593, %v5705
    %v5707 = vpop.f32.mrb[0].mxu0
    %v5708 = vadd.f32 %v5595, %v5707
    %v5709 = vpop.f32.mrb[0].mxu0
    %v5710 = vadd.f32 %v5597, %v5709
    %v5711 = vpop.f32.mrb[0].mxu0
    %v5712 = vadd.f32 %v5599, %v5711
    %5713 = vmatprep.mubr.bf16.mxu0 %v1215
    %5714 = vmatmul.mubr.bf16.gmra.mrb[0].mxu0 %v1214
    %v5715 = vpop.f32.mrb[0].mxu0
    %v5716 = vadd.f32 %v5603, %v5715
    %v5717 = vpop.f32.mrb[0].mxu0
    %v5718 = vadd.f32 %v5605, %v5717
    %v5719 = vpop.f32.mrb[0].mxu0
    %v5720 = vadd.f32 %v5607, %v5719
    %v5721 = vpop.f32.mrb[0].mxu0
    %v5722 = vadd.f32 %v5609, %v5721
    %5723 = vmatprep.mubr.bf16.mxu0 %v1231
    %5724 = vmatmul.mubr.bf16.gmra.mrb[0].mxu0 %v1230
    %v5725 = vpop.f32.mrb[0].mxu0
    %v5726 = vadd.f32 %v5613, %v5725
    %v5727 = vpop.f32.mrb[0].mxu0
    %v5728 = vadd.f32 %v5615, %v5727
    %v5729 = vpop.f32.mrb[0].mxu0
    %v5730 = vadd.f32 %v5617, %v5729
    %v5731 = vpop.f32.mrb[0].mxu0
    %v5732 = vadd.f32 %v5619, %v5731
    %5733 = vmatprep.mubr.bf16.mxu0 %v1247
    %5734 = vmatmul.mubr.bf16.gmra.mrb[0].mxu0 %v1246
    %v5735 = vpop.f32.mrb[0].mxu0
    %v5736 = vadd.f32 %v5623, %v5735
    %v5737 = vpop.f32.mrb[0].mxu0
    %v5738 = vadd.f32 %v5625, %v5737
    %v5739 = vpop.f32.mrb[0].mxu0
    %v5740 = vadd.f32 %v5627, %v5739
    %v5741 = vpop.f32.mrb[0].mxu0
    %v5742 = vadd.f32 %v5629, %v5741
    %5743 = vdwg.mxu0
    %v5744 = vmax.f32 %v4762, 0.0
    %v5745 = vmax.f32 %v4764, 0.0
    %v5746 = vmax.f32 %v5666, 0.0
    %v5747 = vmax.f32 %v5668, 0.0
    %v5748 = vmax.f32 %v4766, 0.0
    %v5749 = vmax.f32 %v4768, 0.0
    %v5750 = vmax.f32 %v5670, 0.0
    %v5751 = vmax.f32 %v5672, 0.0
    %v5752 = vmax.f32 %v4772, 0.0
    %v5753 = vmax.f32 %v4774, 0.0
    %v5754 = vmax.f32 %v5676, 0.0
    %v5755 = vmax.f32 %v5678, 0.0
    %v5756 = vmax.f32 %v4776, 0.0
    %v5757 = vmax.f32 %v4778, 0.0
    %v5758 = vmax.f32 %v5680, 0.0
    %v5759 = vmax.f32 %v5682, 0.0
    %v5760 = vmax.f32 %v4782, 0.0
    %v5761 = vmax.f32 %v4784, 0.0
    %v5762 = vmax.f32 %v5686, 0.0
    %v5763 = vmax.f32 %v5688, 0.0
    %v5764 = vmax.f32 %v4786, 0.0
    %v5765 = vmax.f32 %v4788, 0.0
    %v5766 = vmax.f32 %v5690, 0.0
    %v5767 = vmax.f32 %v5692, 0.0
    %v5768 = vmax.f32 %v4792, 0.0
    %v5769 = vmax.f32 %v4794, 0.0
    %v5770 = vmax.f32 %v5696, 0.0
    %v5771 = vmax.f32 %v5698, 0.0
    %v5772 = vmax.f32 %v4796, 0.0
    %v5773 = vmax.f32 %v4798, 0.0
    %v5774 = vmax.f32 %v5700, 0.0
    %v5775 = vmax.f32 %v5702, 0.0
    %v5776 = vmax.f32 %v4802, 0.0
    %v5777 = vmax.f32 %v4804, 0.0
    %v5778 = vmax.f32 %v5706, 0.0
    %v5779 = vmax.f32 %v5708, 0.0
    %v5780 = vmax.f32 %v4806, 0.0
    %v5781 = vmax.f32 %v4808, 0.0
    %v5782 = vmax.f32 %v5710, 0.0
    %v5783 = vmax.f32 %v5712, 0.0
    %v5784 = vmax.f32 %v4812, 0.0
    %v5785 = vmax.f32 %v4814, 0.0
    %v5786 = vmax.f32 %v5716, 0.0
    %v5787 = vmax.f32 %v5718, 0.0
    %v5788 = vmax.f32 %v4816, 0.0
    %v5789 = vmax.f32 %v4818, 0.0
    %v5790 = vmax.f32 %v5720, 0.0
    %v5791 = vmax.f32 %v5722, 0.0
    %v5792 = vmax.f32 %v4822, 0.0
    %v5793 = vmax.f32 %v4824, 0.0
    %v5794 = vmax.f32 %v5726, 0.0
    %v5795 = vmax.f32 %v5728, 0.0
    %v5796 = vmax.f32 %v4826, 0.0
    %v5797 = vmax.f32 %v4828, 0.0
    %v5798 = vmax.f32 %v5730, 0.0
    %v5799 = vmax.f32 %v5732, 0.0
    %v5800 = vmax.f32 %v4832, 0.0
    %v5801 = vmax.f32 %v4834, 0.0
    %v5802 = vmax.f32 %v5736, 0.0
    %v5803 = vmax.f32 %v5738, 0.0
    %v5804 = vmax.f32 %v4836, 0.0
    %v5805 = vmax.f32 %v4838, 0.0
    %v5806 = vmax.f32 %v5740, 0.0
    %v5807 = vmax.f32 %v5742, 0.0
    %v5808 = vld [vmem:[#allocation9] sm:$0xf]
    %v5810 = vlaneseq
    %v5811 = vshrl.u32 %v5810, 7
    %v5812 = vsub.s32 0, %v5811
    %v5813 = vrot.slane %v5808, %v5812
    %v5814 = vlaneseq
    %v5815 = vshrl.u32 %v5814, 7
    %v5816 = vsub.s32 1, %v5815
    %v5817 = vrot.slane %v5808, %v5816
    %v5818 = vlaneseq
    %v5819 = vshrl.u32 %v5818, 7
    %v5820 = vsub.s32 2, %v5819
    %v5821 = vrot.slane %v5808, %v5820
    %v5822 = vlaneseq
    %v5823 = vshrl.u32 %v5822, 7
    %v5824 = vsub.s32 3, %v5823
    %v5825 = vrot.slane %v5808, %v5824
    %v5830 = vmul.f32 %v5744, %v5813
    %v5831 = vmul.f32 %v5745, %v5817
    %v5832 = vmul.f32 %v5746, %v5821
    %v5833 = vmul.f32 %v5747, %v5825
    %v5834 = vmul.f32 %v5748, %v5813
    %v5835 = vmul.f32 %v5749, %v5817
    %v5836 = vmul.f32 %v5750, %v5821
    %v5837 = vmul.f32 %v5751, %v5825
    %v5838 = vmul.f32 %v5752, %v5813
    %v5839 = vmul.f32 %v5753, %v5817
    %v5840 = vmul.f32 %v5754, %v5821
    %v5841 = vmul.f32 %v5755, %v5825
    %v5842 = vmul.f32 %v5756, %v5813
    %v5843 = vmul.f32 %v5757, %v5817
    %v5844 = vmul.f32 %v5758, %v5821
    %v5845 = vmul.f32 %v5759, %v5825
    %v5846 = vmul.f32 %v5760, %v5813
    %v5847 = vmul.f32 %v5761, %v5817
    %v5848 = vmul.f32 %v5762, %v5821
    %v5849 = vmul.f32 %v5763, %v5825
    %v5850 = vmul.f32 %v5764, %v5813
    %v5851 = vmul.f32 %v5765, %v5817
    %v5852 = vmul.f32 %v5766, %v5821
    %v5853 = vmul.f32 %v5767, %v5825
    %v5854 = vmul.f32 %v5768, %v5813
    %v5855 = vmul.f32 %v5769, %v5817
    %v5856 = vmul.f32 %v5770, %v5821
    %v5857 = vmul.f32 %v5771, %v5825
    %v5858 = vmul.f32 %v5772, %v5813
    %v5859 = vmul.f32 %v5773, %v5817
    %v5860 = vmul.f32 %v5774, %v5821
    %v5861 = vmul.f32 %v5775, %v5825
    %v5862 = vmul.f32 %v5776, %v5813
    %v5863 = vmul.f32 %v5777, %v5817
    %v5864 = vmul.f32 %v5778, %v5821
    %v5865 = vmul.f32 %v5779, %v5825
    %v5866 = vmul.f32 %v5780, %v5813
    %v5867 = vmul.f32 %v5781, %v5817
    %v5868 = vmul.f32 %v5782, %v5821
    %v5869 = vmul.f32 %v5783, %v5825
    %v5870 = vmul.f32 %v5784, %v5813
    %v5871 = vmul.f32 %v5785, %v5817
    %v5872 = vmul.f32 %v5786, %v5821
    %v5873 = vmul.f32 %v5787, %v5825
    %v5874 = vmul.f32 %v5788, %v5813
    %v5875 = vmul.f32 %v5789, %v5817
    %v5876 = vmul.f32 %v5790, %v5821
    %v5877 = vmul.f32 %v5791, %v5825
    %v5878 = vmul.f32 %v5792, %v5813
    %v5879 = vmul.f32 %v5793, %v5817
    %v5880 = vmul.f32 %v5794, %v5821
    %v5881 = vmul.f32 %v5795, %v5825
    %v5882 = vmul.f32 %v5796, %v5813
    %v5883 = vmul.f32 %v5797, %v5817
    %v5884 = vmul.f32 %v5798, %v5821
    %v5885 = vmul.f32 %v5799, %v5825
    %v5886 = vmul.f32 %v5800, %v5813
    %v5887 = vmul.f32 %v5801, %v5817
    %v5888 = vmul.f32 %v5802, %v5821
    %v5889 = vmul.f32 %v5803, %v5825
    %v5890 = vmul.f32 %v5804, %v5813
    %v5891 = vmul.f32 %v5805, %v5817
    %v5892 = vmul.f32 %v5806, %v5821
    %v5893 = vmul.f32 %v5807, %v5825
    %v5894 = vadd.f32 %v5830, %v5831
    %v5895 = vadd.f32 %v5894, %v5832
    %v5896 = vadd.f32 %v5895, %v5833
    %5897 = vadd.xlane.f32.xlu0 %v5896
    %v5898 = vpop.xlane.xlu0 %5897
    %v5899 = vadd.f32 %v5834, %v5835
    %v5900 = vadd.f32 %v5899, %v5836
    %v5901 = vadd.f32 %v5900, %v5837
    %5902 = vadd.xlane.f32.xlu0 %v5901
    %v5903 = vpop.xlane.xlu0 %5902
    %v5904 = vadd.f32 %v5838, %v5839
    %v5905 = vadd.f32 %v5904, %v5840
    %v5906 = vadd.f32 %v5905, %v5841
    %5907 = vadd.xlane.f32.xlu0 %v5906
    %v5908 = vpop.xlane.xlu0 %5907
    %v5909 = vadd.f32 %v5842, %v5843
    %v5910 = vadd.f32 %v5909, %v5844
    %v5911 = vadd.f32 %v5910, %v5845
    %5912 = vadd.xlane.f32.xlu0 %v5911
    %v5913 = vpop.xlane.xlu0 %5912
    %v5914 = vadd.f32 %v5846, %v5847
    %v5915 = vadd.f32 %v5914, %v5848
    %v5916 = vadd.f32 %v5915, %v5849
    %5917 = vadd.xlane.f32.xlu0 %v5916
    %v5918 = vpop.xlane.xlu0 %5917
    %v5919 = vadd.f32 %v5850, %v5851
    %v5920 = vadd.f32 %v5919, %v5852
    %v5921 = vadd.f32 %v5920, %v5853
    %5922 = vadd.xlane.f32.xlu0 %v5921
    %v5923 = vpop.xlane.xlu0 %5922
    %v5924 = vadd.f32 %v5854, %v5855
    %v5925 = vadd.f32 %v5924, %v5856
    %v5926 = vadd.f32 %v5925, %v5857
    %5927 = vadd.xlane.f32.xlu0 %v5926
    %v5928 = vpop.xlane.xlu0 %5927
    %v5929 = vadd.f32 %v5858, %v5859
    %v5930 = vadd.f32 %v5929, %v5860
    %v5931 = vadd.f32 %v5930, %v5861
    %5932 = vadd.xlane.f32.xlu0 %v5931
    %v5933 = vpop.xlane.xlu0 %5932
    %v5934 = vadd.f32 %v5862, %v5863
    %v5935 = vadd.f32 %v5934, %v5864
    %v5936 = vadd.f32 %v5935, %v5865
    %5937 = vadd.xlane.f32.xlu0 %v5936
    %v5938 = vpop.xlane.xlu0 %5937
    %v5939 = vadd.f32 %v5866, %v5867
    %v5940 = vadd.f32 %v5939, %v5868
    %v5941 = vadd.f32 %v5940, %v5869
    %5942 = vadd.xlane.f32.xlu0 %v5941
    %v5943 = vpop.xlane.xlu0 %5942
    %v5944 = vadd.f32 %v5870, %v5871
    %v5945 = vadd.f32 %v5944, %v5872
    %v5946 = vadd.f32 %v5945, %v5873
    %5947 = vadd.xlane.f32.xlu0 %v5946
    %v5948 = vpop.xlane.xlu0 %5947
    %v5949 = vadd.f32 %v5874, %v5875
    %v5950 = vadd.f32 %v5949, %v5876
    %v5951 = vadd.f32 %v5950, %v5877
    %5952 = vadd.xlane.f32.xlu0 %v5951
    %v5953 = vpop.xlane.xlu0 %5952
    %v5954 = vadd.f32 %v5878, %v5879
    %v5955 = vadd.f32 %v5954, %v5880
    %v5956 = vadd.f32 %v5955, %v5881
    %5957 = vadd.xlane.f32.xlu0 %v5956
    %v5958 = vpop.xlane.xlu0 %5957
    %v5959 = vadd.f32 %v5882, %v5883
    %v5960 = vadd.f32 %v5959, %v5884
    %v5961 = vadd.f32 %v5960, %v5885
    %5962 = vadd.xlane.f32.xlu0 %v5961
    %v5963 = vpop.xlane.xlu0 %5962
    %v5964 = vadd.f32 %v5886, %v5887
    %v5965 = vadd.f32 %v5964, %v5888
    %v5966 = vadd.f32 %v5965, %v5889
    %5967 = vadd.xlane.f32.xlu0 %v5966
    %v5968 = vpop.xlane.xlu0 %5967
    %v5969 = vadd.f32 %v5890, %v5891
    %v5970 = vadd.f32 %v5969, %v5892
    %v5971 = vadd.f32 %v5970, %v5893
    %5972 = vadd.xlane.f32.xlu0 %v5971
    %v5973 = vpop.xlane.xlu0 %5972
    %v5974 = vld [vmem:[#allocation2] sm:$0x1]
    %5976 = vset.pattern.permute.xlu0 0
    %5977 = vperm.xlu0 %5976, %v5974
    %v5978 = vpop.permute.xlu0 %5977
    %v5980 = vlaneseq
    %v5981 = vshrl.u32 %v5980, 7
    %v5982 = vsub.s32 0, %v5981
    %v5983 = vrot.slane %v5978, %v5982
    %v5984 = vadd.f32 %v5898, %v5983
    %v5985 = vadd.f32 %v5903, %v5983
    %v5986 = vadd.f32 %v5908, %v5983
    %v5987 = vadd.f32 %v5913, %v5983
    %v5988 = vadd.f32 %v5918, %v5983
    %v5989 = vadd.f32 %v5923, %v5983
    %v5990 = vadd.f32 %v5928, %v5983
    %v5991 = vadd.f32 %v5933, %v5983
    %v5992 = vadd.f32 %v5938, %v5983
    %v5993 = vadd.f32 %v5943, %v5983
    %v5994 = vadd.f32 %v5948, %v5983
    %v5995 = vadd.f32 %v5953, %v5983
    %v5996 = vadd.f32 %v5958, %v5983
    %v5997 = vadd.f32 %v5963, %v5983
    %v5998 = vadd.f32 %v5968, %v5983
    %v5999 = vadd.f32 %v5973, %v5983
    %v6016 = vlaneseq
    %v6017 = vand.u32 %v6016, 127
    %v6018 = vlaneseq
    %v6019 = vshrl.u32 %v6018, 7
    %v6020 = vsub.s32 %v6017, %v6019
    %v6021 = vrot.slane %v5984, %v6020
    %v6022 = vadd.s32 %v6017, 4294967288
    %v6023 = vlaneseq
    %v6024 = vshrl.u32 %v6023, 7
    %v6025 = vsub.s32 %v6022, %v6024
    %v6026 = vrot.slane %v5985, %v6025
    %vm6027 = vcmask 130112
    %v6028 = vsel %vm6027, %v6026, %v6021
    %v6029 = vadd.s32 %v6017, 4294967280
    %v6030 = vlaneseq
    %v6031 = vshrl.u32 %v6030, 7
    %v6032 = vsub.s32 %v6029, %v6031
    %v6033 = vrot.slane %v5986, %v6032
    %vm6034 = vcmask 195712
    %v6035 = vsel %vm6034, %v6033, %v6028
    %v6036 = vadd.s32 %v6017, 4294967272
    %v6037 = vlaneseq
    %v6038 = vshrl.u32 %v6037, 7
    %v6039 = vsub.s32 %v6036, %v6038
    %v6040 = vrot.slane %v5987, %v6039
    %vm6041 = vcmask 261312
    %v6042 = vsel %vm6041, %v6040, %v6035
    %v6043 = vadd.s32 %v6017, 4294967264
    %v6044 = vlaneseq
    %v6045 = vshrl.u32 %v6044, 7
    %v6046 = vsub.s32 %v6043, %v6045
    %v6047 = vrot.slane %v5988, %v6046
    %vm6048 = vcmask 326912
    %v6049 = vsel %vm6048, %v6047, %v6042
    %v6050 = vadd.s32 %v6017, 4294967256
    %v6051 = vlaneseq
    %v6052 = vshrl.u32 %v6051, 7
    %v6053 = vsub.s32 %v6050, %v6052
    %v6054 = vrot.slane %v5989, %v6053
    %vm6055 = vcmask 392512
    %v6056 = vsel %vm6055, %v6054, %v6049
    %v6057 = vadd.s32 %v6017, 4294967248
    %v6058 = vlaneseq
    %v6059 = vshrl.u32 %v6058, 7
    %v6060 = vsub.s32 %v6057, %v6059
    %v6061 = vrot.slane %v5990, %v6060
    %vm6062 = vcmask 458112
    %v6063 = vsel %vm6062, %v6061, %v6056
    %v6064 = vadd.s32 %v6017, 4294967240
    %v6065 = vlaneseq
    %v6066 = vshrl.u32 %v6065, 7
    %v6067 = vsub.s32 %v6064, %v6066
    %v6068 = vrot.slane %v5991, %v6067
    %vm6069 = vcmask 523712
    %v6070 = vsel %vm6069, %v6068, %v6063
    %v6071 = vadd.s32 %v6017, 4294967232
    %v6072 = vlaneseq
    %v6073 = vshrl.u32 %v6072, 7
    %v6074 = vsub.s32 %v6071, %v6073
    %v6075 = vrot.slane %v5992, %v6074
    %vm6076 = vcmask 589312
    %v6077 = vsel %vm6076, %v6075, %v6070
    %v6078 = vadd.s32 %v6017, 4294967224
    %v6079 = vlaneseq
    %v6080 = vshrl.u32 %v6079, 7
    %v6081 = vsub.s32 %v6078, %v6080
    %v6082 = vrot.slane %v5993, %v6081
    %vm6083 = vcmask 654912
    %v6084 = vsel %vm6083, %v6082, %v6077
    %v6085 = vadd.s32 %v6017, 4294967216
    %v6086 = vlaneseq
    %v6087 = vshrl.u32 %v6086, 7
    %v6088 = vsub.s32 %v6085, %v6087
    %v6089 = vrot.slane %v5994, %v6088
    %vm6090 = vcmask 720512
    %v6091 = vsel %vm6090, %v6089, %v6084
    %v6092 = vadd.s32 %v6017, 4294967208
    %v6093 = vlaneseq
    %v6094 = vshrl.u32 %v6093, 7
    %v6095 = vsub.s32 %v6092, %v6094
    %v6096 = vrot.slane %v5995, %v6095
    %vm6097 = vcmask 786112
    %v6098 = vsel %vm6097, %v6096, %v6091
    %v6099 = vadd.s32 %v6017, 4294967200
    %v6100 = vlaneseq
    %v6101 = vshrl.u32 %v6100, 7
    %v6102 = vsub.s32 %v6099, %v6101
    %v6103 = vrot.slane %v5996, %v6102
    %vm6104 = vcmask 851712
    %v6105 = vsel %vm6104, %v6103, %v6098
    %v6106 = vadd.s32 %v6017, 4294967192
    %v6107 = vlaneseq
    %v6108 = vshrl.u32 %v6107, 7
    %v6109 = vsub.s32 %v6106, %v6108
    %v6110 = vrot.slane %v5997, %v6109
    %vm6111 = vcmask 917312
    %v6112 = vsel %vm6111, %v6110, %v6105
    %v6113 = vadd.s32 %v6017, 4294967184
    %v6114 = vlaneseq
    %v6115 = vshrl.u32 %v6114, 7
    %v6116 = vsub.s32 %v6113, %v6115
    %v6117 = vrot.slane %v5998, %v6116
    %vm6118 = vcmask 982912
    %v6119 = vsel %vm6118, %v6117, %v6112
    %v6120 = vadd.s32 %v6017, 4294967176
    %v6121 = vlaneseq
    %v6122 = vshrl.u32 %v6121, 7
    %v6123 = vsub.s32 %v6120, %v6122
    %v6124 = vrot.slane %v5999, %v6123
    %vm6125 = vcmask 1048512
    %v6126 = vsel %vm6125, %v6124, %v6119
    %6128 = vst [vmem:[#allocation11] sm:$0x1] %v6126
    // Predicated region
    $region38: #{tpu_custom_call.1} parent=1 // pred_check
      _
    $region39: #{tpu_custom_call.1} parent=1 // pred_check_branch
      %6130 = sbr.rel (0) target = $region41
    $region40: #{tpu_custom_call.1} parent=1 // pred_region
      %s6132 = ssub.s32 16, 16
      %6133 = vsyncadd [#allocation5], %s6132
      %s6135 = sshll.u32 [#allocation11], 4
      %s6136 = int_to_ptr.vmem [resolvable:$true] %s6135
      %6138 = dma.vmem_to_hbm [thread:$0]  %s6136, 16, %s5, [#allocation5]
    $region41: #{tpu_custom_call.1} parent=1 // pred_fallthru
      _
    // Predicated region
    $region42: #{tpu_custom_call.1} parent=1 // pred_check
      _
    $region43: #{tpu_custom_call.1} parent=1 // pred_check_branch
      %6140 = sbr.rel (0) target = $region45
    $region44: #{tpu_custom_call.1} parent=1 // pred_region
      %6141 = dma.done [#allocation5], 16
    $region45: #{tpu_custom_call.1} parent=1 // pred_fallthru
      _
    %6142 = vsyncpa [#allocation4], 1
    %6143 = vsyncpa [#allocation7], 1
    %6144 = vsyncpa [#allocation10], 1
    %6145 = vsyncpa [#allocation5], 1

</llo_original>
